<compile_context>
chip_gen: v5e
topology: v5e:2x2
jax: 0.10.0
libtpu: 0.0.40
codegen_flags: <defaults>
</compile_context>

<pallas_src>
import functools

import jax
import jax.numpy as jnp
from jax.experimental import pallas as pl
from jax.experimental.pallas import tpu as pltpu

LANE = 128      # feature dims are padded to multiples of the 128-wide lane axis
SUBLANE = 8     # batch axis granularity


def _round_up(x, m):
    return (x + m - 1) // m * m


def _pad_axis(a, axis, target):
    pad = target - a.shape[axis]
    if pad == 0:
        return a
    widths = [(0, 0)] * a.ndim
    widths[axis] = (0, pad)
    return jnp.pad(a, widths)


def autoencoder_kernel(x_ref,
                       w1_ref, b1_ref,
                       w2_ref, b2_ref,
                       w3_ref, b3_ref,
                       w4_ref, b4_ref,
                       o_ref):
    """Fused 4-layer MLP (sigmoid on first 3 layers) on one batch tile.

    Dots run with bf16 operands + f32 accumulation on the MXU; elementwise
    (bias, sigmoid) stays in f32.
    """
    x = x_ref[...]                                                  # bf16 (tile, Mp)

    z1 = jnp.dot(x, w1_ref[...], preferred_element_type=jnp.float32) + b1_ref[...]
    h1 = jax.nn.sigmoid(z1)                                         # f32 (tile, N1p)

    z2 = jnp.dot(h1.astype(jnp.bfloat16), w2_ref[...],
                 preferred_element_type=jnp.float32) + b2_ref[...]
    h2 = jax.nn.sigmoid(z2)                                         # f32 (tile, N2p)

    z3 = jnp.dot(h2.astype(jnp.bfloat16), w3_ref[...],
                 preferred_element_type=jnp.float32) + b3_ref[...]
    h3 = jax.nn.sigmoid(z3)                                         # f32 (tile, N1p)

    y = jnp.dot(h3.astype(jnp.bfloat16), w4_ref[...],
                preferred_element_type=jnp.float32) + b4_ref[...]
    o_ref[...] = y.astype(o_ref.dtype)


@functools.partial(jax.jit, static_argnames=("batch_tile",))
def autoencoder_forward(x, params, batch_tile=256):
    """x: (B, nb_movies) f32. params: dict of pre-transposed f32 weights/biases."""
    B, nb_movies = x.shape
    nodes1 = params["w1"].shape[1]
    nodes2 = params["w2"].shape[1]

    # Lane-pad feature dims (notably the 64-wide bottleneck -> 128).
    Mp = _round_up(nb_movies, LANE)
    N1p = _round_up(nodes1, LANE)
    N2p = _round_up(nodes2, LANE)

    # Zero-pad + cast weights to bf16 (biases stay f32 for the VPU add).
    w1 = _pad_axis(_pad_axis(params["w1"], 0, Mp), 1, N1p).astype(jnp.bfloat16)
    w2 = _pad_axis(_pad_axis(params["w2"], 0, N1p), 1, N2p).astype(jnp.bfloat16)
    w3 = _pad_axis(_pad_axis(params["w3"], 0, N2p), 1, N1p).astype(jnp.bfloat16)
    w4 = _pad_axis(_pad_axis(params["w4"], 0, N1p), 1, Mp).astype(jnp.bfloat16)
    b1 = _pad_axis(params["b1"], 1, N1p).astype(jnp.float32)
    b2 = _pad_axis(params["b2"], 1, N2p).astype(jnp.float32)
    b3 = _pad_axis(params["b3"], 1, N1p).astype(jnp.float32)
    b4 = _pad_axis(params["b4"], 1, Mp).astype(jnp.float32)

    # Batch tile: large enough to fill the MXU, never larger than the batch.
    tile = min(batch_tile, _round_up(B, SUBLANE))
    Bp = _round_up(B, tile)
    x_p = _pad_axis(_pad_axis(x, 0, Bp), 1, Mp).astype(jnp.bfloat16)

    grid = (Bp // tile,)

    # Parameters use constant index_maps -> blocks are grid-invariant/resident.
    def param_spec(arr):
        return pl.BlockSpec(arr.shape, lambda i: (0, 0))

    flops = 2 * Bp * (Mp * N1p + N1p * N2p + N2p * N1p + N1p * Mp)
    transcendentals = Bp * (N1p + N2p + N1p)          # sigmoid exps
    bytes_accessed = (x_p.size * 2 + Bp * Mp * 4
                      + sum(a.size * 2 for a in (w1, w2, w3, w4))
                      + sum(a.size * 4 for a in (b1, b2, b3, b4)))

    out_p = pl.pallas_call(
        autoencoder_kernel,
        out_shape=jax.ShapeDtypeStruct((Bp, Mp), jnp.float32),
        grid_spec=pltpu.PrefetchScalarGridSpec(
            num_scalar_prefetch=0,
            grid=grid,
            in_specs=[
                pl.BlockSpec((tile, Mp), lambda i: (i, 0)),
                param_spec(w1), param_spec(b1),
                param_spec(w2), param_spec(b2),
                param_spec(w3), param_spec(b3),
                param_spec(w4), param_spec(b4),
            ],
            out_specs=pl.BlockSpec((tile, Mp), lambda i: (i, 0)),
        ),
        compiler_params=pltpu.CompilerParams(
            dimension_semantics=("parallel",)),
        cost_estimate=pl.CostEstimate(
            flops=flops,
            transcendentals=transcendentals,
            bytes_accessed=bytes_accessed),
    )(x_p, w1, b1, w2, b2, w3, b3, w4, b4)

    return out_p[:B, :nb_movies]


def init_params(key, nb_movies, nodes1, nodes2):
    """PyTorch-style Linear init: U(-1/sqrt(fan_in), 1/sqrt(fan_in)).

    Weights are stored pre-transposed as (in_features, out_features);
    biases as (1, out_features) so they broadcast over the batch tile.
    """
    def linear(k, fan_in, fan_out):
        kw, kb = jax.random.split(k)
        bound = 1.0 / jnp.sqrt(jnp.float32(fan_in))
        w = jax.random.uniform(kw, (fan_in, fan_out), jnp.float32, -bound, bound)
        b = jax.random.uniform(kb, (1, fan_out), jnp.float32, -bound, bound)
        return w, b

    k1, k2, k3, k4 = jax.random.split(key, 4)
    w1, b1 = linear(k1, nb_movies, nodes1)
    w2, b2 = linear(k2, nodes1, nodes2)
    w3, b3 = linear(k3, nodes2, nodes1)
    w4, b4 = linear(k4, nodes1, nb_movies)
    return {"w1": w1, "b1": b1, "w2": w2, "b2": b2,
            "w3": w3, "b3": b3, "w4": w4, "b4": b4}


def reference_forward(x, params):
    """Pure-JAX f32 reference of the same forward pass."""
    h = jax.nn.sigmoid(x @ params["w1"] + params["b1"])
    h = jax.nn.sigmoid(h @ params["w2"] + params["b2"])
    h = jax.nn.sigmoid(h @ params["w3"] + params["b3"])
    return h @ params["w4"] + params["b4"]


if __name__ == "__main__":
    # Small recommender-style shapes: users x movie-rating vectors.
    batch = 512        # enough rows for two 256-row tiles (v7x: one per TC)
    nb_movies = 256    # rating-vector length
    nodes1 = 128
    nodes2 = 64        # bottleneck (padded to 128 lanes inside the wrapper)

    key = jax.random.PRNGKey(0)
    kx, km, kp = jax.random.split(key, 3)

    # Synthetic sparse-ish ratings in [0, 5).
    x = jax.random.uniform(kx, (batch, nb_movies), jnp.float32, 0.0, 5.0)
    mask = jax.random.bernoulli(km, 0.3, (batch, nb_movies))
    x = jnp.where(mask, x, 0.0)

    params = init_params(kp, nb_movies, nodes1, nodes2)

    out = autoencoder_forward(x, params, batch_tile=256)
    out = jax.block_until_ready(out)

    ref = reference_forward(x, params)
    assert out.shape == (batch, nb_movies)
    # bf16 matmul operands (f32 accumulate) -> loosened tolerance vs f32 ref.
    assert jnp.allclose(out, ref, atol=5e-2, rtol=5e-2), "mismatch vs reference"

    # TODO(synk): training loop (RMSprop, masked MSE) and Preprocessing are
    # host-side logic, not part of the forward pass, and are not translated.
    print("KERNEL_OK")
</pallas_src>

<mosaic_0001>
module attributes {stable_mosaic.version = 11 : i64} {
  func.func @autoencoder_kernel(%arg0: i32, %arg1: memref<256x256xbf16, #tpu.memory_space<vmem>>, %arg2: memref<256x128xbf16, #tpu.memory_space<vmem>>, %arg3: memref<1x128xf32, #tpu.memory_space<vmem>>, %arg4: memref<128x128xbf16, #tpu.memory_space<vmem>>, %arg5: memref<1x128xf32, #tpu.memory_space<vmem>>, %arg6: memref<128x128xbf16, #tpu.memory_space<vmem>>, %arg7: memref<1x128xf32, #tpu.memory_space<vmem>>, %arg8: memref<128x256xbf16, #tpu.memory_space<vmem>>, %arg9: memref<1x256xf32, #tpu.memory_space<vmem>>, %arg10: memref<256x256xf32, #tpu.memory_space<vmem>>) attributes {dimension_semantics = [#tpu.dimension_semantics<parallel>], iteration_bounds = array<i64: 2>, scalar_prefetch = 0 : i64, scratch_operands = 0 : i64, tpu.core_type = #tpu.core_type<tc>, window_params = [{transform_indices = @transform_0, window_bounds = array<i64: 256, 256>}, {pipeline_mode = #tpu.pipeline_mode<synchronous>, transform_indices = @transform_1, window_bounds = array<i64: 256, 128>}, {pipeline_mode = #tpu.pipeline_mode<synchronous>, transform_indices = @transform_2, window_bounds = array<i64: 1, 128>}, {pipeline_mode = #tpu.pipeline_mode<synchronous>, transform_indices = @transform_3, window_bounds = array<i64: 128, 128>}, {pipeline_mode = #tpu.pipeline_mode<synchronous>, transform_indices = @transform_4, window_bounds = array<i64: 1, 128>}, {pipeline_mode = #tpu.pipeline_mode<synchronous>, transform_indices = @transform_5, window_bounds = array<i64: 128, 128>}, {pipeline_mode = #tpu.pipeline_mode<synchronous>, transform_indices = @transform_6, window_bounds = array<i64: 1, 128>}, {pipeline_mode = #tpu.pipeline_mode<synchronous>, transform_indices = @transform_7, window_bounds = array<i64: 128, 256>}, {pipeline_mode = #tpu.pipeline_mode<synchronous>, transform_indices = @transform_8, window_bounds = array<i64: 1, 256>}, {transform_indices = @transform_9, window_bounds = array<i64: 256, 256>}]} {
    %c0 = arith.constant 0 : index
    %c0_0 = arith.constant 0 : index
    %0 = vector.load %arg1[%c0, %c0_0] : memref<256x256xbf16, #tpu.memory_space<vmem>>, vector<256x256xbf16>
    %c0_1 = arith.constant 0 : index
    %c0_2 = arith.constant 0 : index
    %1 = vector.load %arg2[%c0_1, %c0_2] : memref<256x128xbf16, #tpu.memory_space<vmem>>, vector<256x128xbf16>
    %cst = arith.constant dense<0.000000e+00> : vector<256x128xf32>
    %2 = tpu.matmul %0, %1, %cst {dimension_numbers = #tpu.dot_dimension_numbers<[1], [0], [0], [1], [0, 0, 1, 1], [], []>} : vector<256x256xbf16>, vector<256x128xbf16>, vector<256x128xf32> -> vector<256x128xf32>
    %c0_3 = arith.constant 0 : index
    %c0_4 = arith.constant 0 : index
    %3 = vector.load %arg3[%c0_3, %c0_4] : memref<1x128xf32, #tpu.memory_space<vmem>>, vector<1x128xf32>
    %4 = vector.broadcast %3 : vector<1x128xf32> to vector<256x128xf32>
    %5 = arith.addf %2, %4 : vector<256x128xf32>
    %6 = arith.negf %5 : vector<256x128xf32>
    %7 = math.exp %6 : vector<256x128xf32>
    %cst_5 = arith.constant 1.000000e+00 : f32
    %8 = vector.broadcast %cst_5 : f32 to vector<256x128xf32>
    %9 = arith.addf %8, %7 : vector<256x128xf32>
    %10 = arith.divf %8, %9 : vector<256x128xf32>
    %11 = arith.truncf %10 : vector<256x128xf32> to vector<256x128xbf16>
    %c0_6 = arith.constant 0 : index
    %c0_7 = arith.constant 0 : index
    %12 = vector.load %arg4[%c0_6, %c0_7] : memref<128x128xbf16, #tpu.memory_space<vmem>>, vector<128x128xbf16>
    %cst_8 = arith.constant dense<0.000000e+00> : vector<256x128xf32>
    %13 = tpu.matmul %11, %12, %cst_8 {dimension_numbers = #tpu.dot_dimension_numbers<[1], [0], [0], [1], [0, 0, 1, 1], [], []>} : vector<256x128xbf16>, vector<128x128xbf16>, vector<256x128xf32> -> vector<256x128xf32>
    %c0_9 = arith.constant 0 : index
    %c0_10 = arith.constant 0 : index
    %14 = vector.load %arg5[%c0_9, %c0_10] : memref<1x128xf32, #tpu.memory_space<vmem>>, vector<1x128xf32>
    %15 = vector.broadcast %14 : vector<1x128xf32> to vector<256x128xf32>
    %16 = arith.addf %13, %15 : vector<256x128xf32>
    %17 = arith.negf %16 : vector<256x128xf32>
    %18 = math.exp %17 : vector<256x128xf32>
    %cst_11 = arith.constant 1.000000e+00 : f32
    %19 = vector.broadcast %cst_11 : f32 to vector<256x128xf32>
    %20 = arith.addf %19, %18 : vector<256x128xf32>
    %21 = arith.divf %19, %20 : vector<256x128xf32>
    %22 = arith.truncf %21 : vector<256x128xf32> to vector<256x128xbf16>
    %c0_12 = arith.constant 0 : index
    %c0_13 = arith.constant 0 : index
    %23 = vector.load %arg6[%c0_12, %c0_13] : memref<128x128xbf16, #tpu.memory_space<vmem>>, vector<128x128xbf16>
    %cst_14 = arith.constant dense<0.000000e+00> : vector<256x128xf32>
    %24 = tpu.matmul %22, %23, %cst_14 {dimension_numbers = #tpu.dot_dimension_numbers<[1], [0], [0], [1], [0, 0, 1, 1], [], []>} : vector<256x128xbf16>, vector<128x128xbf16>, vector<256x128xf32> -> vector<256x128xf32>
    %c0_15 = arith.constant 0 : index
    %c0_16 = arith.constant 0 : index
    %25 = vector.load %arg7[%c0_15, %c0_16] : memref<1x128xf32, #tpu.memory_space<vmem>>, vector<1x128xf32>
    %26 = vector.broadcast %25 : vector<1x128xf32> to vector<256x128xf32>
    %27 = arith.addf %24, %26 : vector<256x128xf32>
    %28 = arith.negf %27 : vector<256x128xf32>
    %29 = math.exp %28 : vector<256x128xf32>
    %cst_17 = arith.constant 1.000000e+00 : f32
    %30 = vector.broadcast %cst_17 : f32 to vector<256x128xf32>
    %31 = arith.addf %30, %29 : vector<256x128xf32>
    %32 = arith.divf %30, %31 : vector<256x128xf32>
    %33 = arith.truncf %32 : vector<256x128xf32> to vector<256x128xbf16>
    %c0_18 = arith.constant 0 : index
    %c0_19 = arith.constant 0 : index
    %34 = vector.load %arg8[%c0_18, %c0_19] : memref<128x256xbf16, #tpu.memory_space<vmem>>, vector<128x256xbf16>
    %cst_20 = arith.constant dense<0.000000e+00> : vector<256x256xf32>
    %35 = tpu.matmul %33, %34, %cst_20 {dimension_numbers = #tpu.dot_dimension_numbers<[1], [0], [0], [1], [0, 0, 1, 1], [], []>} : vector<256x128xbf16>, vector<128x256xbf16>, vector<256x256xf32> -> vector<256x256xf32>
    %c0_21 = arith.constant 0 : index
    %c0_22 = arith.constant 0 : index
    %36 = vector.load %arg9[%c0_21, %c0_22] : memref<1x256xf32, #tpu.memory_space<vmem>>, vector<1x256xf32>
    %37 = vector.broadcast %36 : vector<1x256xf32> to vector<256x256xf32>
    %38 = arith.addf %35, %37 : vector<256x256xf32>
    %c0_23 = arith.constant 0 : index
    %c0_24 = arith.constant 0 : index
    %39 = vector.load %arg10[%c0_23, %c0_24] : memref<256x256xf32, #tpu.memory_space<vmem>>, vector<256x256xf32>
    tpu.vector_store %arg10[%c0_23, %c0_24], %38 {strides = array<i32>} : memref<256x256xf32, #tpu.memory_space<vmem>>, vector<256x256xf32>,
    return
  }
  func.func @transform_0(%arg0: i32) -> (i32, i32) {
    %c0_i32 = arith.constant 0 : i32
    %c0_i32_0 = arith.constant 0 : i32
    return %arg0, %c0_i32 : i32, i32
  }
  func.func @transform_1(%arg0: i32) -> (i32, i32) {
    %c0_i32 = arith.constant 0 : i32
    %c0_i32_0 = arith.constant 0 : i32
    %c0_i32_1 = arith.constant 0 : i32
    return %c0_i32, %c0_i32_0 : i32, i32
  }
  func.func @transform_2(%arg0: i32) -> (i32, i32) {
    %c0_i32 = arith.constant 0 : i32
    %c0_i32_0 = arith.constant 0 : i32
    %c0_i32_1 = arith.constant 0 : i32
    return %c0_i32, %c0_i32_0 : i32, i32
  }
  func.func @transform_3(%arg0: i32) -> (i32, i32) {
    %c0_i32 = arith.constant 0 : i32
    %c0_i32_0 = arith.constant 0 : i32
    %c0_i32_1 = arith.constant 0 : i32
    return %c0_i32, %c0_i32_0 : i32, i32
  }
  func.func @transform_4(%arg0: i32) -> (i32, i32) {
    %c0_i32 = arith.constant 0 : i32
    %c0_i32_0 = arith.constant 0 : i32
    %c0_i32_1 = arith.constant 0 : i32
    return %c0_i32, %c0_i32_0 : i32, i32
  }
  func.func @transform_5(%arg0: i32) -> (i32, i32) {
    %c0_i32 = arith.constant 0 : i32
    %c0_i32_0 = arith.constant 0 : i32
    %c0_i32_1 = arith.constant 0 : i32
    return %c0_i32, %c0_i32_0 : i32, i32
  }
  func.func @transform_6(%arg0: i32) -> (i32, i32) {
    %c0_i32 = arith.constant 0 : i32
    %c0_i32_0 = arith.constant 0 : i32
    %c0_i32_1 = arith.constant 0 : i32
    return %c0_i32, %c0_i32_0 : i32, i32
  }
  func.func @transform_7(%arg0: i32) -> (i32, i32) {
    %c0_i32 = arith.constant 0 : i32
    %c0_i32_0 = arith.constant 0 : i32
    %c0_i32_1 = arith.constant 0 : i32
    return %c0_i32, %c0_i32_0 : i32, i32
  }
  func.func @transform_8(%arg0: i32) -> (i32, i32) {
    %c0_i32 = arith.constant 0 : i32
    %c0_i32_0 = arith.constant 0 : i32
    %c0_i32_1 = arith.constant 0 : i32
    return %c0_i32, %c0_i32_0 : i32, i32
  }
  func.func @transform_9(%arg0: i32) -> (i32, i32) {
    %c0_i32 = arith.constant 0 : i32
    %c0_i32_0 = arith.constant 0 : i32
    return %arg0, %c0_i32 : i32, i32
  }
}

</mosaic_0001>

<llo_original>
// kernel: autoencoder_forward.1
$region0: #{autoencoder_forward.1}
  #allocation0 [shape = 'u32[]', space=smem, size = 0x4, offset = 0x4, fixed_abs, tag = 'smem constant byte address 0x4 - core index']
  #allocation1 [shape = 'u32[72,128]{1,0:T(1,128)}', space=vmem, size = 0x9000, scoped, tag = 'internal scratch']
  %s0 = inlined_call_operand.vmem [shape: bf16[512,256], index: 0, kind: input, shape index: {}]
  %s1 = inlined_call_operand.vmem [shape: bf16[256,128], index: 1, kind: input, shape index: {}]
  %s2 = inlined_call_operand.vmem [shape: f32[1,128], index: 2, kind: input, shape index: {}]
  %s3 = inlined_call_operand.vmem [shape: bf16[128,128], index: 3, kind: input, shape index: {}]
  %s4 = inlined_call_operand.vmem [shape: f32[1,128], index: 4, kind: input, shape index: {}]
  %s5 = inlined_call_operand.vmem [shape: bf16[128,128], index: 5, kind: input, shape index: {}]
  %s6 = inlined_call_operand.vmem [shape: f32[1,128], index: 6, kind: input, shape index: {}]
  %s7 = inlined_call_operand.vmem [shape: bf16[128,256], index: 7, kind: input, shape index: {}]
  %s8 = inlined_call_operand.vmem [shape: f32[1,256], index: 8, kind: input, shape index: {}]
  %s9 = inlined_call_operand.hbm [shape: f32[512,256], index: 9, kind: output, shape index: {}]
  %s10 = sld [smem:[#allocation0]]
  $region69: #{autoencoder_forward.1} parent=0
    _
  %s12 = ssub.s32 1, %s10
  %s13 = scalar_select 0, %s12, %s10
  $region1: #{autoencoder_forward.1} parent=0
    #allocation2 [shape = 'u8[524288]{0}', space=vmem, size = 0x80000, scoped, tag = 'output window, operand 0']
    #allocation3 [shape = 's32[2]{0}', space=sflag, size = 0x8, scoped, tag = 'scoped memory for autoencoder_forward.1']
    %14 = vsyncpa [#allocation3], 0
    %s15 = scalar_lea.sflag [#allocation3], 1
    %16 = vsyncpa %s15, 0
    loop: start=0, step=1, limit=4
    $region2: #{autoencoder_forward.1} parent=1 // loop_pre_header
      _
    $region3: #{autoencoder_forward.1} parent=1 // loop_header
      %s18 = sphi 0, %s22
      %p19 = scmp.ge.s32.totalorder %s18, 4
      %s28 = sphi 0, %s30
      %s31 = sphi 0, %s28
      %s32 = sphi 0, %s31
      %s48 = sphi 0, %s32
      %s52 = sphi 0, %s52
      %s54 = sphi 0, %s52
      %s55 = sphi 0, %s54
      %s69 = sphi 0, %s55
      %s73 = sphi 0, %s73
      %s75 = sphi 0, %s73
      %s76 = sphi 0, %s75
      %s90 = sphi 0, %s76
      %s94 = sphi 0, %s94
      %s96 = sphi 0, %s94
      %s97 = sphi 0, %s96
      %s111 = sphi 0, %s97
      %s115 = sphi 0, %s115
      %s117 = sphi 0, %s115
      %s118 = sphi 0, %s117
      %s132 = sphi 0, %s118
      %s136 = sphi 0, %s136
      %s138 = sphi 0, %s136
      %s139 = sphi 0, %s138
      %s153 = sphi 0, %s139
      %s157 = sphi 0, %s157
      %s159 = sphi 0, %s157
      %s160 = sphi 0, %s159
      %s174 = sphi 0, %s160
      %s178 = sphi 0, %s178
      %s180 = sphi 0, %s178
      %s181 = sphi 0, %s180
      %s195 = sphi 0, %s181
      %s199 = sphi 0, %s199
      %s201 = sphi 0, %s199
      %s202 = sphi 0, %s201
      %s216 = sphi 0, %s202
      %s222 = sphi 0, %s224
      %s225 = sphi 0, %s222
      %s226 = sphi 0, %s225
      %s242 = sphi 0, %s226
    $region4: #{autoencoder_forward.1} parent=1 // loop_header_branch
      %21 = sbr.rel (%p19) target = $region8
    $region5: #{autoencoder_forward.1} parent=1 // loop_body
      %s23 = ssub.s32 %s18, 1
      %s24 = ssub.s32 %s18, 2
      %s25 = sadd.s32 %s18, 1
      %s26 = ssub.s32 %s18, %s25
      %p27 = scmp.eq.s32.totalorder %s26, 0
      %s29 = sadd.s32 %s28, 1
      %s30 = scalar_select %p27, %s28, %s29
      %p33 = pneg %p27
      %p34 = scmp.eq.s32.totalorder %s18, 1
      %p35 = por %p33, %p34
      %p36 = scmp.ne.s32.totalorder %s28, %s31
      %p37 = scmp.eq.s32.totalorder %s18, 0
      %p38 = por %p36, %p37
      %p39 = scmp.ne.s32.totalorder %s28, %s31
      %p40 = scmp.eq.s32.totalorder %s23, 1
      %p41 = por %p39, %p40
      %p42 = scmp.ne.s32.totalorder %s31, %s32
      %p43 = scmp.eq.s32.totalorder %s23, 0
      %p44 = por %p42, %p43
      %p45 = scmp.ne.s32.totalorder %s31, %s32
      %p46 = scmp.eq.s32.totalorder %s24, 1
      %p47 = por %p45, %p46
      %p49 = scmp.ne.s32.totalorder %s32, %s48
      %p50 = scmp.eq.s32.totalorder %s24, 0
      %p51 = por %p49, %p50
      %s53 = sadd.s32 %s52, 1
      %p56 = scmp.eq.s32.totalorder %s18, 1
      %p57 = scmp.ne.s32.totalorder %s52, %s54
      %p58 = scmp.eq.s32.totalorder %s18, 0
      %p59 = por %p57, %p58
      %p60 = scmp.ne.s32.totalorder %s52, %s54
      %p61 = scmp.eq.s32.totalorder %s23, 1
      %p62 = por %p60, %p61
      %p63 = scmp.ne.s32.totalorder %s54, %s55
      %p64 = scmp.eq.s32.totalorder %s23, 0
      %p65 = por %p63, %p64
      %p66 = scmp.ne.s32.totalorder %s54, %s55
      %p67 = scmp.eq.s32.totalorder %s24, 1
      %p68 = por %p66, %p67
      %p70 = scmp.ne.s32.totalorder %s55, %s69
      %p71 = scmp.eq.s32.totalorder %s24, 0
      %p72 = por %p70, %p71
      %s74 = sadd.s32 %s73, 1
      %p77 = scmp.eq.s32.totalorder %s18, 1
      %p78 = scmp.ne.s32.totalorder %s73, %s75
      %p79 = scmp.eq.s32.totalorder %s18, 0
      %p80 = por %p78, %p79
      %p81 = scmp.ne.s32.totalorder %s73, %s75
      %p82 = scmp.eq.s32.totalorder %s23, 1
      %p83 = por %p81, %p82
      %p84 = scmp.ne.s32.totalorder %s75, %s76
      %p85 = scmp.eq.s32.totalorder %s23, 0
      %p86 = por %p84, %p85
      %p87 = scmp.ne.s32.totalorder %s75, %s76
      %p88 = scmp.eq.s32.totalorder %s24, 1
      %p89 = por %p87, %p88
      %p91 = scmp.ne.s32.totalorder %s76, %s90
      %p92 = scmp.eq.s32.totalorder %s24, 0
      %p93 = por %p91, %p92
      %s95 = sadd.s32 %s94, 1
      %p98 = scmp.eq.s32.totalorder %s18, 1
      %p99 = scmp.ne.s32.totalorder %s94, %s96
      %p100 = scmp.eq.s32.totalorder %s18, 0
      %p101 = por %p99, %p100
      %p102 = scmp.ne.s32.totalorder %s94, %s96
      %p103 = scmp.eq.s32.totalorder %s23, 1
      %p104 = por %p102, %p103
      %p105 = scmp.ne.s32.totalorder %s96, %s97
      %p106 = scmp.eq.s32.totalorder %s23, 0
      %p107 = por %p105, %p106
      %p108 = scmp.ne.s32.totalorder %s96, %s97
      %p109 = scmp.eq.s32.totalorder %s24, 1
      %p110 = por %p108, %p109
      %p112 = scmp.ne.s32.totalorder %s97, %s111
      %p113 = scmp.eq.s32.totalorder %s24, 0
      %p114 = por %p112, %p113
      %s116 = sadd.s32 %s115, 1
      %p119 = scmp.eq.s32.totalorder %s18, 1
      %p120 = scmp.ne.s32.totalorder %s115, %s117
      %p121 = scmp.eq.s32.totalorder %s18, 0
      %p122 = por %p120, %p121
      %p123 = scmp.ne.s32.totalorder %s115, %s117
      %p124 = scmp.eq.s32.totalorder %s23, 1
      %p125 = por %p123, %p124
      %p126 = scmp.ne.s32.totalorder %s117, %s118
      %p127 = scmp.eq.s32.totalorder %s23, 0
      %p128 = por %p126, %p127
      %p129 = scmp.ne.s32.totalorder %s117, %s118
      %p130 = scmp.eq.s32.totalorder %s24, 1
      %p131 = por %p129, %p130
      %p133 = scmp.ne.s32.totalorder %s118, %s132
      %p134 = scmp.eq.s32.totalorder %s24, 0
      %p135 = por %p133, %p134
      %s137 = sadd.s32 %s136, 1
      %p140 = scmp.eq.s32.totalorder %s18, 1
      %p141 = scmp.ne.s32.totalorder %s136, %s138
      %p142 = scmp.eq.s32.totalorder %s18, 0
      %p143 = por %p141, %p142
      %p144 = scmp.ne.s32.totalorder %s136, %s138
      %p145 = scmp.eq.s32.totalorder %s23, 1
      %p146 = por %p144, %p145
      %p147 = scmp.ne.s32.totalorder %s138, %s139
      %p148 = scmp.eq.s32.totalorder %s23, 0
      %p149 = por %p147, %p148
      %p150 = scmp.ne.s32.totalorder %s138, %s139
      %p151 = scmp.eq.s32.totalorder %s24, 1
      %p152 = por %p150, %p151
      %p154 = scmp.ne.s32.totalorder %s139, %s153
      %p155 = scmp.eq.s32.totalorder %s24, 0
      %p156 = por %p154, %p155
      %s158 = sadd.s32 %s157, 1
      %p161 = scmp.eq.s32.totalorder %s18, 1
      %p162 = scmp.ne.s32.totalorder %s157, %s159
      %p163 = scmp.eq.s32.totalorder %s18, 0
      %p164 = por %p162, %p163
      %p165 = scmp.ne.s32.totalorder %s157, %s159
      %p166 = scmp.eq.s32.totalorder %s23, 1
      %p167 = por %p165, %p166
      %p168 = scmp.ne.s32.totalorder %s159, %s160
      %p169 = scmp.eq.s32.totalorder %s23, 0
      %p170 = por %p168, %p169
      %p171 = scmp.ne.s32.totalorder %s159, %s160
      %p172 = scmp.eq.s32.totalorder %s24, 1
      %p173 = por %p171, %p172
      %p175 = scmp.ne.s32.totalorder %s160, %s174
      %p176 = scmp.eq.s32.totalorder %s24, 0
      %p177 = por %p175, %p176
      %s179 = sadd.s32 %s178, 1
      %p182 = scmp.eq.s32.totalorder %s18, 1
      %p183 = scmp.ne.s32.totalorder %s178, %s180
      %p184 = scmp.eq.s32.totalorder %s18, 0
      %p185 = por %p183, %p184
      %p186 = scmp.ne.s32.totalorder %s178, %s180
      %p187 = scmp.eq.s32.totalorder %s23, 1
      %p188 = por %p186, %p187
      %p189 = scmp.ne.s32.totalorder %s180, %s181
      %p190 = scmp.eq.s32.totalorder %s23, 0
      %p191 = por %p189, %p190
      %p192 = scmp.ne.s32.totalorder %s180, %s181
      %p193 = scmp.eq.s32.totalorder %s24, 1
      %p194 = por %p192, %p193
      %p196 = scmp.ne.s32.totalorder %s181, %s195
      %p197 = scmp.eq.s32.totalorder %s24, 0
      %p198 = por %p196, %p197
      %s200 = sadd.s32 %s199, 1
      %p203 = scmp.eq.s32.totalorder %s18, 1
      %p204 = scmp.ne.s32.totalorder %s199, %s201
      %p205 = scmp.eq.s32.totalorder %s18, 0
      %p206 = por %p204, %p205
      %p207 = scmp.ne.s32.totalorder %s199, %s201
      %p208 = scmp.eq.s32.totalorder %s23, 1
      %p209 = por %p207, %p208
      %p210 = scmp.ne.s32.totalorder %s201, %s202
      %p211 = scmp.eq.s32.totalorder %s23, 0
      %p212 = por %p210, %p211
      %p213 = scmp.ne.s32.totalorder %s201, %s202
      %p214 = scmp.eq.s32.totalorder %s24, 1
      %p215 = por %p213, %p214
      %p217 = scmp.ne.s32.totalorder %s202, %s216
      %p218 = scmp.eq.s32.totalorder %s24, 0
      %p219 = por %p217, %p218
      %s220 = ssub.s32 %s18, %s25
      %p221 = scmp.eq.s32.totalorder %s220, 0
      %s223 = sadd.s32 %s222, 1
      %s224 = scalar_select %p221, %s222, %s223
      %p227 = pneg %p221
      %p228 = scmp.eq.s32.totalorder %s18, 1
      %p229 = por %p227, %p228
      %p230 = scmp.ne.s32.totalorder %s222, %s225
      %p231 = scmp.eq.s32.totalorder %s18, 0
      %p232 = por %p230, %p231
      %p233 = scmp.ne.s32.totalorder %s222, %s225
      %p234 = scmp.eq.s32.totalorder %s23, 1
      %p235 = por %p233, %p234
      %p236 = scmp.ne.s32.totalorder %s225, %s226
      %p237 = scmp.eq.s32.totalorder %s23, 0
      %p238 = por %p236, %p237
      %p239 = scmp.ne.s32.totalorder %s225, %s226
      %p240 = scmp.eq.s32.totalorder %s24, 1
      %p241 = por %p239, %p240
      %p243 = scmp.ne.s32.totalorder %s226, %s242
      %p244 = scmp.eq.s32.totalorder %s24, 0
      %p245 = por %p243, %p244
      %p246 = scmp.le.s32.totalorder 1, %s18
      %p247 = scmp.lt.s32.totalorder %s18, 3
      %p248 = pnand %p246, %p247
      %p249 = pneg %p248
      // Predicated region
      $region9: #{autoencoder_forward.1} parent=5 // pred_check
        _
      $region10: #{autoencoder_forward.1} parent=5 // pred_check_branch
        %251 = sbr.rel (%p248) target = $region12
      $region11: #{autoencoder_forward.1} parent=5 // pred_region
        %s252 = ssub.s32 %s18, 1
        // Predicated region
        $region13: #{autoencoder_forward.1} parent=11 // pred_check
          %p253 = pneg %p65
        $region14: #{autoencoder_forward.1} parent=11 // pred_check_branch
          %255 = sbr.rel (%p253) target = $region16
        $region15: #{autoencoder_forward.1} parent=11 // pred_region
          _
        $region16: #{autoencoder_forward.1} parent=11 // pred_fallthru
          _
        // Predicated region
        $region17: #{autoencoder_forward.1} parent=11 // pred_check
          %p256 = pneg %p86
        $region18: #{autoencoder_forward.1} parent=11 // pred_check_branch
          %258 = sbr.rel (%p256) target = $region20
        $region19: #{autoencoder_forward.1} parent=11 // pred_region
          _
        $region20: #{autoencoder_forward.1} parent=11 // pred_fallthru
          _
        // Predicated region
        $region21: #{autoencoder_forward.1} parent=11 // pred_check
          %p259 = pneg %p107
        $region22: #{autoencoder_forward.1} parent=11 // pred_check_branch
          %261 = sbr.rel (%p259) target = $region24
        $region23: #{autoencoder_forward.1} parent=11 // pred_region
          _
        $region24: #{autoencoder_forward.1} parent=11 // pred_fallthru
          _
        // Predicated region
        $region25: #{autoencoder_forward.1} parent=11 // pred_check
          %p262 = pneg %p128
        $region26: #{autoencoder_forward.1} parent=11 // pred_check_branch
          %264 = sbr.rel (%p262) target = $region28
        $region27: #{autoencoder_forward.1} parent=11 // pred_region
          _
        $region28: #{autoencoder_forward.1} parent=11 // pred_fallthru
          _
        // Predicated region
        $region29: #{autoencoder_forward.1} parent=11 // pred_check
          %p265 = pneg %p149
        $region30: #{autoencoder_forward.1} parent=11 // pred_check_branch
          %267 = sbr.rel (%p265) target = $region32
        $region31: #{autoencoder_forward.1} parent=11 // pred_region
          _
        $region32: #{autoencoder_forward.1} parent=11 // pred_fallthru
          _
        // Predicated region
        $region33: #{autoencoder_forward.1} parent=11 // pred_check
          %p268 = pneg %p170
        $region34: #{autoencoder_forward.1} parent=11 // pred_check_branch
          %270 = sbr.rel (%p268) target = $region36
        $region35: #{autoencoder_forward.1} parent=11 // pred_region
          _
        $region36: #{autoencoder_forward.1} parent=11 // pred_fallthru
          _
        // Predicated region
        $region37: #{autoencoder_forward.1} parent=11 // pred_check
          %p271 = pneg %p191
        $region38: #{autoencoder_forward.1} parent=11 // pred_check_branch
          %273 = sbr.rel (%p271) target = $region40
        $region39: #{autoencoder_forward.1} parent=11 // pred_region
          _
        $region40: #{autoencoder_forward.1} parent=11 // pred_fallthru
          _
        // Predicated region
        $region41: #{autoencoder_forward.1} parent=11 // pred_check
          %p274 = pneg %p212
        $region42: #{autoencoder_forward.1} parent=11 // pred_check_branch
          %276 = sbr.rel (%p274) target = $region44
        $region43: #{autoencoder_forward.1} parent=11 // pred_region
          _
        $region44: #{autoencoder_forward.1} parent=11 // pred_fallthru
          _
      $region12: #{autoencoder_forward.1} parent=5 // pred_fallthru
        _
      %p277 = scmp.lt.s32.totalorder %s18, 2
      // Predicated region
      $region45: #{autoencoder_forward.1} parent=5 // pred_check
        %p278 = pneg %p277
      $region46: #{autoencoder_forward.1} parent=5 // pred_check_branch
        %280 = sbr.rel (%p278) target = $region48
      $region47: #{autoencoder_forward.1} parent=5 // pred_region
        // Predicated region
        $region49: #{autoencoder_forward.1} parent=47 // pred_check
          %p281 = pneg %p38
        $region50: #{autoencoder_forward.1} parent=47 // pred_check_branch
          %283 = sbr.rel (%p281) target = $region52
        $region51: #{autoencoder_forward.1} parent=47 // pred_region
          %s284 = smul.u32 32, %s18
          %p285 = scmp.lt.s32.totalorder %s284, 63
          %s286 = scalar_select %p285, %s284, 63
          %s287 = smul.addr %s286, 2
          %s288 = smul.addr %s287, 4
          %s289 = scalar_lea.vmem %s0, %s288
          %s290 = smul.u32 32, %s18
        $region52: #{autoencoder_forward.1} parent=47 // pred_fallthru
          _
      $region48: #{autoencoder_forward.1} parent=5 // pred_fallthru
        _
      %p291 = scmp.le.s32.totalorder 1, %s18
      %p292 = scmp.lt.s32.totalorder %s18, 3
      %p293 = pnand %p291, %p292
      %p294 = pneg %p293
      // Predicated region
      $region53: #{autoencoder_forward.1} parent=5 // pred_check
        _
      $region54: #{autoencoder_forward.1} parent=5 // pred_check_branch
        %296 = sbr.rel (%p293) target = $region56
      $region55: #{autoencoder_forward.1} parent=5 // pred_region
        %s297 = ssub.s32 %s18, 1
        %s298 = smul.u32 32, %s23
        %p299 = scmp.lt.s32.totalorder %s298, 63
        %s300 = scalar_select %p299, %s298, 63
        %s301 = smul.addr %s300, 2
        %s302 = smul.addr %s301, 4
        %s303 = scalar_lea.vmem %s0, %s302
        %p304 = pneg %p44
        %p305 = pneg %p41
        %p306 = pneg %p65
        %p307 = pneg %p62
        %p308 = pneg %p86
        %p309 = pneg %p83
        %p310 = pneg %p107
        %p311 = pneg %p104
        %p312 = pneg %p128
        %p313 = pneg %p125
        %p314 = pneg %p149
        %p315 = pneg %p146
        %p316 = pneg %p170
        %p317 = pneg %p167
        %p318 = pneg %p191
        %p319 = pneg %p188
        %p320 = pneg %p212
        %p321 = pneg %p209
        %p322 = pneg %p238
        %p323 = pneg %p235
        %s324 = sand.u32 %s225, 1
        %s325 = scalar_lea.sflag [#allocation3], %s324
        %s326 = sand.u32 %s225, 1
        %s327 = smul.addr %s326, 512
        %s328 = scalar_lea.vmem [#allocation2], %s327
        %s329 = smul.u32 32, %s23
        %p330 = scmp.lt.s32.totalorder %s329, 63
        %s331 = scalar_select %p330, %s329, 63
        %s332 = smul.addr %s331, 2
        %s333 = smul.addr %s332, 4
        %s334 = scalar_lea.vmem %s0, %s333
        %s335 = smul.u32 32, %s23
        %s336 = smul.u32 32, %s23
        %v337 = vld [vmem:[%s334] sm:$0xff]
        %v338 = vld [vmem:[%s334 + $0x8] sm:$0xff]
        %v339 = vld [vmem:[%s334 + $0x10] sm:$0xff]
        %v340 = vld [vmem:[%s334 + $0x18] sm:$0xff]
        %v341 = vld [vmem:[%s334 + $0x20] sm:$0xff]
        %v342 = vld [vmem:[%s334 + $0x28] sm:$0xff]
        %v343 = vld [vmem:[%s334 + $0x30] sm:$0xff]
        %v344 = vld [vmem:[%s334 + $0x38] sm:$0xff]
        %v345 = vld [vmem:[%s334 + $0x40] sm:$0xff]
        %v346 = vld [vmem:[%s334 + $0x48] sm:$0xff]
        %v347 = vld [vmem:[%s334 + $0x50] sm:$0xff]
        %v348 = vld [vmem:[%s334 + $0x58] sm:$0xff]
        %v349 = vld [vmem:[%s334 + $0x60] sm:$0xff]
        %v350 = vld [vmem:[%s334 + $0x68] sm:$0xff]
        %v351 = vld [vmem:[%s334 + $0x70] sm:$0xff]
        %v352 = vld [vmem:[%s334 + $0x78] sm:$0xff]
        %v353 = vld [vmem:[%s334 + $0x80] sm:$0xff]
        %v354 = vld [vmem:[%s334 + $0x88] sm:$0xff]
        %v355 = vld [vmem:[%s334 + $0x90] sm:$0xff]
        %v356 = vld [vmem:[%s334 + $0x98] sm:$0xff]
        %v357 = vld [vmem:[%s334 + $0xa0] sm:$0xff]
        %v358 = vld [vmem:[%s334 + $0xa8] sm:$0xff]
        %v359 = vld [vmem:[%s334 + $0xb0] sm:$0xff]
        %v360 = vld [vmem:[%s334 + $0xb8] sm:$0xff]
        %v361 = vld [vmem:[%s334 + $0xc0] sm:$0xff]
        %v362 = vld [vmem:[%s334 + $0xc8] sm:$0xff]
        %v363 = vld [vmem:[%s334 + $0xd0] sm:$0xff]
        %v364 = vld [vmem:[%s334 + $0xd8] sm:$0xff]
        %v365 = vld [vmem:[%s334 + $0xe0] sm:$0xff]
        %v366 = vld [vmem:[%s334 + $0xe8] sm:$0xff]
        %v367 = vld [vmem:[%s334 + $0xf0] sm:$0xff]
        %v368 = vld [vmem:[%s334 + $0xf8] sm:$0xff]
        %v369 = vld [vmem:[%s1] sm:$0xf]
        %v370 = vld [vmem:[%s1 + $0x4] sm:$0xf]
        %v371 = vld [vmem:[%s1 + $0x8] sm:$0xf]
        %v372 = vld [vmem:[%s1 + $0xc] sm:$0xf]
        %v373 = vld [vmem:[%s1 + $0x10] sm:$0xf]
        %v374 = vld [vmem:[%s1 + $0x14] sm:$0xf]
        %v375 = vld [vmem:[%s1 + $0x18] sm:$0xf]
        %v376 = vld [vmem:[%s1 + $0x1c] sm:$0xf]
        %v377 = vld [vmem:[%s1 + $0x20] sm:$0xf]
        %v378 = vld [vmem:[%s1 + $0x24] sm:$0xf]
        %v379 = vld [vmem:[%s1 + $0x28] sm:$0xf]
        %v380 = vld [vmem:[%s1 + $0x2c] sm:$0xf]
        %v381 = vld [vmem:[%s1 + $0x30] sm:$0xf]
        %v382 = vld [vmem:[%s1 + $0x34] sm:$0xf]
        %v383 = vld [vmem:[%s1 + $0x38] sm:$0xf]
        %v384 = vld [vmem:[%s1 + $0x3c] sm:$0xf]
        %v385 = vld [vmem:[%s1 + $0x40] sm:$0xf]
        %v386 = vld [vmem:[%s1 + $0x44] sm:$0xf]
        %v387 = vld [vmem:[%s1 + $0x48] sm:$0xf]
        %v388 = vld [vmem:[%s1 + $0x4c] sm:$0xf]
        %v389 = vld [vmem:[%s1 + $0x50] sm:$0xf]
        %v390 = vld [vmem:[%s1 + $0x54] sm:$0xf]
        %v391 = vld [vmem:[%s1 + $0x58] sm:$0xf]
        %v392 = vld [vmem:[%s1 + $0x5c] sm:$0xf]
        %v393 = vld [vmem:[%s1 + $0x60] sm:$0xf]
        %v394 = vld [vmem:[%s1 + $0x64] sm:$0xf]
        %v395 = vld [vmem:[%s1 + $0x68] sm:$0xf]
        %v396 = vld [vmem:[%s1 + $0x6c] sm:$0xf]
        %v397 = vld [vmem:[%s1 + $0x70] sm:$0xf]
        %v398 = vld [vmem:[%s1 + $0x74] sm:$0xf]
        %v399 = vld [vmem:[%s1 + $0x78] sm:$0xf]
        %v400 = vld [vmem:[%s1 + $0x7c] sm:$0xf]
        %v401 = vld [vmem:[%s2] sm:$0x1]
        %v403 = vperm.slane %v401, 0
        %v437 = vunpack.c.l.b16 %v337
        %v438 = vunpack.c.h.b16 %v337
        %v439 = vunpack.c.l.b16 %v338
        %v440 = vunpack.c.h.b16 %v338
        %v441 = vunpack.c.l.b16 %v339
        %v442 = vunpack.c.h.b16 %v339
        %v443 = vunpack.c.l.b16 %v340
        %v444 = vunpack.c.h.b16 %v340
        %v445 = vunpack.c.l.b16 %v341
        %v446 = vunpack.c.h.b16 %v341
        %v447 = vunpack.c.l.b16 %v342
        %v448 = vunpack.c.h.b16 %v342
        %v449 = vunpack.c.l.b16 %v343
        %v450 = vunpack.c.h.b16 %v343
        %v451 = vunpack.c.l.b16 %v344
        %v452 = vunpack.c.h.b16 %v344
        %v453 = vunpack.c.l.b16 %v345
        %v454 = vunpack.c.h.b16 %v345
        %v455 = vunpack.c.l.b16 %v346
        %v456 = vunpack.c.h.b16 %v346
        %v457 = vunpack.c.l.b16 %v347
        %v458 = vunpack.c.h.b16 %v347
        %v459 = vunpack.c.l.b16 %v348
        %v460 = vunpack.c.h.b16 %v348
        %v461 = vunpack.c.l.b16 %v349
        %v462 = vunpack.c.h.b16 %v349
        %v463 = vunpack.c.l.b16 %v350
        %v464 = vunpack.c.h.b16 %v350
        %v465 = vunpack.c.l.b16 %v351
        %v466 = vunpack.c.h.b16 %v351
        %v467 = vunpack.c.l.b16 %v352
        %v468 = vunpack.c.h.b16 %v352
        %v469 = vunpack.c.l.b16 %v353
        %v470 = vunpack.c.h.b16 %v353
        %v471 = vunpack.c.l.b16 %v354
        %v472 = vunpack.c.h.b16 %v354
        %v473 = vunpack.c.l.b16 %v355
        %v474 = vunpack.c.h.b16 %v355
        %v475 = vunpack.c.l.b16 %v356
        %v476 = vunpack.c.h.b16 %v356
        %v477 = vunpack.c.l.b16 %v357
        %v478 = vunpack.c.h.b16 %v357
        %v479 = vunpack.c.l.b16 %v358
        %v480 = vunpack.c.h.b16 %v358
        %v481 = vunpack.c.l.b16 %v359
        %v482 = vunpack.c.h.b16 %v359
        %v483 = vunpack.c.l.b16 %v360
        %v484 = vunpack.c.h.b16 %v360
        %v485 = vunpack.c.l.b16 %v361
        %v486 = vunpack.c.h.b16 %v361
        %v487 = vunpack.c.l.b16 %v362
        %v488 = vunpack.c.h.b16 %v362
        %v489 = vunpack.c.l.b16 %v363
        %v490 = vunpack.c.h.b16 %v363
        %v491 = vunpack.c.l.b16 %v364
        %v492 = vunpack.c.h.b16 %v364
        %v493 = vunpack.c.l.b16 %v365
        %v494 = vunpack.c.h.b16 %v365
        %v495 = vunpack.c.l.b16 %v366
        %v496 = vunpack.c.h.b16 %v366
        %v497 = vunpack.c.l.b16 %v367
        %v498 = vunpack.c.h.b16 %v367
        %v499 = vunpack.c.l.b16 %v368
        %v500 = vunpack.c.h.b16 %v368
        %v501 = vpack.c.b16 %v439, %v437
        %v502 = vpack.c.b16 %v440, %v438
        %v503 = vpack.c.b16 %v443, %v441
        %v504 = vpack.c.b16 %v444, %v442
        %v505 = vpack.c.b16 %v447, %v445
        %v506 = vpack.c.b16 %v448, %v446
        %v507 = vpack.c.b16 %v451, %v449
        %v508 = vpack.c.b16 %v452, %v450
        %v509 = vpack.c.b16 %v455, %v453
        %v510 = vpack.c.b16 %v456, %v454
        %v511 = vpack.c.b16 %v459, %v457
        %v512 = vpack.c.b16 %v460, %v458
        %v513 = vpack.c.b16 %v463, %v461
        %v514 = vpack.c.b16 %v464, %v462
        %v515 = vpack.c.b16 %v467, %v465
        %v516 = vpack.c.b16 %v468, %v466
        %v517 = vpack.c.b16 %v471, %v469
        %v518 = vpack.c.b16 %v472, %v470
        %v519 = vpack.c.b16 %v475, %v473
        %v520 = vpack.c.b16 %v476, %v474
        %v521 = vpack.c.b16 %v479, %v477
        %v522 = vpack.c.b16 %v480, %v478
        %v523 = vpack.c.b16 %v483, %v481
        %v524 = vpack.c.b16 %v484, %v482
        %v525 = vpack.c.b16 %v487, %v485
        %v526 = vpack.c.b16 %v488, %v486
        %v527 = vpack.c.b16 %v491, %v489
        %v528 = vpack.c.b16 %v492, %v490
        %v529 = vpack.c.b16 %v495, %v493
        %v530 = vpack.c.b16 %v496, %v494
        %v531 = vpack.c.b16 %v499, %v497
        %v532 = vpack.c.b16 %v500, %v498
        %v597 = vunpack.c.l.b16 %v369
        %v598 = vunpack.c.l.b16 %v370
        %v599 = vunpack.c.l.b16 %v371
        %v600 = vunpack.c.l.b16 %v372
        %v601 = vunpack.c.l.b16 %v373
        %v602 = vunpack.c.l.b16 %v374
        %v603 = vunpack.c.l.b16 %v375
        %v604 = vunpack.c.l.b16 %v376
        %v605 = vunpack.c.l.b16 %v377
        %v606 = vunpack.c.l.b16 %v378
        %v607 = vunpack.c.l.b16 %v379
        %v608 = vunpack.c.l.b16 %v380
        %v609 = vunpack.c.l.b16 %v381
        %v610 = vunpack.c.l.b16 %v382
        %v611 = vunpack.c.l.b16 %v383
        %v612 = vunpack.c.l.b16 %v384
        %v613 = vunpack.c.l.b16 %v385
        %v614 = vunpack.c.l.b16 %v386
        %v615 = vunpack.c.l.b16 %v387
        %v616 = vunpack.c.l.b16 %v388
        %v617 = vunpack.c.l.b16 %v389
        %v618 = vunpack.c.l.b16 %v390
        %v619 = vunpack.c.l.b16 %v391
        %v620 = vunpack.c.l.b16 %v392
        %v621 = vunpack.c.l.b16 %v393
        %v622 = vunpack.c.l.b16 %v394
        %v623 = vunpack.c.l.b16 %v395
        %v624 = vunpack.c.l.b16 %v396
        %v625 = vunpack.c.l.b16 %v397
        %v626 = vunpack.c.l.b16 %v398
        %v627 = vunpack.c.l.b16 %v399
        %v628 = vunpack.c.l.b16 %v400
        %v629 = vpack.c.b16 %v598, %v597
        %v630 = vpack.c.b16 %v600, %v599
        %v631 = vpack.c.b16 %v602, %v601
        %v632 = vpack.c.b16 %v604, %v603
        %v633 = vpack.c.b16 %v606, %v605
        %v634 = vpack.c.b16 %v608, %v607
        %v635 = vpack.c.b16 %v610, %v609
        %v636 = vpack.c.b16 %v612, %v611
        %v637 = vpack.c.b16 %v614, %v613
        %v638 = vpack.c.b16 %v616, %v615
        %v639 = vpack.c.b16 %v618, %v617
        %v640 = vpack.c.b16 %v620, %v619
        %v641 = vpack.c.b16 %v622, %v621
        %v642 = vpack.c.b16 %v624, %v623
        %v643 = vpack.c.b16 %v626, %v625
        %v644 = vpack.c.b16 %v628, %v627
        %661 = vmatpush.bf16.msra.mxu0 %v636
        %662 = vmatpush.bf16.msra.mxu0 %v635
        %663 = vmatpush.bf16.msra.mxu0 %v634
        %664 = vmatpush.bf16.msra.mxu0 %v633
        %665 = vmatpush.bf16.msra.mxu0 %v632
        %666 = vmatpush.bf16.msra.mxu0 %v631
        %667 = vmatpush.bf16.msra.mxu0 %v630
        %668 = vmatpush.bf16.msra.mxu0 %v629
        %669 = vmatmul.bf16.gmra.mxu0 %v501
        %v670 = vpop.f32.mrf.mxu0
        %v671 = vadd.f32 %v403, %v670
        %v672 = vpop.f32.mrf.mxu0
        %v673 = vadd.f32 %v403, %v672
        %674 = vmatmul.bf16.gmra.mxu0 %v503
        %v675 = vpop.f32.mrf.mxu0
        %v676 = vadd.f32 %v403, %v675
        %v677 = vpop.f32.mrf.mxu0
        %v678 = vadd.f32 %v403, %v677
        %679 = vmatmul.bf16.gmra.mxu0 %v505
        %v680 = vpop.f32.mrf.mxu0
        %v681 = vadd.f32 %v403, %v680
        %v682 = vpop.f32.mrf.mxu0
        %v683 = vadd.f32 %v403, %v682
        %684 = vmatmul.bf16.gmra.mxu0 %v507
        %v685 = vpop.f32.mrf.mxu0
        %v686 = vadd.f32 %v403, %v685
        %v687 = vpop.f32.mrf.mxu0
        %v688 = vadd.f32 %v403, %v687
        %689 = vmatmul.bf16.gmra.mxu0 %v509
        %v690 = vpop.f32.mrf.mxu0
        %v691 = vadd.f32 %v403, %v690
        %v692 = vpop.f32.mrf.mxu0
        %v693 = vadd.f32 %v403, %v692
        %694 = vmatmul.bf16.gmra.mxu0 %v511
        %v695 = vpop.f32.mrf.mxu0
        %v696 = vadd.f32 %v403, %v695
        %v697 = vpop.f32.mrf.mxu0
        %v698 = vadd.f32 %v403, %v697
        %699 = vmatmul.bf16.gmra.mxu0 %v513
        %v700 = vpop.f32.mrf.mxu0
        %v701 = vadd.f32 %v403, %v700
        %v702 = vpop.f32.mrf.mxu0
        %v703 = vadd.f32 %v403, %v702
        %704 = vmatmul.bf16.gmra.mxu0 %v515
        %v705 = vpop.f32.mrf.mxu0
        %v706 = vadd.f32 %v403, %v705
        %v707 = vpop.f32.mrf.mxu0
        %v708 = vadd.f32 %v403, %v707
        %709 = vmatmul.bf16.gmra.mxu0 %v517
        %v710 = vpop.f32.mrf.mxu0
        %v711 = vadd.f32 %v403, %v710
        %v712 = vpop.f32.mrf.mxu0
        %v713 = vadd.f32 %v403, %v712
        %714 = vmatmul.bf16.gmra.mxu0 %v519
        %v715 = vpop.f32.mrf.mxu0
        %v716 = vadd.f32 %v403, %v715
        %v717 = vpop.f32.mrf.mxu0
        %v718 = vadd.f32 %v403, %v717
        %719 = vmatmul.bf16.gmra.mxu0 %v521
        %v720 = vpop.f32.mrf.mxu0
        %v721 = vadd.f32 %v403, %v720
        %v722 = vpop.f32.mrf.mxu0
        %v723 = vadd.f32 %v403, %v722
        %724 = vmatmul.bf16.gmra.mxu0 %v523
        %v725 = vpop.f32.mrf.mxu0
        %v726 = vadd.f32 %v403, %v725
        %v727 = vpop.f32.mrf.mxu0
        %v728 = vadd.f32 %v403, %v727
        %729 = vmatmul.bf16.gmra.mxu0 %v525
        %v730 = vpop.f32.mrf.mxu0
        %v731 = vadd.f32 %v403, %v730
        %v732 = vpop.f32.mrf.mxu0
        %v733 = vadd.f32 %v403, %v732
        %734 = vmatmul.bf16.gmra.mxu0 %v527
        %v735 = vpop.f32.mrf.mxu0
        %v736 = vadd.f32 %v403, %v735
        %v737 = vpop.f32.mrf.mxu0
        %v738 = vadd.f32 %v403, %v737
        %739 = vmatmul.bf16.gmra.mxu0 %v529
        %v740 = vpop.f32.mrf.mxu0
        %v741 = vadd.f32 %v403, %v740
        %v742 = vpop.f32.mrf.mxu0
        %v743 = vadd.f32 %v403, %v742
        %744 = vmatmul.bf16.gmra.mxu0 %v531
        %v745 = vpop.f32.mrf.mxu0
        %v746 = vadd.f32 %v403, %v745
        %v747 = vpop.f32.mrf.mxu0
        %v748 = vadd.f32 %v403, %v747
        %749 = vdwg.mxu0
        %750 = vmatpush.bf16.msra.mxu0 %v644
        %751 = vmatpush.bf16.msra.mxu0 %v643
        %752 = vmatpush.bf16.msra.mxu0 %v642
        %753 = vmatpush.bf16.msra.mxu0 %v641
        %754 = vmatpush.bf16.msra.mxu0 %v640
        %755 = vmatpush.bf16.msra.mxu0 %v639
        %756 = vmatpush.bf16.msra.mxu0 %v638
        %757 = vmatpush.bf16.msra.mxu0 %v637
        %758 = vmatmul.bf16.gmra.mxu0 %v502
        %v759 = vpop.f32.mrf.mxu0
        %v760 = vadd.f32 %v671, %v759
        %v761 = vpop.f32.mrf.mxu0
        %v762 = vadd.f32 %v673, %v761
        %763 = vmatmul.bf16.gmra.mxu0 %v504
        %v764 = vpop.f32.mrf.mxu0
        %v765 = vadd.f32 %v676, %v764
        %v766 = vpop.f32.mrf.mxu0
        %v767 = vadd.f32 %v678, %v766
        %768 = vmatmul.bf16.gmra.mxu0 %v506
        %v769 = vpop.f32.mrf.mxu0
        %v770 = vadd.f32 %v681, %v769
        %v771 = vpop.f32.mrf.mxu0
        %v772 = vadd.f32 %v683, %v771
        %773 = vmatmul.bf16.gmra.mxu0 %v508
        %v774 = vpop.f32.mrf.mxu0
        %v775 = vadd.f32 %v686, %v774
        %v776 = vpop.f32.mrf.mxu0
        %v777 = vadd.f32 %v688, %v776
        %778 = vmatmul.bf16.gmra.mxu0 %v510
        %v779 = vpop.f32.mrf.mxu0
        %v780 = vadd.f32 %v691, %v779
        %v781 = vpop.f32.mrf.mxu0
        %v782 = vadd.f32 %v693, %v781
        %783 = vmatmul.bf16.gmra.mxu0 %v512
        %v784 = vpop.f32.mrf.mxu0
        %v785 = vadd.f32 %v696, %v784
        %v786 = vpop.f32.mrf.mxu0
        %v787 = vadd.f32 %v698, %v786
        %788 = vmatmul.bf16.gmra.mxu0 %v514
        %v789 = vpop.f32.mrf.mxu0
        %v790 = vadd.f32 %v701, %v789
        %v791 = vpop.f32.mrf.mxu0
        %v792 = vadd.f32 %v703, %v791
        %793 = vmatmul.bf16.gmra.mxu0 %v516
        %v794 = vpop.f32.mrf.mxu0
        %v795 = vadd.f32 %v706, %v794
        %v796 = vpop.f32.mrf.mxu0
        %v797 = vadd.f32 %v708, %v796
        %798 = vmatmul.bf16.gmra.mxu0 %v518
        %v799 = vpop.f32.mrf.mxu0
        %v800 = vadd.f32 %v711, %v799
        %v801 = vpop.f32.mrf.mxu0
        %v802 = vadd.f32 %v713, %v801
        %803 = vmatmul.bf16.gmra.mxu0 %v520
        %v804 = vpop.f32.mrf.mxu0
        %v805 = vadd.f32 %v716, %v804
        %v806 = vpop.f32.mrf.mxu0
        %v807 = vadd.f32 %v718, %v806
        %808 = vmatmul.bf16.gmra.mxu0 %v522
        %v809 = vpop.f32.mrf.mxu0
        %v810 = vadd.f32 %v721, %v809
        %v811 = vpop.f32.mrf.mxu0
        %v812 = vadd.f32 %v723, %v811
        %813 = vmatmul.bf16.gmra.mxu0 %v524
        %v814 = vpop.f32.mrf.mxu0
        %v815 = vadd.f32 %v726, %v814
        %v816 = vpop.f32.mrf.mxu0
        %v817 = vadd.f32 %v728, %v816
        %818 = vmatmul.bf16.gmra.mxu0 %v526
        %v819 = vpop.f32.mrf.mxu0
        %v820 = vadd.f32 %v731, %v819
        %v821 = vpop.f32.mrf.mxu0
        %v822 = vadd.f32 %v733, %v821
        %823 = vmatmul.bf16.gmra.mxu0 %v528
        %v824 = vpop.f32.mrf.mxu0
        %v825 = vadd.f32 %v736, %v824
        %v826 = vpop.f32.mrf.mxu0
        %v827 = vadd.f32 %v738, %v826
        %828 = vmatmul.bf16.gmra.mxu0 %v530
        %v829 = vpop.f32.mrf.mxu0
        %v830 = vadd.f32 %v741, %v829
        %v831 = vpop.f32.mrf.mxu0
        %v832 = vadd.f32 %v743, %v831
        %833 = vmatmul.bf16.gmra.mxu0 %v532
        %v834 = vpop.f32.mrf.mxu0
        %v835 = vadd.f32 %v746, %v834
        %v836 = vpop.f32.mrf.mxu0
        %v837 = vadd.f32 %v748, %v836
        %838 = vdwg.mxu0
        %v839 = vxor.u32 %v760, 2147483648
        %v840 = vxor.u32 %v762, 2147483648
        %v841 = vxor.u32 %v765, 2147483648
        %v842 = vxor.u32 %v767, 2147483648
        %v843 = vxor.u32 %v770, 2147483648
        %v844 = vxor.u32 %v772, 2147483648
        %v845 = vxor.u32 %v775, 2147483648
        %v846 = vxor.u32 %v777, 2147483648
        %v847 = vxor.u32 %v780, 2147483648
        %v848 = vxor.u32 %v782, 2147483648
        %v849 = vxor.u32 %v785, 2147483648
        %v850 = vxor.u32 %v787, 2147483648
        %v851 = vxor.u32 %v790, 2147483648
        %v852 = vxor.u32 %v792, 2147483648
        %v853 = vxor.u32 %v795, 2147483648
        %v854 = vxor.u32 %v797, 2147483648
        %v855 = vxor.u32 %v800, 2147483648
        %v856 = vxor.u32 %v802, 2147483648
        %v857 = vxor.u32 %v805, 2147483648
        %v858 = vxor.u32 %v807, 2147483648
        %v859 = vxor.u32 %v810, 2147483648
        %v860 = vxor.u32 %v812, 2147483648
        %v861 = vxor.u32 %v815, 2147483648
        %v862 = vxor.u32 %v817, 2147483648
        %v863 = vxor.u32 %v820, 2147483648
        %v864 = vxor.u32 %v822, 2147483648
        %v865 = vxor.u32 %v825, 2147483648
        %v866 = vxor.u32 %v827, 2147483648
        %v867 = vxor.u32 %v830, 2147483648
        %v868 = vxor.u32 %v832, 2147483648
        %v869 = vxor.u32 %v835, 2147483648
        %v870 = vxor.u32 %v837, 2147483648
        %v871 = vmul.f32 %v839, 1.442695
        %v872 = vpow.pop %v871
        %v873 = vmul.f32 %v840, 1.442695
        %v874 = vpow.pop %v873
        %v875 = vmul.f32 %v841, 1.442695
        %v876 = vpow.pop %v875
        %v877 = vmul.f32 %v842, 1.442695
        %v878 = vpow.pop %v877
        %v879 = vmul.f32 %v843, 1.442695
        %v880 = vpow.pop %v879
        %v881 = vmul.f32 %v844, 1.442695
        %v882 = vpow.pop %v881
        %v883 = vmul.f32 %v845, 1.442695
        %v884 = vpow.pop %v883
        %v885 = vmul.f32 %v846, 1.442695
        %v886 = vpow.pop %v885
        %v887 = vmul.f32 %v847, 1.442695
        %v888 = vpow.pop %v887
        %v889 = vmul.f32 %v848, 1.442695
        %v890 = vpow.pop %v889
        %v891 = vmul.f32 %v849, 1.442695
        %v892 = vpow.pop %v891
        %v893 = vmul.f32 %v850, 1.442695
        %v894 = vpow.pop %v893
        %v895 = vmul.f32 %v851, 1.442695
        %v896 = vpow.pop %v895
        %v897 = vmul.f32 %v852, 1.442695
        %v898 = vpow.pop %v897
        %v899 = vmul.f32 %v853, 1.442695
        %v900 = vpow.pop %v899
        %v901 = vmul.f32 %v854, 1.442695
        %v902 = vpow.pop %v901
        %v903 = vmul.f32 %v855, 1.442695
        %v904 = vpow.pop %v903
        %v905 = vmul.f32 %v856, 1.442695
        %v906 = vpow.pop %v905
        %v907 = vmul.f32 %v857, 1.442695
        %v908 = vpow.pop %v907
        %v909 = vmul.f32 %v858, 1.442695
        %v910 = vpow.pop %v909
        %v911 = vmul.f32 %v859, 1.442695
        %v912 = vpow.pop %v911
        %v913 = vmul.f32 %v860, 1.442695
        %v914 = vpow.pop %v913
        %v915 = vmul.f32 %v861, 1.442695
        %v916 = vpow.pop %v915
        %v917 = vmul.f32 %v862, 1.442695
        %v918 = vpow.pop %v917
        %v919 = vmul.f32 %v863, 1.442695
        %v920 = vpow.pop %v919
        %v921 = vmul.f32 %v864, 1.442695
        %v922 = vpow.pop %v921
        %v923 = vmul.f32 %v865, 1.442695
        %v924 = vpow.pop %v923
        %v925 = vmul.f32 %v866, 1.442695
        %v926 = vpow.pop %v925
        %v927 = vmul.f32 %v867, 1.442695
        %v928 = vpow.pop %v927
        %v929 = vmul.f32 %v868, 1.442695
        %v930 = vpow.pop %v929
        %v931 = vmul.f32 %v869, 1.442695
        %v932 = vpow.pop %v931
        %v933 = vmul.f32 %v870, 1.442695
        %v934 = vpow.pop %v933
        %v935 = vadd.f32 %v872, 1.0
        %v936 = vadd.f32 %v874, 1.0
        %v937 = vadd.f32 %v876, 1.0
        %v938 = vadd.f32 %v878, 1.0
        %v939 = vadd.f32 %v880, 1.0
        %v940 = vadd.f32 %v882, 1.0
        %v941 = vadd.f32 %v884, 1.0
        %v942 = vadd.f32 %v886, 1.0
        %v943 = vadd.f32 %v888, 1.0
        %v944 = vadd.f32 %v890, 1.0
        %v945 = vadd.f32 %v892, 1.0
        %v946 = vadd.f32 %v894, 1.0
        %v947 = vadd.f32 %v896, 1.0
        %v948 = vadd.f32 %v898, 1.0
        %v949 = vadd.f32 %v900, 1.0
        %v950 = vadd.f32 %v902, 1.0
        %v951 = vadd.f32 %v904, 1.0
        %v952 = vadd.f32 %v906, 1.0
        %v953 = vadd.f32 %v908, 1.0
        %v954 = vadd.f32 %v910, 1.0
        %v955 = vadd.f32 %v912, 1.0
        %v956 = vadd.f32 %v914, 1.0
        %v957 = vadd.f32 %v916, 1.0
        %v958 = vadd.f32 %v918, 1.0
        %v959 = vadd.f32 %v920, 1.0
        %v960 = vadd.f32 %v922, 1.0
        %v961 = vadd.f32 %v924, 1.0
        %v962 = vadd.f32 %v926, 1.0
        %v963 = vadd.f32 %v928, 1.0
        %v964 = vadd.f32 %v930, 1.0
        %v965 = vadd.f32 %v932, 1.0
        %v966 = vadd.f32 %v934, 1.0
        %v967 = vrcp.pop %v935
        %v968 = vmul.f32 %v935, %v967
        %v969 = vsub.f32 1.0, %v968
        %v970 = vmul.f32 %v967, %v969
        %v971 = vadd.f32 %v967, %v970
        %vm972 = vweird.f32 %v935
        %vm973 = vweird.f32 %v967
        %vm974 = vmor %vm972, %vm973
        %v975 = vsel %vm974, %v967, %v971
        %v976 = vand.u32 2147483647, %v935
        %vm977 = vcmp.eq.f32.partialorder %v976, 8.507059e+37
        %v978 = vand.u32 %v935, 2147483648
        %v979 = vor.u32 1.1754944e-38, %v978
        %v980 = vsel %vm977, %v979, %v975
        %v981 = vmul.f32 1.0, %v980
        %v982 = vrcp.pop %v936
        %v983 = vmul.f32 %v936, %v982
        %v984 = vsub.f32 1.0, %v983
        %v985 = vmul.f32 %v982, %v984
        %v986 = vadd.f32 %v982, %v985
        %vm987 = vweird.f32 %v936
        %vm988 = vweird.f32 %v982
        %vm989 = vmor %vm987, %vm988
        %v990 = vsel %vm989, %v982, %v986
        %v991 = vand.u32 2147483647, %v936
        %vm992 = vcmp.eq.f32.partialorder %v991, 8.507059e+37
        %v993 = vand.u32 %v936, 2147483648
        %v994 = vor.u32 1.1754944e-38, %v993
        %v995 = vsel %vm992, %v994, %v990
        %v996 = vmul.f32 1.0, %v995
        %v997 = vrcp.pop %v937
        %v998 = vmul.f32 %v937, %v997
        %v999 = vsub.f32 1.0, %v998
        %v1000 = vmul.f32 %v997, %v999
        %v1001 = vadd.f32 %v997, %v1000
        %vm1002 = vweird.f32 %v937
        %vm1003 = vweird.f32 %v997
        %vm1004 = vmor %vm1002, %vm1003
        %v1005 = vsel %vm1004, %v997, %v1001
        %v1006 = vand.u32 2147483647, %v937
        %vm1007 = vcmp.eq.f32.partialorder %v1006, 8.507059e+37
        %v1008 = vand.u32 %v937, 2147483648
        %v1009 = vor.u32 1.1754944e-38, %v1008
        %v1010 = vsel %vm1007, %v1009, %v1005
        %v1011 = vmul.f32 1.0, %v1010
        %v1012 = vrcp.pop %v938
        %v1013 = vmul.f32 %v938, %v1012
        %v1014 = vsub.f32 1.0, %v1013
        %v1015 = vmul.f32 %v1012, %v1014
        %v1016 = vadd.f32 %v1012, %v1015
        %vm1017 = vweird.f32 %v938
        %vm1018 = vweird.f32 %v1012
        %vm1019 = vmor %vm1017, %vm1018
        %v1020 = vsel %vm1019, %v1012, %v1016
        %v1021 = vand.u32 2147483647, %v938
        %vm1022 = vcmp.eq.f32.partialorder %v1021, 8.507059e+37
        %v1023 = vand.u32 %v938, 2147483648
        %v1024 = vor.u32 1.1754944e-38, %v1023
        %v1025 = vsel %vm1022, %v1024, %v1020
        %v1026 = vmul.f32 1.0, %v1025
        %v1027 = vrcp.pop %v939
        %v1028 = vmul.f32 %v939, %v1027
        %v1029 = vsub.f32 1.0, %v1028
        %v1030 = vmul.f32 %v1027, %v1029
        %v1031 = vadd.f32 %v1027, %v1030
        %vm1032 = vweird.f32 %v939
        %vm1033 = vweird.f32 %v1027
        %vm1034 = vmor %vm1032, %vm1033
        %v1035 = vsel %vm1034, %v1027, %v1031
        %v1036 = vand.u32 2147483647, %v939
        %vm1037 = vcmp.eq.f32.partialorder %v1036, 8.507059e+37
        %v1038 = vand.u32 %v939, 2147483648
        %v1039 = vor.u32 1.1754944e-38, %v1038
        %v1040 = vsel %vm1037, %v1039, %v1035
        %v1041 = vmul.f32 1.0, %v1040
        %v1042 = vrcp.pop %v940
        %v1043 = vmul.f32 %v940, %v1042
        %v1044 = vsub.f32 1.0, %v1043
        %v1045 = vmul.f32 %v1042, %v1044
        %v1046 = vadd.f32 %v1042, %v1045
        %vm1047 = vweird.f32 %v940
        %vm1048 = vweird.f32 %v1042
        %vm1049 = vmor %vm1047, %vm1048
        %v1050 = vsel %vm1049, %v1042, %v1046
        %v1051 = vand.u32 2147483647, %v940
        %vm1052 = vcmp.eq.f32.partialorder %v1051, 8.507059e+37
        %v1053 = vand.u32 %v940, 2147483648
        %v1054 = vor.u32 1.1754944e-38, %v1053
        %v1055 = vsel %vm1052, %v1054, %v1050
        %v1056 = vmul.f32 1.0, %v1055
        %v1057 = vrcp.pop %v941
        %v1058 = vmul.f32 %v941, %v1057
        %v1059 = vsub.f32 1.0, %v1058
        %v1060 = vmul.f32 %v1057, %v1059
        %v1061 = vadd.f32 %v1057, %v1060
        %vm1062 = vweird.f32 %v941
        %vm1063 = vweird.f32 %v1057
        %vm1064 = vmor %vm1062, %vm1063
        %v1065 = vsel %vm1064, %v1057, %v1061
        %v1066 = vand.u32 2147483647, %v941
        %vm1067 = vcmp.eq.f32.partialorder %v1066, 8.507059e+37
        %v1068 = vand.u32 %v941, 2147483648
        %v1069 = vor.u32 1.1754944e-38, %v1068
        %v1070 = vsel %vm1067, %v1069, %v1065
        %v1071 = vmul.f32 1.0, %v1070
        %v1072 = vrcp.pop %v942
        %v1073 = vmul.f32 %v942, %v1072
        %v1074 = vsub.f32 1.0, %v1073
        %v1075 = vmul.f32 %v1072, %v1074
        %v1076 = vadd.f32 %v1072, %v1075
        %vm1077 = vweird.f32 %v942
        %vm1078 = vweird.f32 %v1072
        %vm1079 = vmor %vm1077, %vm1078
        %v1080 = vsel %vm1079, %v1072, %v1076
        %v1081 = vand.u32 2147483647, %v942
        %vm1082 = vcmp.eq.f32.partialorder %v1081, 8.507059e+37
        %v1083 = vand.u32 %v942, 2147483648
        %v1084 = vor.u32 1.1754944e-38, %v1083
        %v1085 = vsel %vm1082, %v1084, %v1080
        %v1086 = vmul.f32 1.0, %v1085
        %v1087 = vrcp.pop %v943
        %v1088 = vmul.f32 %v943, %v1087
        %v1089 = vsub.f32 1.0, %v1088
        %v1090 = vmul.f32 %v1087, %v1089
        %v1091 = vadd.f32 %v1087, %v1090
        %vm1092 = vweird.f32 %v943
        %vm1093 = vweird.f32 %v1087
        %vm1094 = vmor %vm1092, %vm1093
        %v1095 = vsel %vm1094, %v1087, %v1091
        %v1096 = vand.u32 2147483647, %v943
        %vm1097 = vcmp.eq.f32.partialorder %v1096, 8.507059e+37
        %v1098 = vand.u32 %v943, 2147483648
        %v1099 = vor.u32 1.1754944e-38, %v1098
        %v1100 = vsel %vm1097, %v1099, %v1095
        %v1101 = vmul.f32 1.0, %v1100
        %v1102 = vrcp.pop %v944
        %v1103 = vmul.f32 %v944, %v1102
        %v1104 = vsub.f32 1.0, %v1103
        %v1105 = vmul.f32 %v1102, %v1104
        %v1106 = vadd.f32 %v1102, %v1105
        %vm1107 = vweird.f32 %v944
        %vm1108 = vweird.f32 %v1102
        %vm1109 = vmor %vm1107, %vm1108
        %v1110 = vsel %vm1109, %v1102, %v1106
        %v1111 = vand.u32 2147483647, %v944
        %vm1112 = vcmp.eq.f32.partialorder %v1111, 8.507059e+37
        %v1113 = vand.u32 %v944, 2147483648
        %v1114 = vor.u32 1.1754944e-38, %v1113
        %v1115 = vsel %vm1112, %v1114, %v1110
        %v1116 = vmul.f32 1.0, %v1115
        %v1117 = vrcp.pop %v945
        %v1118 = vmul.f32 %v945, %v1117
        %v1119 = vsub.f32 1.0, %v1118
        %v1120 = vmul.f32 %v1117, %v1119
        %v1121 = vadd.f32 %v1117, %v1120
        %vm1122 = vweird.f32 %v945
        %vm1123 = vweird.f32 %v1117
        %vm1124 = vmor %vm1122, %vm1123
        %v1125 = vsel %vm1124, %v1117, %v1121
        %v1126 = vand.u32 2147483647, %v945
        %vm1127 = vcmp.eq.f32.partialorder %v1126, 8.507059e+37
        %v1128 = vand.u32 %v945, 2147483648
        %v1129 = vor.u32 1.1754944e-38, %v1128
        %v1130 = vsel %vm1127, %v1129, %v1125
        %v1131 = vmul.f32 1.0, %v1130
        %v1132 = vrcp.pop %v946
        %v1133 = vmul.f32 %v946, %v1132
        %v1134 = vsub.f32 1.0, %v1133
        %v1135 = vmul.f32 %v1132, %v1134
        %v1136 = vadd.f32 %v1132, %v1135
        %vm1137 = vweird.f32 %v946
        %vm1138 = vweird.f32 %v1132
        %vm1139 = vmor %vm1137, %vm1138
        %v1140 = vsel %vm1139, %v1132, %v1136
        %v1141 = vand.u32 2147483647, %v946
        %vm1142 = vcmp.eq.f32.partialorder %v1141, 8.507059e+37
        %v1143 = vand.u32 %v946, 2147483648
        %v1144 = vor.u32 1.1754944e-38, %v1143
        %v1145 = vsel %vm1142, %v1144, %v1140
        %v1146 = vmul.f32 1.0, %v1145
        %v1147 = vrcp.pop %v947
        %v1148 = vmul.f32 %v947, %v1147
        %v1149 = vsub.f32 1.0, %v1148
        %v1150 = vmul.f32 %v1147, %v1149
        %v1151 = vadd.f32 %v1147, %v1150
        %vm1152 = vweird.f32 %v947
        %vm1153 = vweird.f32 %v1147
        %vm1154 = vmor %vm1152, %vm1153
        %v1155 = vsel %vm1154, %v1147, %v1151
        %v1156 = vand.u32 2147483647, %v947
        %vm1157 = vcmp.eq.f32.partialorder %v1156, 8.507059e+37
        %v1158 = vand.u32 %v947, 2147483648
        %v1159 = vor.u32 1.1754944e-38, %v1158
        %v1160 = vsel %vm1157, %v1159, %v1155
        %v1161 = vmul.f32 1.0, %v1160
        %v1162 = vrcp.pop %v948
        %v1163 = vmul.f32 %v948, %v1162
        %v1164 = vsub.f32 1.0, %v1163
        %v1165 = vmul.f32 %v1162, %v1164
        %v1166 = vadd.f32 %v1162, %v1165
        %vm1167 = vweird.f32 %v948
        %vm1168 = vweird.f32 %v1162
        %vm1169 = vmor %vm1167, %vm1168
        %v1170 = vsel %vm1169, %v1162, %v1166
        %v1171 = vand.u32 2147483647, %v948
        %vm1172 = vcmp.eq.f32.partialorder %v1171, 8.507059e+37
        %v1173 = vand.u32 %v948, 2147483648
        %v1174 = vor.u32 1.1754944e-38, %v1173
        %v1175 = vsel %vm1172, %v1174, %v1170
        %v1176 = vmul.f32 1.0, %v1175
        %v1177 = vrcp.pop %v949
        %v1178 = vmul.f32 %v949, %v1177
        %v1179 = vsub.f32 1.0, %v1178
        %v1180 = vmul.f32 %v1177, %v1179
        %v1181 = vadd.f32 %v1177, %v1180
        %vm1182 = vweird.f32 %v949
        %vm1183 = vweird.f32 %v1177
        %vm1184 = vmor %vm1182, %vm1183
        %v1185 = vsel %vm1184, %v1177, %v1181
        %v1186 = vand.u32 2147483647, %v949
        %vm1187 = vcmp.eq.f32.partialorder %v1186, 8.507059e+37
        %v1188 = vand.u32 %v949, 2147483648
        %v1189 = vor.u32 1.1754944e-38, %v1188
        %v1190 = vsel %vm1187, %v1189, %v1185
        %v1191 = vmul.f32 1.0, %v1190
        %v1192 = vrcp.pop %v950
        %v1193 = vmul.f32 %v950, %v1192
        %v1194 = vsub.f32 1.0, %v1193
        %v1195 = vmul.f32 %v1192, %v1194
        %v1196 = vadd.f32 %v1192, %v1195
        %vm1197 = vweird.f32 %v950
        %vm1198 = vweird.f32 %v1192
        %vm1199 = vmor %vm1197, %vm1198
        %v1200 = vsel %vm1199, %v1192, %v1196
        %v1201 = vand.u32 2147483647, %v950
        %vm1202 = vcmp.eq.f32.partialorder %v1201, 8.507059e+37
        %v1203 = vand.u32 %v950, 2147483648
        %v1204 = vor.u32 1.1754944e-38, %v1203
        %v1205 = vsel %vm1202, %v1204, %v1200
        %v1206 = vmul.f32 1.0, %v1205
        %v1207 = vrcp.pop %v951
        %v1208 = vmul.f32 %v951, %v1207
        %v1209 = vsub.f32 1.0, %v1208
        %v1210 = vmul.f32 %v1207, %v1209
        %v1211 = vadd.f32 %v1207, %v1210
        %vm1212 = vweird.f32 %v951
        %vm1213 = vweird.f32 %v1207
        %vm1214 = vmor %vm1212, %vm1213
        %v1215 = vsel %vm1214, %v1207, %v1211
        %v1216 = vand.u32 2147483647, %v951
        %vm1217 = vcmp.eq.f32.partialorder %v1216, 8.507059e+37
        %v1218 = vand.u32 %v951, 2147483648
        %v1219 = vor.u32 1.1754944e-38, %v1218
        %v1220 = vsel %vm1217, %v1219, %v1215
        %v1221 = vmul.f32 1.0, %v1220
        %v1222 = vrcp.pop %v952
        %v1223 = vmul.f32 %v952, %v1222
        %v1224 = vsub.f32 1.0, %v1223
        %v1225 = vmul.f32 %v1222, %v1224
        %v1226 = vadd.f32 %v1222, %v1225
        %vm1227 = vweird.f32 %v952
        %vm1228 = vweird.f32 %v1222
        %vm1229 = vmor %vm1227, %vm1228
        %v1230 = vsel %vm1229, %v1222, %v1226
        %v1231 = vand.u32 2147483647, %v952
        %vm1232 = vcmp.eq.f32.partialorder %v1231, 8.507059e+37
        %v1233 = vand.u32 %v952, 2147483648
        %v1234 = vor.u32 1.1754944e-38, %v1233
        %v1235 = vsel %vm1232, %v1234, %v1230
        %v1236 = vmul.f32 1.0, %v1235
        %v1237 = vrcp.pop %v953
        %v1238 = vmul.f32 %v953, %v1237
        %v1239 = vsub.f32 1.0, %v1238
        %v1240 = vmul.f32 %v1237, %v1239
        %v1241 = vadd.f32 %v1237, %v1240
        %vm1242 = vweird.f32 %v953
        %vm1243 = vweird.f32 %v1237
        %vm1244 = vmor %vm1242, %vm1243
        %v1245 = vsel %vm1244, %v1237, %v1241
        %v1246 = vand.u32 2147483647, %v953
        %vm1247 = vcmp.eq.f32.partialorder %v1246, 8.507059e+37
        %v1248 = vand.u32 %v953, 2147483648
        %v1249 = vor.u32 1.1754944e-38, %v1248
        %v1250 = vsel %vm1247, %v1249, %v1245
        %v1251 = vmul.f32 1.0, %v1250
        %v1252 = vrcp.pop %v954
        %v1253 = vmul.f32 %v954, %v1252
        %v1254 = vsub.f32 1.0, %v1253
        %v1255 = vmul.f32 %v1252, %v1254
        %v1256 = vadd.f32 %v1252, %v1255
        %vm1257 = vweird.f32 %v954
        %vm1258 = vweird.f32 %v1252
        %vm1259 = vmor %vm1257, %vm1258
        %v1260 = vsel %vm1259, %v1252, %v1256
        %v1261 = vand.u32 2147483647, %v954
        %vm1262 = vcmp.eq.f32.partialorder %v1261, 8.507059e+37
        %v1263 = vand.u32 %v954, 2147483648
        %v1264 = vor.u32 1.1754944e-38, %v1263
        %v1265 = vsel %vm1262, %v1264, %v1260
        %v1266 = vmul.f32 1.0, %v1265
        %v1267 = vrcp.pop %v955
        %v1268 = vmul.f32 %v955, %v1267
        %v1269 = vsub.f32 1.0, %v1268
        %v1270 = vmul.f32 %v1267, %v1269
        %v1271 = vadd.f32 %v1267, %v1270
        %vm1272 = vweird.f32 %v955
        %vm1273 = vweird.f32 %v1267
        %vm1274 = vmor %vm1272, %vm1273
        %v1275 = vsel %vm1274, %v1267, %v1271
        %v1276 = vand.u32 2147483647, %v955
        %vm1277 = vcmp.eq.f32.partialorder %v1276, 8.507059e+37
        %v1278 = vand.u32 %v955, 2147483648
        %v1279 = vor.u32 1.1754944e-38, %v1278
        %v1280 = vsel %vm1277, %v1279, %v1275
        %v1281 = vmul.f32 1.0, %v1280
        %v1282 = vrcp.pop %v956
        %v1283 = vmul.f32 %v956, %v1282
        %v1284 = vsub.f32 1.0, %v1283
        %v1285 = vmul.f32 %v1282, %v1284
        %v1286 = vadd.f32 %v1282, %v1285
        %vm1287 = vweird.f32 %v956
        %vm1288 = vweird.f32 %v1282
        %vm1289 = vmor %vm1287, %vm1288
        %v1290 = vsel %vm1289, %v1282, %v1286
        %v1291 = vand.u32 2147483647, %v956
        %vm1292 = vcmp.eq.f32.partialorder %v1291, 8.507059e+37
        %v1293 = vand.u32 %v956, 2147483648
        %v1294 = vor.u32 1.1754944e-38, %v1293
        %v1295 = vsel %vm1292, %v1294, %v1290
        %v1296 = vmul.f32 1.0, %v1295
        %v1297 = vrcp.pop %v957
        %v1298 = vmul.f32 %v957, %v1297
        %v1299 = vsub.f32 1.0, %v1298
        %v1300 = vmul.f32 %v1297, %v1299
        %v1301 = vadd.f32 %v1297, %v1300
        %vm1302 = vweird.f32 %v957
        %vm1303 = vweird.f32 %v1297
        %vm1304 = vmor %vm1302, %vm1303
        %v1305 = vsel %vm1304, %v1297, %v1301
        %v1306 = vand.u32 2147483647, %v957
        %vm1307 = vcmp.eq.f32.partialorder %v1306, 8.507059e+37
        %v1308 = vand.u32 %v957, 2147483648
        %v1309 = vor.u32 1.1754944e-38, %v1308
        %v1310 = vsel %vm1307, %v1309, %v1305
        %v1311 = vmul.f32 1.0, %v1310
        %v1312 = vrcp.pop %v958
        %v1313 = vmul.f32 %v958, %v1312
        %v1314 = vsub.f32 1.0, %v1313
        %v1315 = vmul.f32 %v1312, %v1314
        %v1316 = vadd.f32 %v1312, %v1315
        %vm1317 = vweird.f32 %v958
        %vm1318 = vweird.f32 %v1312
        %vm1319 = vmor %vm1317, %vm1318
        %v1320 = vsel %vm1319, %v1312, %v1316
        %v1321 = vand.u32 2147483647, %v958
        %vm1322 = vcmp.eq.f32.partialorder %v1321, 8.507059e+37
        %v1323 = vand.u32 %v958, 2147483648
        %v1324 = vor.u32 1.1754944e-38, %v1323
        %v1325 = vsel %vm1322, %v1324, %v1320
        %v1326 = vmul.f32 1.0, %v1325
        %v1327 = vrcp.pop %v959
        %v1328 = vmul.f32 %v959, %v1327
        %v1329 = vsub.f32 1.0, %v1328
        %v1330 = vmul.f32 %v1327, %v1329
        %v1331 = vadd.f32 %v1327, %v1330
        %vm1332 = vweird.f32 %v959
        %vm1333 = vweird.f32 %v1327
        %vm1334 = vmor %vm1332, %vm1333
        %v1335 = vsel %vm1334, %v1327, %v1331
        %v1336 = vand.u32 2147483647, %v959
        %vm1337 = vcmp.eq.f32.partialorder %v1336, 8.507059e+37
        %v1338 = vand.u32 %v959, 2147483648
        %v1339 = vor.u32 1.1754944e-38, %v1338
        %v1340 = vsel %vm1337, %v1339, %v1335
        %v1341 = vmul.f32 1.0, %v1340
        %v1342 = vrcp.pop %v960
        %v1343 = vmul.f32 %v960, %v1342
        %v1344 = vsub.f32 1.0, %v1343
        %v1345 = vmul.f32 %v1342, %v1344
        %v1346 = vadd.f32 %v1342, %v1345
        %vm1347 = vweird.f32 %v960
        %vm1348 = vweird.f32 %v1342
        %vm1349 = vmor %vm1347, %vm1348
        %v1350 = vsel %vm1349, %v1342, %v1346
        %v1351 = vand.u32 2147483647, %v960
        %vm1352 = vcmp.eq.f32.partialorder %v1351, 8.507059e+37
        %v1353 = vand.u32 %v960, 2147483648
        %v1354 = vor.u32 1.1754944e-38, %v1353
        %v1355 = vsel %vm1352, %v1354, %v1350
        %v1356 = vmul.f32 1.0, %v1355
        %v1357 = vrcp.pop %v961
        %v1358 = vmul.f32 %v961, %v1357
        %v1359 = vsub.f32 1.0, %v1358
        %v1360 = vmul.f32 %v1357, %v1359
        %v1361 = vadd.f32 %v1357, %v1360
        %vm1362 = vweird.f32 %v961
        %vm1363 = vweird.f32 %v1357
        %vm1364 = vmor %vm1362, %vm1363
        %v1365 = vsel %vm1364, %v1357, %v1361
        %v1366 = vand.u32 2147483647, %v961
        %vm1367 = vcmp.eq.f32.partialorder %v1366, 8.507059e+37
        %v1368 = vand.u32 %v961, 2147483648
        %v1369 = vor.u32 1.1754944e-38, %v1368
        %v1370 = vsel %vm1367, %v1369, %v1365
        %v1371 = vmul.f32 1.0, %v1370
        %v1372 = vrcp.pop %v962
        %v1373 = vmul.f32 %v962, %v1372
        %v1374 = vsub.f32 1.0, %v1373
        %v1375 = vmul.f32 %v1372, %v1374
        %v1376 = vadd.f32 %v1372, %v1375
        %vm1377 = vweird.f32 %v962
        %vm1378 = vweird.f32 %v1372
        %vm1379 = vmor %vm1377, %vm1378
        %v1380 = vsel %vm1379, %v1372, %v1376
        %v1381 = vand.u32 2147483647, %v962
        %vm1382 = vcmp.eq.f32.partialorder %v1381, 8.507059e+37
        %v1383 = vand.u32 %v962, 2147483648
        %v1384 = vor.u32 1.1754944e-38, %v1383
        %v1385 = vsel %vm1382, %v1384, %v1380
        %v1386 = vmul.f32 1.0, %v1385
        %v1387 = vrcp.pop %v963
        %v1388 = vmul.f32 %v963, %v1387
        %v1389 = vsub.f32 1.0, %v1388
        %v1390 = vmul.f32 %v1387, %v1389
        %v1391 = vadd.f32 %v1387, %v1390
        %vm1392 = vweird.f32 %v963
        %vm1393 = vweird.f32 %v1387
        %vm1394 = vmor %vm1392, %vm1393
        %v1395 = vsel %vm1394, %v1387, %v1391
        %v1396 = vand.u32 2147483647, %v963
        %vm1397 = vcmp.eq.f32.partialorder %v1396, 8.507059e+37
        %v1398 = vand.u32 %v963, 2147483648
        %v1399 = vor.u32 1.1754944e-38, %v1398
        %v1400 = vsel %vm1397, %v1399, %v1395
        %v1401 = vmul.f32 1.0, %v1400
        %v1402 = vrcp.pop %v964
        %v1403 = vmul.f32 %v964, %v1402
        %v1404 = vsub.f32 1.0, %v1403
        %v1405 = vmul.f32 %v1402, %v1404
        %v1406 = vadd.f32 %v1402, %v1405
        %vm1407 = vweird.f32 %v964
        %vm1408 = vweird.f32 %v1402
        %vm1409 = vmor %vm1407, %vm1408
        %v1410 = vsel %vm1409, %v1402, %v1406
        %v1411 = vand.u32 2147483647, %v964
        %vm1412 = vcmp.eq.f32.partialorder %v1411, 8.507059e+37
        %v1413 = vand.u32 %v964, 2147483648
        %v1414 = vor.u32 1.1754944e-38, %v1413
        %v1415 = vsel %vm1412, %v1414, %v1410
        %v1416 = vmul.f32 1.0, %v1415
        %v1417 = vrcp.pop %v965
        %v1418 = vmul.f32 %v965, %v1417
        %v1419 = vsub.f32 1.0, %v1418
        %v1420 = vmul.f32 %v1417, %v1419
        %v1421 = vadd.f32 %v1417, %v1420
        %vm1422 = vweird.f32 %v965
        %vm1423 = vweird.f32 %v1417
        %vm1424 = vmor %vm1422, %vm1423
        %v1425 = vsel %vm1424, %v1417, %v1421
        %v1426 = vand.u32 2147483647, %v965
        %vm1427 = vcmp.eq.f32.partialorder %v1426, 8.507059e+37
        %v1428 = vand.u32 %v965, 2147483648
        %v1429 = vor.u32 1.1754944e-38, %v1428
        %v1430 = vsel %vm1427, %v1429, %v1425
        %v1431 = vmul.f32 1.0, %v1430
        %v1432 = vrcp.pop %v966
        %v1433 = vmul.f32 %v966, %v1432
        %v1434 = vsub.f32 1.0, %v1433
        %v1435 = vmul.f32 %v1432, %v1434
        %v1436 = vadd.f32 %v1432, %v1435
        %vm1437 = vweird.f32 %v966
        %vm1438 = vweird.f32 %v1432
        %vm1439 = vmor %vm1437, %vm1438
        %v1440 = vsel %vm1439, %v1432, %v1436
        %v1441 = vand.u32 2147483647, %v966
        %vm1442 = vcmp.eq.f32.partialorder %v1441, 8.507059e+37
        %v1443 = vand.u32 %v966, 2147483648
        %v1444 = vor.u32 1.1754944e-38, %v1443
        %v1445 = vsel %vm1442, %v1444, %v1440
        %v1446 = vmul.f32 1.0, %v1445
        %v1447 = vpack.c.bf16 %v996, %v981
        %v1448 = vpack.c.bf16 %v1026, %v1011
        %v1449 = vpack.c.bf16 %v1056, %v1041
        %v1450 = vpack.c.bf16 %v1086, %v1071
        %v1451 = vpack.c.bf16 %v1116, %v1101
        %v1452 = vpack.c.bf16 %v1146, %v1131
        %v1453 = vpack.c.bf16 %v1176, %v1161
        %v1454 = vpack.c.bf16 %v1206, %v1191
        %v1455 = vpack.c.bf16 %v1236, %v1221
        %v1456 = vpack.c.bf16 %v1266, %v1251
        %v1457 = vpack.c.bf16 %v1296, %v1281
        %v1458 = vpack.c.bf16 %v1326, %v1311
        %v1459 = vpack.c.bf16 %v1356, %v1341
        %v1460 = vpack.c.bf16 %v1386, %v1371
        %v1461 = vpack.c.bf16 %v1416, %v1401
        %v1462 = vpack.c.bf16 %v1446, %v1431
        %v1463 = vld [vmem:[%s3] sm:$0xf]
        %v1464 = vld [vmem:[%s3 + $0x4] sm:$0xf]
        %v1465 = vld [vmem:[%s3 + $0x8] sm:$0xf]
        %v1466 = vld [vmem:[%s3 + $0xc] sm:$0xf]
        %v1467 = vld [vmem:[%s3 + $0x10] sm:$0xf]
        %v1468 = vld [vmem:[%s3 + $0x14] sm:$0xf]
        %v1469 = vld [vmem:[%s3 + $0x18] sm:$0xf]
        %v1470 = vld [vmem:[%s3 + $0x1c] sm:$0xf]
        %v1471 = vld [vmem:[%s3 + $0x20] sm:$0xf]
        %v1472 = vld [vmem:[%s3 + $0x24] sm:$0xf]
        %v1473 = vld [vmem:[%s3 + $0x28] sm:$0xf]
        %v1474 = vld [vmem:[%s3 + $0x2c] sm:$0xf]
        %v1475 = vld [vmem:[%s3 + $0x30] sm:$0xf]
        %v1476 = vld [vmem:[%s3 + $0x34] sm:$0xf]
        %v1477 = vld [vmem:[%s3 + $0x38] sm:$0xf]
        %v1478 = vld [vmem:[%s3 + $0x3c] sm:$0xf]
        %v1479 = vld [vmem:[%s4] sm:$0x1]
        %v1481 = vperm.slane %v1479, 0
        %v1499 = vunpack.c.l.b16 %v1463
        %v1500 = vunpack.c.l.b16 %v1464
        %v1501 = vunpack.c.l.b16 %v1465
        %v1502 = vunpack.c.l.b16 %v1466
        %v1503 = vunpack.c.l.b16 %v1467
        %v1504 = vunpack.c.l.b16 %v1468
        %v1505 = vunpack.c.l.b16 %v1469
        %v1506 = vunpack.c.l.b16 %v1470
        %v1507 = vunpack.c.l.b16 %v1471
        %v1508 = vunpack.c.l.b16 %v1472
        %v1509 = vunpack.c.l.b16 %v1473
        %v1510 = vunpack.c.l.b16 %v1474
        %v1511 = vunpack.c.l.b16 %v1475
        %v1512 = vunpack.c.l.b16 %v1476
        %v1513 = vunpack.c.l.b16 %v1477
        %v1514 = vunpack.c.l.b16 %v1478
        %v1515 = vpack.c.b16 %v1500, %v1499
        %v1516 = vpack.c.b16 %v1502, %v1501
        %v1517 = vpack.c.b16 %v1504, %v1503
        %v1518 = vpack.c.b16 %v1506, %v1505
        %v1519 = vpack.c.b16 %v1508, %v1507
        %v1520 = vpack.c.b16 %v1510, %v1509
        %v1521 = vpack.c.b16 %v1512, %v1511
        %v1522 = vpack.c.b16 %v1514, %v1513
        %1531 = vmatpush.bf16.msra.mxu0 %v1522
        %1532 = vmatpush.bf16.msra.mxu0 %v1521
        %1533 = vmatpush.bf16.msra.mxu0 %v1520
        %1534 = vmatpush.bf16.msra.mxu0 %v1519
        %1535 = vmatpush.bf16.msra.mxu0 %v1518
        %1536 = vmatpush.bf16.msra.mxu0 %v1517
        %1537 = vmatpush.bf16.msra.mxu0 %v1516
        %1538 = vmatpush.bf16.msra.mxu0 %v1515
        %1539 = vmatmul.bf16.gmra.mxu0 %v1447
        %v1540 = vpop.f32.mrf.mxu0
        %v1541 = vadd.f32 %v1481, %v1540
        %v1542 = vpop.f32.mrf.mxu0
        %v1543 = vadd.f32 %v1481, %v1542
        %1544 = vmatmul.bf16.gmra.mxu0 %v1448
        %v1545 = vpop.f32.mrf.mxu0
        %v1546 = vadd.f32 %v1481, %v1545
        %v1547 = vpop.f32.mrf.mxu0
        %v1548 = vadd.f32 %v1481, %v1547
        %1549 = vmatmul.bf16.gmra.mxu0 %v1449
        %v1550 = vpop.f32.mrf.mxu0
        %v1551 = vadd.f32 %v1481, %v1550
        %v1552 = vpop.f32.mrf.mxu0
        %v1553 = vadd.f32 %v1481, %v1552
        %1554 = vmatmul.bf16.gmra.mxu0 %v1450
        %v1555 = vpop.f32.mrf.mxu0
        %v1556 = vadd.f32 %v1481, %v1555
        %v1557 = vpop.f32.mrf.mxu0
        %v1558 = vadd.f32 %v1481, %v1557
        %1559 = vmatmul.bf16.gmra.mxu0 %v1451
        %v1560 = vpop.f32.mrf.mxu0
        %v1561 = vadd.f32 %v1481, %v1560
        %v1562 = vpop.f32.mrf.mxu0
        %v1563 = vadd.f32 %v1481, %v1562
        %1564 = vmatmul.bf16.gmra.mxu0 %v1452
        %v1565 = vpop.f32.mrf.mxu0
        %v1566 = vadd.f32 %v1481, %v1565
        %v1567 = vpop.f32.mrf.mxu0
        %v1568 = vadd.f32 %v1481, %v1567
        %1569 = vmatmul.bf16.gmra.mxu0 %v1453
        %v1570 = vpop.f32.mrf.mxu0
        %v1571 = vadd.f32 %v1481, %v1570
        %v1572 = vpop.f32.mrf.mxu0
        %v1573 = vadd.f32 %v1481, %v1572
        %1574 = vmatmul.bf16.gmra.mxu0 %v1454
        %v1575 = vpop.f32.mrf.mxu0
        %v1576 = vadd.f32 %v1481, %v1575
        %v1577 = vpop.f32.mrf.mxu0
        %v1578 = vadd.f32 %v1481, %v1577
        %1579 = vmatmul.bf16.gmra.mxu0 %v1455
        %v1580 = vpop.f32.mrf.mxu0
        %v1581 = vadd.f32 %v1481, %v1580
        %v1582 = vpop.f32.mrf.mxu0
        %v1583 = vadd.f32 %v1481, %v1582
        %1584 = vmatmul.bf16.gmra.mxu0 %v1456
        %v1585 = vpop.f32.mrf.mxu0
        %v1586 = vadd.f32 %v1481, %v1585
        %v1587 = vpop.f32.mrf.mxu0
        %v1588 = vadd.f32 %v1481, %v1587
        %1589 = vmatmul.bf16.gmra.mxu0 %v1457
        %v1590 = vpop.f32.mrf.mxu0
        %v1591 = vadd.f32 %v1481, %v1590
        %v1592 = vpop.f32.mrf.mxu0
        %v1593 = vadd.f32 %v1481, %v1592
        %1594 = vmatmul.bf16.gmra.mxu0 %v1458
        %v1595 = vpop.f32.mrf.mxu0
        %v1596 = vadd.f32 %v1481, %v1595
        %v1597 = vpop.f32.mrf.mxu0
        %v1598 = vadd.f32 %v1481, %v1597
        %1599 = vmatmul.bf16.gmra.mxu0 %v1459
        %v1600 = vpop.f32.mrf.mxu0
        %v1601 = vadd.f32 %v1481, %v1600
        %v1602 = vpop.f32.mrf.mxu0
        %v1603 = vadd.f32 %v1481, %v1602
        %1604 = vmatmul.bf16.gmra.mxu0 %v1460
        %v1605 = vpop.f32.mrf.mxu0
        %v1606 = vadd.f32 %v1481, %v1605
        %v1607 = vpop.f32.mrf.mxu0
        %v1608 = vadd.f32 %v1481, %v1607
        %1609 = vmatmul.bf16.gmra.mxu0 %v1461
        %v1610 = vpop.f32.mrf.mxu0
        %v1611 = vadd.f32 %v1481, %v1610
        %v1612 = vpop.f32.mrf.mxu0
        %v1613 = vadd.f32 %v1481, %v1612
        %1614 = vmatmul.bf16.gmra.mxu0 %v1462
        %v1615 = vpop.f32.mrf.mxu0
        %v1616 = vadd.f32 %v1481, %v1615
        %v1617 = vpop.f32.mrf.mxu0
        %v1618 = vadd.f32 %v1481, %v1617
        %1619 = vdwg.mxu0
        %v1620 = vxor.u32 %v1541, 2147483648
        %v1621 = vxor.u32 %v1543, 2147483648
        %v1622 = vxor.u32 %v1546, 2147483648
        %v1623 = vxor.u32 %v1548, 2147483648
        %v1624 = vxor.u32 %v1551, 2147483648
        %v1625 = vxor.u32 %v1553, 2147483648
        %v1626 = vxor.u32 %v1556, 2147483648
        %v1627 = vxor.u32 %v1558, 2147483648
        %v1628 = vxor.u32 %v1561, 2147483648
        %v1629 = vxor.u32 %v1563, 2147483648
        %v1630 = vxor.u32 %v1566, 2147483648
        %v1631 = vxor.u32 %v1568, 2147483648
        %v1632 = vxor.u32 %v1571, 2147483648
        %v1633 = vxor.u32 %v1573, 2147483648
        %v1634 = vxor.u32 %v1576, 2147483648
        %v1635 = vxor.u32 %v1578, 2147483648
        %v1636 = vxor.u32 %v1581, 2147483648
        %v1637 = vxor.u32 %v1583, 2147483648
        %v1638 = vxor.u32 %v1586, 2147483648
        %v1639 = vxor.u32 %v1588, 2147483648
        %v1640 = vxor.u32 %v1591, 2147483648
        %v1641 = vxor.u32 %v1593, 2147483648
        %v1642 = vxor.u32 %v1596, 2147483648
        %v1643 = vxor.u32 %v1598, 2147483648
        %v1644 = vxor.u32 %v1601, 2147483648
        %v1645 = vxor.u32 %v1603, 2147483648
        %v1646 = vxor.u32 %v1606, 2147483648
        %v1647 = vxor.u32 %v1608, 2147483648
        %v1648 = vxor.u32 %v1611, 2147483648
        %v1649 = vxor.u32 %v1613, 2147483648
        %v1650 = vxor.u32 %v1616, 2147483648
        %v1651 = vxor.u32 %v1618, 2147483648
        %v1652 = vmul.f32 %v1620, 1.442695
        %v1653 = vpow.pop %v1652
        %v1654 = vmul.f32 %v1621, 1.442695
        %v1655 = vpow.pop %v1654
        %v1656 = vmul.f32 %v1622, 1.442695
        %v1657 = vpow.pop %v1656
        %v1658 = vmul.f32 %v1623, 1.442695
        %v1659 = vpow.pop %v1658
        %v1660 = vmul.f32 %v1624, 1.442695
        %v1661 = vpow.pop %v1660
        %v1662 = vmul.f32 %v1625, 1.442695
        %v1663 = vpow.pop %v1662
        %v1664 = vmul.f32 %v1626, 1.442695
        %v1665 = vpow.pop %v1664
        %v1666 = vmul.f32 %v1627, 1.442695
        %v1667 = vpow.pop %v1666
        %v1668 = vmul.f32 %v1628, 1.442695
        %v1669 = vpow.pop %v1668
        %v1670 = vmul.f32 %v1629, 1.442695
        %v1671 = vpow.pop %v1670
        %v1672 = vmul.f32 %v1630, 1.442695
        %v1673 = vpow.pop %v1672
        %v1674 = vmul.f32 %v1631, 1.442695
        %v1675 = vpow.pop %v1674
        %v1676 = vmul.f32 %v1632, 1.442695
        %v1677 = vpow.pop %v1676
        %v1678 = vmul.f32 %v1633, 1.442695
        %v1679 = vpow.pop %v1678
        %v1680 = vmul.f32 %v1634, 1.442695
        %v1681 = vpow.pop %v1680
        %v1682 = vmul.f32 %v1635, 1.442695
        %v1683 = vpow.pop %v1682
        %v1684 = vmul.f32 %v1636, 1.442695
        %v1685 = vpow.pop %v1684
        %v1686 = vmul.f32 %v1637, 1.442695
        %v1687 = vpow.pop %v1686
        %v1688 = vmul.f32 %v1638, 1.442695
        %v1689 = vpow.pop %v1688
        %v1690 = vmul.f32 %v1639, 1.442695
        %v1691 = vpow.pop %v1690
        %v1692 = vmul.f32 %v1640, 1.442695
        %v1693 = vpow.pop %v1692
        %v1694 = vmul.f32 %v1641, 1.442695
        %v1695 = vpow.pop %v1694
        %v1696 = vmul.f32 %v1642, 1.442695
        %v1697 = vpow.pop %v1696
        %v1698 = vmul.f32 %v1643, 1.442695
        %v1699 = vpow.pop %v1698
        %v1700 = vmul.f32 %v1644, 1.442695
        %v1701 = vpow.pop %v1700
        %v1702 = vmul.f32 %v1645, 1.442695
        %v1703 = vpow.pop %v1702
        %v1704 = vmul.f32 %v1646, 1.442695
        %v1705 = vpow.pop %v1704
        %v1706 = vmul.f32 %v1647, 1.442695
        %v1707 = vpow.pop %v1706
        %v1708 = vmul.f32 %v1648, 1.442695
        %v1709 = vpow.pop %v1708
        %v1710 = vmul.f32 %v1649, 1.442695
        %v1711 = vpow.pop %v1710
        %v1712 = vmul.f32 %v1650, 1.442695
        %v1713 = vpow.pop %v1712
        %v1714 = vmul.f32 %v1651, 1.442695
        %v1715 = vpow.pop %v1714
        %v1716 = vadd.f32 %v1653, 1.0
        %v1717 = vadd.f32 %v1655, 1.0
        %v1718 = vadd.f32 %v1657, 1.0
        %v1719 = vadd.f32 %v1659, 1.0
        %v1720 = vadd.f32 %v1661, 1.0
        %v1721 = vadd.f32 %v1663, 1.0
        %v1722 = vadd.f32 %v1665, 1.0
        %v1723 = vadd.f32 %v1667, 1.0
        %v1724 = vadd.f32 %v1669, 1.0
        %v1725 = vadd.f32 %v1671, 1.0
        %v1726 = vadd.f32 %v1673, 1.0
        %v1727 = vadd.f32 %v1675, 1.0
        %v1728 = vadd.f32 %v1677, 1.0
        %v1729 = vadd.f32 %v1679, 1.0
        %v1730 = vadd.f32 %v1681, 1.0
        %v1731 = vadd.f32 %v1683, 1.0
        %v1732 = vadd.f32 %v1685, 1.0
        %v1733 = vadd.f32 %v1687, 1.0
        %v1734 = vadd.f32 %v1689, 1.0
        %v1735 = vadd.f32 %v1691, 1.0
        %v1736 = vadd.f32 %v1693, 1.0
        %v1737 = vadd.f32 %v1695, 1.0
        %v1738 = vadd.f32 %v1697, 1.0
        %v1739 = vadd.f32 %v1699, 1.0
        %v1740 = vadd.f32 %v1701, 1.0
        %v1741 = vadd.f32 %v1703, 1.0
        %v1742 = vadd.f32 %v1705, 1.0
        %v1743 = vadd.f32 %v1707, 1.0
        %v1744 = vadd.f32 %v1709, 1.0
        %v1745 = vadd.f32 %v1711, 1.0
        %v1746 = vadd.f32 %v1713, 1.0
        %v1747 = vadd.f32 %v1715, 1.0
        %v1748 = vrcp.pop %v1716
        %v1749 = vmul.f32 %v1716, %v1748
        %v1750 = vsub.f32 1.0, %v1749
        %v1751 = vmul.f32 %v1748, %v1750
        %v1752 = vadd.f32 %v1748, %v1751
        %vm1753 = vweird.f32 %v1716
        %vm1754 = vweird.f32 %v1748
        %vm1755 = vmor %vm1753, %vm1754
        %v1756 = vsel %vm1755, %v1748, %v1752
        %v1757 = vand.u32 2147483647, %v1716
        %vm1758 = vcmp.eq.f32.partialorder %v1757, 8.507059e+37
        %v1759 = vand.u32 %v1716, 2147483648
        %v1760 = vor.u32 1.1754944e-38, %v1759
        %v1761 = vsel %vm1758, %v1760, %v1756
        %v1762 = vmul.f32 1.0, %v1761
        %v1763 = vrcp.pop %v1717
        %v1764 = vmul.f32 %v1717, %v1763
        %v1765 = vsub.f32 1.0, %v1764
        %v1766 = vmul.f32 %v1763, %v1765
        %v1767 = vadd.f32 %v1763, %v1766
        %vm1768 = vweird.f32 %v1717
        %vm1769 = vweird.f32 %v1763
        %vm1770 = vmor %vm1768, %vm1769
        %v1771 = vsel %vm1770, %v1763, %v1767
        %v1772 = vand.u32 2147483647, %v1717
        %vm1773 = vcmp.eq.f32.partialorder %v1772, 8.507059e+37
        %v1774 = vand.u32 %v1717, 2147483648
        %v1775 = vor.u32 1.1754944e-38, %v1774
        %v1776 = vsel %vm1773, %v1775, %v1771
        %v1777 = vmul.f32 1.0, %v1776
        %v1778 = vrcp.pop %v1718
        %v1779 = vmul.f32 %v1718, %v1778
        %v1780 = vsub.f32 1.0, %v1779
        %v1781 = vmul.f32 %v1778, %v1780
        %v1782 = vadd.f32 %v1778, %v1781
        %vm1783 = vweird.f32 %v1718
        %vm1784 = vweird.f32 %v1778
        %vm1785 = vmor %vm1783, %vm1784
        %v1786 = vsel %vm1785, %v1778, %v1782
        %v1787 = vand.u32 2147483647, %v1718
        %vm1788 = vcmp.eq.f32.partialorder %v1787, 8.507059e+37
        %v1789 = vand.u32 %v1718, 2147483648
        %v1790 = vor.u32 1.1754944e-38, %v1789
        %v1791 = vsel %vm1788, %v1790, %v1786
        %v1792 = vmul.f32 1.0, %v1791
        %v1793 = vrcp.pop %v1719
        %v1794 = vmul.f32 %v1719, %v1793
        %v1795 = vsub.f32 1.0, %v1794
        %v1796 = vmul.f32 %v1793, %v1795
        %v1797 = vadd.f32 %v1793, %v1796
        %vm1798 = vweird.f32 %v1719
        %vm1799 = vweird.f32 %v1793
        %vm1800 = vmor %vm1798, %vm1799
        %v1801 = vsel %vm1800, %v1793, %v1797
        %v1802 = vand.u32 2147483647, %v1719
        %vm1803 = vcmp.eq.f32.partialorder %v1802, 8.507059e+37
        %v1804 = vand.u32 %v1719, 2147483648
        %v1805 = vor.u32 1.1754944e-38, %v1804
        %v1806 = vsel %vm1803, %v1805, %v1801
        %v1807 = vmul.f32 1.0, %v1806
        %v1808 = vrcp.pop %v1720
        %v1809 = vmul.f32 %v1720, %v1808
        %v1810 = vsub.f32 1.0, %v1809
        %v1811 = vmul.f32 %v1808, %v1810
        %v1812 = vadd.f32 %v1808, %v1811
        %vm1813 = vweird.f32 %v1720
        %vm1814 = vweird.f32 %v1808
        %vm1815 = vmor %vm1813, %vm1814
        %v1816 = vsel %vm1815, %v1808, %v1812
        %v1817 = vand.u32 2147483647, %v1720
        %vm1818 = vcmp.eq.f32.partialorder %v1817, 8.507059e+37
        %v1819 = vand.u32 %v1720, 2147483648
        %v1820 = vor.u32 1.1754944e-38, %v1819
        %v1821 = vsel %vm1818, %v1820, %v1816
        %v1822 = vmul.f32 1.0, %v1821
        %v1823 = vrcp.pop %v1721
        %v1824 = vmul.f32 %v1721, %v1823
        %v1825 = vsub.f32 1.0, %v1824
        %v1826 = vmul.f32 %v1823, %v1825
        %v1827 = vadd.f32 %v1823, %v1826
        %vm1828 = vweird.f32 %v1721
        %vm1829 = vweird.f32 %v1823
        %vm1830 = vmor %vm1828, %vm1829
        %v1831 = vsel %vm1830, %v1823, %v1827
        %v1832 = vand.u32 2147483647, %v1721
        %vm1833 = vcmp.eq.f32.partialorder %v1832, 8.507059e+37
        %v1834 = vand.u32 %v1721, 2147483648
        %v1835 = vor.u32 1.1754944e-38, %v1834
        %v1836 = vsel %vm1833, %v1835, %v1831
        %v1837 = vmul.f32 1.0, %v1836
        %v1838 = vrcp.pop %v1722
        %v1839 = vmul.f32 %v1722, %v1838
        %v1840 = vsub.f32 1.0, %v1839
        %v1841 = vmul.f32 %v1838, %v1840
        %v1842 = vadd.f32 %v1838, %v1841
        %vm1843 = vweird.f32 %v1722
        %vm1844 = vweird.f32 %v1838
        %vm1845 = vmor %vm1843, %vm1844
        %v1846 = vsel %vm1845, %v1838, %v1842
        %v1847 = vand.u32 2147483647, %v1722
        %vm1848 = vcmp.eq.f32.partialorder %v1847, 8.507059e+37
        %v1849 = vand.u32 %v1722, 2147483648
        %v1850 = vor.u32 1.1754944e-38, %v1849
        %v1851 = vsel %vm1848, %v1850, %v1846
        %v1852 = vmul.f32 1.0, %v1851
        %v1853 = vrcp.pop %v1723
        %v1854 = vmul.f32 %v1723, %v1853
        %v1855 = vsub.f32 1.0, %v1854
        %v1856 = vmul.f32 %v1853, %v1855
        %v1857 = vadd.f32 %v1853, %v1856
        %vm1858 = vweird.f32 %v1723
        %vm1859 = vweird.f32 %v1853
        %vm1860 = vmor %vm1858, %vm1859
        %v1861 = vsel %vm1860, %v1853, %v1857
        %v1862 = vand.u32 2147483647, %v1723
        %vm1863 = vcmp.eq.f32.partialorder %v1862, 8.507059e+37
        %v1864 = vand.u32 %v1723, 2147483648
        %v1865 = vor.u32 1.1754944e-38, %v1864
        %v1866 = vsel %vm1863, %v1865, %v1861
        %v1867 = vmul.f32 1.0, %v1866
        %v1868 = vrcp.pop %v1724
        %v1869 = vmul.f32 %v1724, %v1868
        %v1870 = vsub.f32 1.0, %v1869
        %v1871 = vmul.f32 %v1868, %v1870
        %v1872 = vadd.f32 %v1868, %v1871
        %vm1873 = vweird.f32 %v1724
        %vm1874 = vweird.f32 %v1868
        %vm1875 = vmor %vm1873, %vm1874
        %v1876 = vsel %vm1875, %v1868, %v1872
        %v1877 = vand.u32 2147483647, %v1724
        %vm1878 = vcmp.eq.f32.partialorder %v1877, 8.507059e+37
        %v1879 = vand.u32 %v1724, 2147483648
        %v1880 = vor.u32 1.1754944e-38, %v1879
        %v1881 = vsel %vm1878, %v1880, %v1876
        %v1882 = vmul.f32 1.0, %v1881
        %v1883 = vrcp.pop %v1725
        %v1884 = vmul.f32 %v1725, %v1883
        %v1885 = vsub.f32 1.0, %v1884
        %v1886 = vmul.f32 %v1883, %v1885
        %v1887 = vadd.f32 %v1883, %v1886
        %vm1888 = vweird.f32 %v1725
        %vm1889 = vweird.f32 %v1883
        %vm1890 = vmor %vm1888, %vm1889
        %v1891 = vsel %vm1890, %v1883, %v1887
        %v1892 = vand.u32 2147483647, %v1725
        %vm1893 = vcmp.eq.f32.partialorder %v1892, 8.507059e+37
        %v1894 = vand.u32 %v1725, 2147483648
        %v1895 = vor.u32 1.1754944e-38, %v1894
        %v1896 = vsel %vm1893, %v1895, %v1891
        %v1897 = vmul.f32 1.0, %v1896
        %v1898 = vrcp.pop %v1726
        %v1899 = vmul.f32 %v1726, %v1898
        %v1900 = vsub.f32 1.0, %v1899
        %v1901 = vmul.f32 %v1898, %v1900
        %v1902 = vadd.f32 %v1898, %v1901
        %vm1903 = vweird.f32 %v1726
        %vm1904 = vweird.f32 %v1898
        %vm1905 = vmor %vm1903, %vm1904
        %v1906 = vsel %vm1905, %v1898, %v1902
        %v1907 = vand.u32 2147483647, %v1726
        %vm1908 = vcmp.eq.f32.partialorder %v1907, 8.507059e+37
        %v1909 = vand.u32 %v1726, 2147483648
        %v1910 = vor.u32 1.1754944e-38, %v1909
        %v1911 = vsel %vm1908, %v1910, %v1906
        %v1912 = vmul.f32 1.0, %v1911
        %v1913 = vrcp.pop %v1727
        %v1914 = vmul.f32 %v1727, %v1913
        %v1915 = vsub.f32 1.0, %v1914
        %v1916 = vmul.f32 %v1913, %v1915
        %v1917 = vadd.f32 %v1913, %v1916
        %vm1918 = vweird.f32 %v1727
        %vm1919 = vweird.f32 %v1913
        %vm1920 = vmor %vm1918, %vm1919
        %v1921 = vsel %vm1920, %v1913, %v1917
        %v1922 = vand.u32 2147483647, %v1727
        %vm1923 = vcmp.eq.f32.partialorder %v1922, 8.507059e+37
        %v1924 = vand.u32 %v1727, 2147483648
        %v1925 = vor.u32 1.1754944e-38, %v1924
        %v1926 = vsel %vm1923, %v1925, %v1921
        %v1927 = vmul.f32 1.0, %v1926
        %v1928 = vrcp.pop %v1728
        %v1929 = vmul.f32 %v1728, %v1928
        %v1930 = vsub.f32 1.0, %v1929
        %v1931 = vmul.f32 %v1928, %v1930
        %v1932 = vadd.f32 %v1928, %v1931
        %vm1933 = vweird.f32 %v1728
        %vm1934 = vweird.f32 %v1928
        %vm1935 = vmor %vm1933, %vm1934
        %v1936 = vsel %vm1935, %v1928, %v1932
        %v1937 = vand.u32 2147483647, %v1728
        %vm1938 = vcmp.eq.f32.partialorder %v1937, 8.507059e+37
        %v1939 = vand.u32 %v1728, 2147483648
        %v1940 = vor.u32 1.1754944e-38, %v1939
        %v1941 = vsel %vm1938, %v1940, %v1936
        %v1942 = vmul.f32 1.0, %v1941
        %v1943 = vrcp.pop %v1729
        %v1944 = vmul.f32 %v1729, %v1943
        %v1945 = vsub.f32 1.0, %v1944
        %v1946 = vmul.f32 %v1943, %v1945
        %v1947 = vadd.f32 %v1943, %v1946
        %vm1948 = vweird.f32 %v1729
        %vm1949 = vweird.f32 %v1943
        %vm1950 = vmor %vm1948, %vm1949
        %v1951 = vsel %vm1950, %v1943, %v1947
        %v1952 = vand.u32 2147483647, %v1729
        %vm1953 = vcmp.eq.f32.partialorder %v1952, 8.507059e+37
        %v1954 = vand.u32 %v1729, 2147483648
        %v1955 = vor.u32 1.1754944e-38, %v1954
        %v1956 = vsel %vm1953, %v1955, %v1951
        %v1957 = vmul.f32 1.0, %v1956
        %v1958 = vrcp.pop %v1730
        %v1959 = vmul.f32 %v1730, %v1958
        %v1960 = vsub.f32 1.0, %v1959
        %v1961 = vmul.f32 %v1958, %v1960
        %v1962 = vadd.f32 %v1958, %v1961
        %vm1963 = vweird.f32 %v1730
        %vm1964 = vweird.f32 %v1958
        %vm1965 = vmor %vm1963, %vm1964
        %v1966 = vsel %vm1965, %v1958, %v1962
        %v1967 = vand.u32 2147483647, %v1730
        %vm1968 = vcmp.eq.f32.partialorder %v1967, 8.507059e+37
        %v1969 = vand.u32 %v1730, 2147483648
        %v1970 = vor.u32 1.1754944e-38, %v1969
        %v1971 = vsel %vm1968, %v1970, %v1966
        %v1972 = vmul.f32 1.0, %v1971
        %v1973 = vrcp.pop %v1731
        %v1974 = vmul.f32 %v1731, %v1973
        %v1975 = vsub.f32 1.0, %v1974
        %v1976 = vmul.f32 %v1973, %v1975
        %v1977 = vadd.f32 %v1973, %v1976
        %vm1978 = vweird.f32 %v1731
        %vm1979 = vweird.f32 %v1973
        %vm1980 = vmor %vm1978, %vm1979
        %v1981 = vsel %vm1980, %v1973, %v1977
        %v1982 = vand.u32 2147483647, %v1731
        %vm1983 = vcmp.eq.f32.partialorder %v1982, 8.507059e+37
        %v1984 = vand.u32 %v1731, 2147483648
        %v1985 = vor.u32 1.1754944e-38, %v1984
        %v1986 = vsel %vm1983, %v1985, %v1981
        %v1987 = vmul.f32 1.0, %v1986
        %v1988 = vrcp.pop %v1732
        %v1989 = vmul.f32 %v1732, %v1988
        %v1990 = vsub.f32 1.0, %v1989
        %v1991 = vmul.f32 %v1988, %v1990
        %v1992 = vadd.f32 %v1988, %v1991
        %vm1993 = vweird.f32 %v1732
        %vm1994 = vweird.f32 %v1988
        %vm1995 = vmor %vm1993, %vm1994
        %v1996 = vsel %vm1995, %v1988, %v1992
        %v1997 = vand.u32 2147483647, %v1732
        %vm1998 = vcmp.eq.f32.partialorder %v1997, 8.507059e+37
        %v1999 = vand.u32 %v1732, 2147483648
        %v2000 = vor.u32 1.1754944e-38, %v1999
        %v2001 = vsel %vm1998, %v2000, %v1996
        %v2002 = vmul.f32 1.0, %v2001
        %v2003 = vrcp.pop %v1733
        %v2004 = vmul.f32 %v1733, %v2003
        %v2005 = vsub.f32 1.0, %v2004
        %v2006 = vmul.f32 %v2003, %v2005
        %v2007 = vadd.f32 %v2003, %v2006
        %vm2008 = vweird.f32 %v1733
        %vm2009 = vweird.f32 %v2003
        %vm2010 = vmor %vm2008, %vm2009
        %v2011 = vsel %vm2010, %v2003, %v2007
        %v2012 = vand.u32 2147483647, %v1733
        %vm2013 = vcmp.eq.f32.partialorder %v2012, 8.507059e+37
        %v2014 = vand.u32 %v1733, 2147483648
        %v2015 = vor.u32 1.1754944e-38, %v2014
        %v2016 = vsel %vm2013, %v2015, %v2011
        %v2017 = vmul.f32 1.0, %v2016
        %v2018 = vrcp.pop %v1734
        %v2019 = vmul.f32 %v1734, %v2018
        %v2020 = vsub.f32 1.0, %v2019
        %v2021 = vmul.f32 %v2018, %v2020
        %v2022 = vadd.f32 %v2018, %v2021
        %vm2023 = vweird.f32 %v1734
        %vm2024 = vweird.f32 %v2018
        %vm2025 = vmor %vm2023, %vm2024
        %v2026 = vsel %vm2025, %v2018, %v2022
        %v2027 = vand.u32 2147483647, %v1734
        %vm2028 = vcmp.eq.f32.partialorder %v2027, 8.507059e+37
        %v2029 = vand.u32 %v1734, 2147483648
        %v2030 = vor.u32 1.1754944e-38, %v2029
        %v2031 = vsel %vm2028, %v2030, %v2026
        %v2032 = vmul.f32 1.0, %v2031
        %v2033 = vrcp.pop %v1735
        %v2034 = vmul.f32 %v1735, %v2033
        %v2035 = vsub.f32 1.0, %v2034
        %v2036 = vmul.f32 %v2033, %v2035
        %v2037 = vadd.f32 %v2033, %v2036
        %vm2038 = vweird.f32 %v1735
        %vm2039 = vweird.f32 %v2033
        %vm2040 = vmor %vm2038, %vm2039
        %v2041 = vsel %vm2040, %v2033, %v2037
        %v2042 = vand.u32 2147483647, %v1735
        %vm2043 = vcmp.eq.f32.partialorder %v2042, 8.507059e+37
        %v2044 = vand.u32 %v1735, 2147483648
        %v2045 = vor.u32 1.1754944e-38, %v2044
        %v2046 = vsel %vm2043, %v2045, %v2041
        %v2047 = vmul.f32 1.0, %v2046
        %v2048 = vrcp.pop %v1736
        %v2049 = vmul.f32 %v1736, %v2048
        %v2050 = vsub.f32 1.0, %v2049
        %v2051 = vmul.f32 %v2048, %v2050
        %v2052 = vadd.f32 %v2048, %v2051
        %vm2053 = vweird.f32 %v1736
        %vm2054 = vweird.f32 %v2048
        %vm2055 = vmor %vm2053, %vm2054
        %v2056 = vsel %vm2055, %v2048, %v2052
        %v2057 = vand.u32 2147483647, %v1736
        %vm2058 = vcmp.eq.f32.partialorder %v2057, 8.507059e+37
        %v2059 = vand.u32 %v1736, 2147483648
        %v2060 = vor.u32 1.1754944e-38, %v2059
        %v2061 = vsel %vm2058, %v2060, %v2056
        %v2062 = vmul.f32 1.0, %v2061
        %v2063 = vrcp.pop %v1737
        %v2064 = vmul.f32 %v1737, %v2063
        %v2065 = vsub.f32 1.0, %v2064
        %v2066 = vmul.f32 %v2063, %v2065
        %v2067 = vadd.f32 %v2063, %v2066
        %vm2068 = vweird.f32 %v1737
        %vm2069 = vweird.f32 %v2063
        %vm2070 = vmor %vm2068, %vm2069
        %v2071 = vsel %vm2070, %v2063, %v2067
        %v2072 = vand.u32 2147483647, %v1737
        %vm2073 = vcmp.eq.f32.partialorder %v2072, 8.507059e+37
        %v2074 = vand.u32 %v1737, 2147483648
        %v2075 = vor.u32 1.1754944e-38, %v2074
        %v2076 = vsel %vm2073, %v2075, %v2071
        %v2077 = vmul.f32 1.0, %v2076
        %v2078 = vrcp.pop %v1738
        %v2079 = vmul.f32 %v1738, %v2078
        %v2080 = vsub.f32 1.0, %v2079
        %v2081 = vmul.f32 %v2078, %v2080
        %v2082 = vadd.f32 %v2078, %v2081
        %vm2083 = vweird.f32 %v1738
        %vm2084 = vweird.f32 %v2078
        %vm2085 = vmor %vm2083, %vm2084
        %v2086 = vsel %vm2085, %v2078, %v2082
        %v2087 = vand.u32 2147483647, %v1738
        %vm2088 = vcmp.eq.f32.partialorder %v2087, 8.507059e+37
        %v2089 = vand.u32 %v1738, 2147483648
        %v2090 = vor.u32 1.1754944e-38, %v2089
        %v2091 = vsel %vm2088, %v2090, %v2086
        %v2092 = vmul.f32 1.0, %v2091
        %v2093 = vrcp.pop %v1739
        %v2094 = vmul.f32 %v1739, %v2093
        %v2095 = vsub.f32 1.0, %v2094
        %v2096 = vmul.f32 %v2093, %v2095
        %v2097 = vadd.f32 %v2093, %v2096
        %vm2098 = vweird.f32 %v1739
        %vm2099 = vweird.f32 %v2093
        %vm2100 = vmor %vm2098, %vm2099
        %v2101 = vsel %vm2100, %v2093, %v2097
        %v2102 = vand.u32 2147483647, %v1739
        %vm2103 = vcmp.eq.f32.partialorder %v2102, 8.507059e+37
        %v2104 = vand.u32 %v1739, 2147483648
        %v2105 = vor.u32 1.1754944e-38, %v2104
        %v2106 = vsel %vm2103, %v2105, %v2101
        %v2107 = vmul.f32 1.0, %v2106
        %v2108 = vrcp.pop %v1740
        %v2109 = vmul.f32 %v1740, %v2108
        %v2110 = vsub.f32 1.0, %v2109
        %v2111 = vmul.f32 %v2108, %v2110
        %v2112 = vadd.f32 %v2108, %v2111
        %vm2113 = vweird.f32 %v1740
        %vm2114 = vweird.f32 %v2108
        %vm2115 = vmor %vm2113, %vm2114
        %v2116 = vsel %vm2115, %v2108, %v2112
        %v2117 = vand.u32 2147483647, %v1740
        %vm2118 = vcmp.eq.f32.partialorder %v2117, 8.507059e+37
        %v2119 = vand.u32 %v1740, 2147483648
        %v2120 = vor.u32 1.1754944e-38, %v2119
        %v2121 = vsel %vm2118, %v2120, %v2116
        %v2122 = vmul.f32 1.0, %v2121
        %v2123 = vrcp.pop %v1741
        %v2124 = vmul.f32 %v1741, %v2123
        %v2125 = vsub.f32 1.0, %v2124
        %v2126 = vmul.f32 %v2123, %v2125
        %v2127 = vadd.f32 %v2123, %v2126
        %vm2128 = vweird.f32 %v1741
        %vm2129 = vweird.f32 %v2123
        %vm2130 = vmor %vm2128, %vm2129
        %v2131 = vsel %vm2130, %v2123, %v2127
        %v2132 = vand.u32 2147483647, %v1741
        %vm2133 = vcmp.eq.f32.partialorder %v2132, 8.507059e+37
        %v2134 = vand.u32 %v1741, 2147483648
        %v2135 = vor.u32 1.1754944e-38, %v2134
        %v2136 = vsel %vm2133, %v2135, %v2131
        %v2137 = vmul.f32 1.0, %v2136
        %v2138 = vrcp.pop %v1742
        %v2139 = vmul.f32 %v1742, %v2138
        %v2140 = vsub.f32 1.0, %v2139
        %v2141 = vmul.f32 %v2138, %v2140
        %v2142 = vadd.f32 %v2138, %v2141
        %vm2143 = vweird.f32 %v1742
        %vm2144 = vweird.f32 %v2138
        %vm2145 = vmor %vm2143, %vm2144
        %v2146 = vsel %vm2145, %v2138, %v2142
        %v2147 = vand.u32 2147483647, %v1742
        %vm2148 = vcmp.eq.f32.partialorder %v2147, 8.507059e+37
        %v2149 = vand.u32 %v1742, 2147483648
        %v2150 = vor.u32 1.1754944e-38, %v2149
        %v2151 = vsel %vm2148, %v2150, %v2146
        %v2152 = vmul.f32 1.0, %v2151
        %v2153 = vrcp.pop %v1743
        %v2154 = vmul.f32 %v1743, %v2153
        %v2155 = vsub.f32 1.0, %v2154
        %v2156 = vmul.f32 %v2153, %v2155
        %v2157 = vadd.f32 %v2153, %v2156
        %vm2158 = vweird.f32 %v1743
        %vm2159 = vweird.f32 %v2153
        %vm2160 = vmor %vm2158, %vm2159
        %v2161 = vsel %vm2160, %v2153, %v2157
        %v2162 = vand.u32 2147483647, %v1743
        %vm2163 = vcmp.eq.f32.partialorder %v2162, 8.507059e+37
        %v2164 = vand.u32 %v1743, 2147483648
        %v2165 = vor.u32 1.1754944e-38, %v2164
        %v2166 = vsel %vm2163, %v2165, %v2161
        %v2167 = vmul.f32 1.0, %v2166
        %v2168 = vrcp.pop %v1744
        %v2169 = vmul.f32 %v1744, %v2168
        %v2170 = vsub.f32 1.0, %v2169
        %v2171 = vmul.f32 %v2168, %v2170
        %v2172 = vadd.f32 %v2168, %v2171
        %vm2173 = vweird.f32 %v1744
        %vm2174 = vweird.f32 %v2168
        %vm2175 = vmor %vm2173, %vm2174
        %v2176 = vsel %vm2175, %v2168, %v2172
        %v2177 = vand.u32 2147483647, %v1744
        %vm2178 = vcmp.eq.f32.partialorder %v2177, 8.507059e+37
        %v2179 = vand.u32 %v1744, 2147483648
        %v2180 = vor.u32 1.1754944e-38, %v2179
        %v2181 = vsel %vm2178, %v2180, %v2176
        %v2182 = vmul.f32 1.0, %v2181
        %v2183 = vrcp.pop %v1745
        %v2184 = vmul.f32 %v1745, %v2183
        %v2185 = vsub.f32 1.0, %v2184
        %v2186 = vmul.f32 %v2183, %v2185
        %v2187 = vadd.f32 %v2183, %v2186
        %vm2188 = vweird.f32 %v1745
        %vm2189 = vweird.f32 %v2183
        %vm2190 = vmor %vm2188, %vm2189
        %v2191 = vsel %vm2190, %v2183, %v2187
        %v2192 = vand.u32 2147483647, %v1745
        %vm2193 = vcmp.eq.f32.partialorder %v2192, 8.507059e+37
        %v2194 = vand.u32 %v1745, 2147483648
        %v2195 = vor.u32 1.1754944e-38, %v2194
        %v2196 = vsel %vm2193, %v2195, %v2191
        %v2197 = vmul.f32 1.0, %v2196
        %v2198 = vrcp.pop %v1746
        %v2199 = vmul.f32 %v1746, %v2198
        %v2200 = vsub.f32 1.0, %v2199
        %v2201 = vmul.f32 %v2198, %v2200
        %v2202 = vadd.f32 %v2198, %v2201
        %vm2203 = vweird.f32 %v1746
        %vm2204 = vweird.f32 %v2198
        %vm2205 = vmor %vm2203, %vm2204
        %v2206 = vsel %vm2205, %v2198, %v2202
        %v2207 = vand.u32 2147483647, %v1746
        %vm2208 = vcmp.eq.f32.partialorder %v2207, 8.507059e+37
        %v2209 = vand.u32 %v1746, 2147483648
        %v2210 = vor.u32 1.1754944e-38, %v2209
        %v2211 = vsel %vm2208, %v2210, %v2206
        %v2212 = vmul.f32 1.0, %v2211
        %v2213 = vrcp.pop %v1747
        %v2214 = vmul.f32 %v1747, %v2213
        %v2215 = vsub.f32 1.0, %v2214
        %v2216 = vmul.f32 %v2213, %v2215
        %v2217 = vadd.f32 %v2213, %v2216
        %vm2218 = vweird.f32 %v1747
        %vm2219 = vweird.f32 %v2213
        %vm2220 = vmor %vm2218, %vm2219
        %v2221 = vsel %vm2220, %v2213, %v2217
        %v2222 = vand.u32 2147483647, %v1747
        %vm2223 = vcmp.eq.f32.partialorder %v2222, 8.507059e+37
        %v2224 = vand.u32 %v1747, 2147483648
        %v2225 = vor.u32 1.1754944e-38, %v2224
        %v2226 = vsel %vm2223, %v2225, %v2221
        %v2227 = vmul.f32 1.0, %v2226
        %v2228 = vpack.c.bf16 %v1777, %v1762
        %v2229 = vpack.c.bf16 %v1807, %v1792
        %v2230 = vpack.c.bf16 %v1837, %v1822
        %v2231 = vpack.c.bf16 %v1867, %v1852
        %v2232 = vpack.c.bf16 %v1897, %v1882
        %v2233 = vpack.c.bf16 %v1927, %v1912
        %v2234 = vpack.c.bf16 %v1957, %v1942
        %v2235 = vpack.c.bf16 %v1987, %v1972
        %v2236 = vpack.c.bf16 %v2017, %v2002
        %v2237 = vpack.c.bf16 %v2047, %v2032
        %v2238 = vpack.c.bf16 %v2077, %v2062
        %v2239 = vpack.c.bf16 %v2107, %v2092
        %v2240 = vpack.c.bf16 %v2137, %v2122
        %v2241 = vpack.c.bf16 %v2167, %v2152
        %v2242 = vpack.c.bf16 %v2197, %v2182
        %v2243 = vpack.c.bf16 %v2227, %v2212
        %v2244 = vld [vmem:[%s5] sm:$0xf]
        %v2245 = vld [vmem:[%s5 + $0x4] sm:$0xf]
        %v2246 = vld [vmem:[%s5 + $0x8] sm:$0xf]
        %v2247 = vld [vmem:[%s5 + $0xc] sm:$0xf]
        %v2248 = vld [vmem:[%s5 + $0x10] sm:$0xf]
        %v2249 = vld [vmem:[%s5 + $0x14] sm:$0xf]
        %v2250 = vld [vmem:[%s5 + $0x18] sm:$0xf]
        %v2251 = vld [vmem:[%s5 + $0x1c] sm:$0xf]
        %v2252 = vld [vmem:[%s5 + $0x20] sm:$0xf]
        %v2253 = vld [vmem:[%s5 + $0x24] sm:$0xf]
        %v2254 = vld [vmem:[%s5 + $0x28] sm:$0xf]
        %v2255 = vld [vmem:[%s5 + $0x2c] sm:$0xf]
        %v2256 = vld [vmem:[%s5 + $0x30] sm:$0xf]
        %v2257 = vld [vmem:[%s5 + $0x34] sm:$0xf]
        %v2258 = vld [vmem:[%s5 + $0x38] sm:$0xf]
        %v2259 = vld [vmem:[%s5 + $0x3c] sm:$0xf]
        %v2260 = vld [vmem:[%s6] sm:$0x1]
        %v2262 = vperm.slane %v2260, 0
        %v2280 = vunpack.c.l.b16 %v2244
        %v2281 = vunpack.c.l.b16 %v2245
        %v2282 = vunpack.c.l.b16 %v2246
        %v2283 = vunpack.c.l.b16 %v2247
        %v2284 = vunpack.c.l.b16 %v2248
        %v2285 = vunpack.c.l.b16 %v2249
        %v2286 = vunpack.c.l.b16 %v2250
        %v2287 = vunpack.c.l.b16 %v2251
        %v2288 = vunpack.c.l.b16 %v2252
        %v2289 = vunpack.c.l.b16 %v2253
        %v2290 = vunpack.c.l.b16 %v2254
        %v2291 = vunpack.c.l.b16 %v2255
        %v2292 = vunpack.c.l.b16 %v2256
        %v2293 = vunpack.c.l.b16 %v2257
        %v2294 = vunpack.c.l.b16 %v2258
        %v2295 = vunpack.c.l.b16 %v2259
        %v2296 = vpack.c.b16 %v2281, %v2280
        %v2297 = vpack.c.b16 %v2283, %v2282
        %v2298 = vpack.c.b16 %v2285, %v2284
        %v2299 = vpack.c.b16 %v2287, %v2286
        %v2300 = vpack.c.b16 %v2289, %v2288
        %v2301 = vpack.c.b16 %v2291, %v2290
        %v2302 = vpack.c.b16 %v2293, %v2292
        %v2303 = vpack.c.b16 %v2295, %v2294
        %2312 = vmatpush.bf16.msra.mxu0 %v2303
        %2313 = vmatpush.bf16.msra.mxu0 %v2302
        %2314 = vmatpush.bf16.msra.mxu0 %v2301
        %2315 = vmatpush.bf16.msra.mxu0 %v2300
        %2316 = vmatpush.bf16.msra.mxu0 %v2299
        %2317 = vmatpush.bf16.msra.mxu0 %v2298
        %2318 = vmatpush.bf16.msra.mxu0 %v2297
        %2319 = vmatpush.bf16.msra.mxu0 %v2296
        %2320 = vmatmul.bf16.gmra.mxu0 %v2228
        %v2321 = vpop.f32.mrf.mxu0
        %v2322 = vadd.f32 %v2262, %v2321
        %v2323 = vpop.f32.mrf.mxu0
        %v2324 = vadd.f32 %v2262, %v2323
        %2325 = vmatmul.bf16.gmra.mxu0 %v2229
        %v2326 = vpop.f32.mrf.mxu0
        %v2327 = vadd.f32 %v2262, %v2326
        %v2328 = vpop.f32.mrf.mxu0
        %v2329 = vadd.f32 %v2262, %v2328
        %2330 = vmatmul.bf16.gmra.mxu0 %v2230
        %v2331 = vpop.f32.mrf.mxu0
        %v2332 = vadd.f32 %v2262, %v2331
        %v2333 = vpop.f32.mrf.mxu0
        %v2334 = vadd.f32 %v2262, %v2333
        %2335 = vmatmul.bf16.gmra.mxu0 %v2231
        %v2336 = vpop.f32.mrf.mxu0
        %v2337 = vadd.f32 %v2262, %v2336
        %v2338 = vpop.f32.mrf.mxu0
        %v2339 = vadd.f32 %v2262, %v2338
        %2340 = vmatmul.bf16.gmra.mxu0 %v2232
        %v2341 = vpop.f32.mrf.mxu0
        %v2342 = vadd.f32 %v2262, %v2341
        %v2343 = vpop.f32.mrf.mxu0
        %v2344 = vadd.f32 %v2262, %v2343
        %2345 = vmatmul.bf16.gmra.mxu0 %v2233
        %v2346 = vpop.f32.mrf.mxu0
        %v2347 = vadd.f32 %v2262, %v2346
        %v2348 = vpop.f32.mrf.mxu0
        %v2349 = vadd.f32 %v2262, %v2348
        %2350 = vmatmul.bf16.gmra.mxu0 %v2234
        %v2351 = vpop.f32.mrf.mxu0
        %v2352 = vadd.f32 %v2262, %v2351
        %v2353 = vpop.f32.mrf.mxu0
        %v2354 = vadd.f32 %v2262, %v2353
        %2355 = vmatmul.bf16.gmra.mxu0 %v2235
        %v2356 = vpop.f32.mrf.mxu0
        %v2357 = vadd.f32 %v2262, %v2356
        %v2358 = vpop.f32.mrf.mxu0
        %v2359 = vadd.f32 %v2262, %v2358
        %2360 = vmatmul.bf16.gmra.mxu0 %v2236
        %v2361 = vpop.f32.mrf.mxu0
        %v2362 = vadd.f32 %v2262, %v2361
        %v2363 = vpop.f32.mrf.mxu0
        %v2364 = vadd.f32 %v2262, %v2363
        %2365 = vmatmul.bf16.gmra.mxu0 %v2237
        %v2366 = vpop.f32.mrf.mxu0
        %v2367 = vadd.f32 %v2262, %v2366
        %v2368 = vpop.f32.mrf.mxu0
        %v2369 = vadd.f32 %v2262, %v2368
        %2370 = vmatmul.bf16.gmra.mxu0 %v2238
        %v2371 = vpop.f32.mrf.mxu0
        %v2372 = vadd.f32 %v2262, %v2371
        %v2373 = vpop.f32.mrf.mxu0
        %v2374 = vadd.f32 %v2262, %v2373
        %2375 = vmatmul.bf16.gmra.mxu0 %v2239
        %v2376 = vpop.f32.mrf.mxu0
        %v2377 = vadd.f32 %v2262, %v2376
        %v2378 = vpop.f32.mrf.mxu0
        %v2379 = vadd.f32 %v2262, %v2378
        %2380 = vmatmul.bf16.gmra.mxu0 %v2240
        %v2381 = vpop.f32.mrf.mxu0
        %v2382 = vadd.f32 %v2262, %v2381
        %v2383 = vpop.f32.mrf.mxu0
        %v2384 = vadd.f32 %v2262, %v2383
        %2385 = vmatmul.bf16.gmra.mxu0 %v2241
        %v2386 = vpop.f32.mrf.mxu0
        %v2387 = vadd.f32 %v2262, %v2386
        %v2388 = vpop.f32.mrf.mxu0
        %v2389 = vadd.f32 %v2262, %v2388
        %2390 = vmatmul.bf16.gmra.mxu0 %v2242
        %v2391 = vpop.f32.mrf.mxu0
        %v2392 = vadd.f32 %v2262, %v2391
        %v2393 = vpop.f32.mrf.mxu0
        %v2394 = vadd.f32 %v2262, %v2393
        %2395 = vmatmul.bf16.gmra.mxu0 %v2243
        %v2396 = vpop.f32.mrf.mxu0
        %v2397 = vadd.f32 %v2262, %v2396
        %v2398 = vpop.f32.mrf.mxu0
        %v2399 = vadd.f32 %v2262, %v2398
        %2400 = vdwg.mxu0
        %v2401 = vxor.u32 %v2322, 2147483648
        %v2402 = vxor.u32 %v2324, 2147483648
        %v2403 = vxor.u32 %v2327, 2147483648
        %v2404 = vxor.u32 %v2329, 2147483648
        %v2405 = vxor.u32 %v2332, 2147483648
        %v2406 = vxor.u32 %v2334, 2147483648
        %v2407 = vxor.u32 %v2337, 2147483648
        %v2408 = vxor.u32 %v2339, 2147483648
        %v2409 = vxor.u32 %v2342, 2147483648
        %v2410 = vxor.u32 %v2344, 2147483648
        %v2411 = vxor.u32 %v2347, 2147483648
        %v2412 = vxor.u32 %v2349, 2147483648
        %v2413 = vxor.u32 %v2352, 2147483648
        %v2414 = vxor.u32 %v2354, 2147483648
        %v2415 = vxor.u32 %v2357, 2147483648
        %v2416 = vxor.u32 %v2359, 2147483648
        %v2417 = vxor.u32 %v2362, 2147483648
        %v2418 = vxor.u32 %v2364, 2147483648
        %v2419 = vxor.u32 %v2367, 2147483648
        %v2420 = vxor.u32 %v2369, 2147483648
        %v2421 = vxor.u32 %v2372, 2147483648
        %v2422 = vxor.u32 %v2374, 2147483648
        %v2423 = vxor.u32 %v2377, 2147483648
        %v2424 = vxor.u32 %v2379, 2147483648
        %v2425 = vxor.u32 %v2382, 2147483648
        %v2426 = vxor.u32 %v2384, 2147483648
        %v2427 = vxor.u32 %v2387, 2147483648
        %v2428 = vxor.u32 %v2389, 2147483648
        %v2429 = vxor.u32 %v2392, 2147483648
        %v2430 = vxor.u32 %v2394, 2147483648
        %v2431 = vxor.u32 %v2397, 2147483648
        %v2432 = vxor.u32 %v2399, 2147483648
        %v2433 = vmul.f32 %v2401, 1.442695
        %v2434 = vpow.pop %v2433
        %v2435 = vmul.f32 %v2402, 1.442695
        %v2436 = vpow.pop %v2435
        %v2437 = vmul.f32 %v2403, 1.442695
        %v2438 = vpow.pop %v2437
        %v2439 = vmul.f32 %v2404, 1.442695
        %v2440 = vpow.pop %v2439
        %v2441 = vmul.f32 %v2405, 1.442695
        %v2442 = vpow.pop %v2441
        %v2443 = vmul.f32 %v2406, 1.442695
        %v2444 = vpow.pop %v2443
        %v2445 = vmul.f32 %v2407, 1.442695
        %v2446 = vpow.pop %v2445
        %v2447 = vmul.f32 %v2408, 1.442695
        %v2448 = vpow.pop %v2447
        %v2449 = vmul.f32 %v2409, 1.442695
        %v2450 = vpow.pop %v2449
        %v2451 = vmul.f32 %v2410, 1.442695
        %v2452 = vpow.pop %v2451
        %v2453 = vmul.f32 %v2411, 1.442695
        %v2454 = vpow.pop %v2453
        %v2455 = vmul.f32 %v2412, 1.442695
        %v2456 = vpow.pop %v2455
        %v2457 = vmul.f32 %v2413, 1.442695
        %v2458 = vpow.pop %v2457
        %v2459 = vmul.f32 %v2414, 1.442695
        %v2460 = vpow.pop %v2459
        %v2461 = vmul.f32 %v2415, 1.442695
        %v2462 = vpow.pop %v2461
        %v2463 = vmul.f32 %v2416, 1.442695
        %v2464 = vpow.pop %v2463
        %v2465 = vmul.f32 %v2417, 1.442695
        %v2466 = vpow.pop %v2465
        %v2467 = vmul.f32 %v2418, 1.442695
        %v2468 = vpow.pop %v2467
        %v2469 = vmul.f32 %v2419, 1.442695
        %v2470 = vpow.pop %v2469
        %v2471 = vmul.f32 %v2420, 1.442695
        %v2472 = vpow.pop %v2471
        %v2473 = vmul.f32 %v2421, 1.442695
        %v2474 = vpow.pop %v2473
        %v2475 = vmul.f32 %v2422, 1.442695
        %v2476 = vpow.pop %v2475
        %v2477 = vmul.f32 %v2423, 1.442695
        %v2478 = vpow.pop %v2477
        %v2479 = vmul.f32 %v2424, 1.442695
        %v2480 = vpow.pop %v2479
        %v2481 = vmul.f32 %v2425, 1.442695
        %v2482 = vpow.pop %v2481
        %v2483 = vmul.f32 %v2426, 1.442695
        %v2484 = vpow.pop %v2483
        %v2485 = vmul.f32 %v2427, 1.442695
        %v2486 = vpow.pop %v2485
        %v2487 = vmul.f32 %v2428, 1.442695
        %v2488 = vpow.pop %v2487
        %v2489 = vmul.f32 %v2429, 1.442695
        %v2490 = vpow.pop %v2489
        %v2491 = vmul.f32 %v2430, 1.442695
        %v2492 = vpow.pop %v2491
        %v2493 = vmul.f32 %v2431, 1.442695
        %v2494 = vpow.pop %v2493
        %v2495 = vmul.f32 %v2432, 1.442695
        %v2496 = vpow.pop %v2495
        %v2497 = vadd.f32 %v2434, 1.0
        %v2498 = vadd.f32 %v2436, 1.0
        %v2499 = vadd.f32 %v2438, 1.0
        %v2500 = vadd.f32 %v2440, 1.0
        %v2501 = vadd.f32 %v2442, 1.0
        %v2502 = vadd.f32 %v2444, 1.0
        %v2503 = vadd.f32 %v2446, 1.0
        %v2504 = vadd.f32 %v2448, 1.0
        %v2505 = vadd.f32 %v2450, 1.0
        %v2506 = vadd.f32 %v2452, 1.0
        %v2507 = vadd.f32 %v2454, 1.0
        %v2508 = vadd.f32 %v2456, 1.0
        %v2509 = vadd.f32 %v2458, 1.0
        %v2510 = vadd.f32 %v2460, 1.0
        %v2511 = vadd.f32 %v2462, 1.0
        %v2512 = vadd.f32 %v2464, 1.0
        %v2513 = vadd.f32 %v2466, 1.0
        %v2514 = vadd.f32 %v2468, 1.0
        %v2515 = vadd.f32 %v2470, 1.0
        %v2516 = vadd.f32 %v2472, 1.0
        %v2517 = vadd.f32 %v2474, 1.0
        %v2518 = vadd.f32 %v2476, 1.0
        %v2519 = vadd.f32 %v2478, 1.0
        %v2520 = vadd.f32 %v2480, 1.0
        %v2521 = vadd.f32 %v2482, 1.0
        %v2522 = vadd.f32 %v2484, 1.0
        %v2523 = vadd.f32 %v2486, 1.0
        %v2524 = vadd.f32 %v2488, 1.0
        %v2525 = vadd.f32 %v2490, 1.0
        %v2526 = vadd.f32 %v2492, 1.0
        %v2527 = vadd.f32 %v2494, 1.0
        %v2528 = vadd.f32 %v2496, 1.0
        %v2529 = vrcp.pop %v2497
        %v2530 = vmul.f32 %v2497, %v2529
        %v2531 = vsub.f32 1.0, %v2530
        %v2532 = vmul.f32 %v2529, %v2531
        %v2533 = vadd.f32 %v2529, %v2532
        %vm2534 = vweird.f32 %v2497
        %vm2535 = vweird.f32 %v2529
        %vm2536 = vmor %vm2534, %vm2535
        %v2537 = vsel %vm2536, %v2529, %v2533
        %v2538 = vand.u32 2147483647, %v2497
        %vm2539 = vcmp.eq.f32.partialorder %v2538, 8.507059e+37
        %v2540 = vand.u32 %v2497, 2147483648
        %v2541 = vor.u32 1.1754944e-38, %v2540
        %v2542 = vsel %vm2539, %v2541, %v2537
        %v2543 = vmul.f32 1.0, %v2542
        %v2544 = vrcp.pop %v2498
        %v2545 = vmul.f32 %v2498, %v2544
        %v2546 = vsub.f32 1.0, %v2545
        %v2547 = vmul.f32 %v2544, %v2546
        %v2548 = vadd.f32 %v2544, %v2547
        %vm2549 = vweird.f32 %v2498
        %vm2550 = vweird.f32 %v2544
        %vm2551 = vmor %vm2549, %vm2550
        %v2552 = vsel %vm2551, %v2544, %v2548
        %v2553 = vand.u32 2147483647, %v2498
        %vm2554 = vcmp.eq.f32.partialorder %v2553, 8.507059e+37
        %v2555 = vand.u32 %v2498, 2147483648
        %v2556 = vor.u32 1.1754944e-38, %v2555
        %v2557 = vsel %vm2554, %v2556, %v2552
        %v2558 = vmul.f32 1.0, %v2557
        %v2559 = vrcp.pop %v2499
        %v2560 = vmul.f32 %v2499, %v2559
        %v2561 = vsub.f32 1.0, %v2560
        %v2562 = vmul.f32 %v2559, %v2561
        %v2563 = vadd.f32 %v2559, %v2562
        %vm2564 = vweird.f32 %v2499
        %vm2565 = vweird.f32 %v2559
        %vm2566 = vmor %vm2564, %vm2565
        %v2567 = vsel %vm2566, %v2559, %v2563
        %v2568 = vand.u32 2147483647, %v2499
        %vm2569 = vcmp.eq.f32.partialorder %v2568, 8.507059e+37
        %v2570 = vand.u32 %v2499, 2147483648
        %v2571 = vor.u32 1.1754944e-38, %v2570
        %v2572 = vsel %vm2569, %v2571, %v2567
        %v2573 = vmul.f32 1.0, %v2572
        %v2574 = vrcp.pop %v2500
        %v2575 = vmul.f32 %v2500, %v2574
        %v2576 = vsub.f32 1.0, %v2575
        %v2577 = vmul.f32 %v2574, %v2576
        %v2578 = vadd.f32 %v2574, %v2577
        %vm2579 = vweird.f32 %v2500
        %vm2580 = vweird.f32 %v2574
        %vm2581 = vmor %vm2579, %vm2580
        %v2582 = vsel %vm2581, %v2574, %v2578
        %v2583 = vand.u32 2147483647, %v2500
        %vm2584 = vcmp.eq.f32.partialorder %v2583, 8.507059e+37
        %v2585 = vand.u32 %v2500, 2147483648
        %v2586 = vor.u32 1.1754944e-38, %v2585
        %v2587 = vsel %vm2584, %v2586, %v2582
        %v2588 = vmul.f32 1.0, %v2587
        %v2589 = vrcp.pop %v2501
        %v2590 = vmul.f32 %v2501, %v2589
        %v2591 = vsub.f32 1.0, %v2590
        %v2592 = vmul.f32 %v2589, %v2591
        %v2593 = vadd.f32 %v2589, %v2592
        %vm2594 = vweird.f32 %v2501
        %vm2595 = vweird.f32 %v2589
        %vm2596 = vmor %vm2594, %vm2595
        %v2597 = vsel %vm2596, %v2589, %v2593
        %v2598 = vand.u32 2147483647, %v2501
        %vm2599 = vcmp.eq.f32.partialorder %v2598, 8.507059e+37
        %v2600 = vand.u32 %v2501, 2147483648
        %v2601 = vor.u32 1.1754944e-38, %v2600
        %v2602 = vsel %vm2599, %v2601, %v2597
        %v2603 = vmul.f32 1.0, %v2602
        %v2604 = vrcp.pop %v2502
        %v2605 = vmul.f32 %v2502, %v2604
        %v2606 = vsub.f32 1.0, %v2605
        %v2607 = vmul.f32 %v2604, %v2606
        %v2608 = vadd.f32 %v2604, %v2607
        %vm2609 = vweird.f32 %v2502
        %vm2610 = vweird.f32 %v2604
        %vm2611 = vmor %vm2609, %vm2610
        %v2612 = vsel %vm2611, %v2604, %v2608
        %v2613 = vand.u32 2147483647, %v2502
        %vm2614 = vcmp.eq.f32.partialorder %v2613, 8.507059e+37
        %v2615 = vand.u32 %v2502, 2147483648
        %v2616 = vor.u32 1.1754944e-38, %v2615
        %v2617 = vsel %vm2614, %v2616, %v2612
        %v2618 = vmul.f32 1.0, %v2617
        %v2619 = vrcp.pop %v2503
        %v2620 = vmul.f32 %v2503, %v2619
        %v2621 = vsub.f32 1.0, %v2620
        %v2622 = vmul.f32 %v2619, %v2621
        %v2623 = vadd.f32 %v2619, %v2622
        %vm2624 = vweird.f32 %v2503
        %vm2625 = vweird.f32 %v2619
        %vm2626 = vmor %vm2624, %vm2625
        %v2627 = vsel %vm2626, %v2619, %v2623
        %v2628 = vand.u32 2147483647, %v2503
        %vm2629 = vcmp.eq.f32.partialorder %v2628, 8.507059e+37
        %v2630 = vand.u32 %v2503, 2147483648
        %v2631 = vor.u32 1.1754944e-38, %v2630
        %v2632 = vsel %vm2629, %v2631, %v2627
        %v2633 = vmul.f32 1.0, %v2632
        %v2634 = vrcp.pop %v2504
        %v2635 = vmul.f32 %v2504, %v2634
        %v2636 = vsub.f32 1.0, %v2635
        %v2637 = vmul.f32 %v2634, %v2636
        %v2638 = vadd.f32 %v2634, %v2637
        %vm2639 = vweird.f32 %v2504
        %vm2640 = vweird.f32 %v2634
        %vm2641 = vmor %vm2639, %vm2640
        %v2642 = vsel %vm2641, %v2634, %v2638
        %v2643 = vand.u32 2147483647, %v2504
        %vm2644 = vcmp.eq.f32.partialorder %v2643, 8.507059e+37
        %v2645 = vand.u32 %v2504, 2147483648
        %v2646 = vor.u32 1.1754944e-38, %v2645
        %v2647 = vsel %vm2644, %v2646, %v2642
        %v2648 = vmul.f32 1.0, %v2647
        %v2649 = vrcp.pop %v2505
        %v2650 = vmul.f32 %v2505, %v2649
        %v2651 = vsub.f32 1.0, %v2650
        %v2652 = vmul.f32 %v2649, %v2651
        %v2653 = vadd.f32 %v2649, %v2652
        %vm2654 = vweird.f32 %v2505
        %vm2655 = vweird.f32 %v2649
        %vm2656 = vmor %vm2654, %vm2655
        %v2657 = vsel %vm2656, %v2649, %v2653
        %v2658 = vand.u32 2147483647, %v2505
        %vm2659 = vcmp.eq.f32.partialorder %v2658, 8.507059e+37
        %v2660 = vand.u32 %v2505, 2147483648
        %v2661 = vor.u32 1.1754944e-38, %v2660
        %v2662 = vsel %vm2659, %v2661, %v2657
        %v2663 = vmul.f32 1.0, %v2662
        %v2664 = vrcp.pop %v2506
        %v2665 = vmul.f32 %v2506, %v2664
        %v2666 = vsub.f32 1.0, %v2665
        %v2667 = vmul.f32 %v2664, %v2666
        %v2668 = vadd.f32 %v2664, %v2667
        %vm2669 = vweird.f32 %v2506
        %vm2670 = vweird.f32 %v2664
        %vm2671 = vmor %vm2669, %vm2670
        %v2672 = vsel %vm2671, %v2664, %v2668
        %v2673 = vand.u32 2147483647, %v2506
        %vm2674 = vcmp.eq.f32.partialorder %v2673, 8.507059e+37
        %v2675 = vand.u32 %v2506, 2147483648
        %v2676 = vor.u32 1.1754944e-38, %v2675
        %v2677 = vsel %vm2674, %v2676, %v2672
        %v2678 = vmul.f32 1.0, %v2677
        %v2679 = vrcp.pop %v2507
        %v2680 = vmul.f32 %v2507, %v2679
        %v2681 = vsub.f32 1.0, %v2680
        %v2682 = vmul.f32 %v2679, %v2681
        %v2683 = vadd.f32 %v2679, %v2682
        %vm2684 = vweird.f32 %v2507
        %vm2685 = vweird.f32 %v2679
        %vm2686 = vmor %vm2684, %vm2685
        %v2687 = vsel %vm2686, %v2679, %v2683
        %v2688 = vand.u32 2147483647, %v2507
        %vm2689 = vcmp.eq.f32.partialorder %v2688, 8.507059e+37
        %v2690 = vand.u32 %v2507, 2147483648
        %v2691 = vor.u32 1.1754944e-38, %v2690
        %v2692 = vsel %vm2689, %v2691, %v2687
        %v2693 = vmul.f32 1.0, %v2692
        %v2694 = vrcp.pop %v2508
        %v2695 = vmul.f32 %v2508, %v2694
        %v2696 = vsub.f32 1.0, %v2695
        %v2697 = vmul.f32 %v2694, %v2696
        %v2698 = vadd.f32 %v2694, %v2697
        %vm2699 = vweird.f32 %v2508
        %vm2700 = vweird.f32 %v2694
        %vm2701 = vmor %vm2699, %vm2700
        %v2702 = vsel %vm2701, %v2694, %v2698
        %v2703 = vand.u32 2147483647, %v2508
        %vm2704 = vcmp.eq.f32.partialorder %v2703, 8.507059e+37
        %v2705 = vand.u32 %v2508, 2147483648
        %v2706 = vor.u32 1.1754944e-38, %v2705
        %v2707 = vsel %vm2704, %v2706, %v2702
        %v2708 = vmul.f32 1.0, %v2707
        %v2709 = vrcp.pop %v2509
        %v2710 = vmul.f32 %v2509, %v2709
        %v2711 = vsub.f32 1.0, %v2710
        %v2712 = vmul.f32 %v2709, %v2711
        %v2713 = vadd.f32 %v2709, %v2712
        %vm2714 = vweird.f32 %v2509
        %vm2715 = vweird.f32 %v2709
        %vm2716 = vmor %vm2714, %vm2715
        %v2717 = vsel %vm2716, %v2709, %v2713
        %v2718 = vand.u32 2147483647, %v2509
        %vm2719 = vcmp.eq.f32.partialorder %v2718, 8.507059e+37
        %v2720 = vand.u32 %v2509, 2147483648
        %v2721 = vor.u32 1.1754944e-38, %v2720
        %v2722 = vsel %vm2719, %v2721, %v2717
        %v2723 = vmul.f32 1.0, %v2722
        %v2724 = vrcp.pop %v2510
        %v2725 = vmul.f32 %v2510, %v2724
        %v2726 = vsub.f32 1.0, %v2725
        %v2727 = vmul.f32 %v2724, %v2726
        %v2728 = vadd.f32 %v2724, %v2727
        %vm2729 = vweird.f32 %v2510
        %vm2730 = vweird.f32 %v2724
        %vm2731 = vmor %vm2729, %vm2730
        %v2732 = vsel %vm2731, %v2724, %v2728
        %v2733 = vand.u32 2147483647, %v2510
        %vm2734 = vcmp.eq.f32.partialorder %v2733, 8.507059e+37
        %v2735 = vand.u32 %v2510, 2147483648
        %v2736 = vor.u32 1.1754944e-38, %v2735
        %v2737 = vsel %vm2734, %v2736, %v2732
        %v2738 = vmul.f32 1.0, %v2737
        %v2739 = vrcp.pop %v2511
        %v2740 = vmul.f32 %v2511, %v2739
        %v2741 = vsub.f32 1.0, %v2740
        %v2742 = vmul.f32 %v2739, %v2741
        %v2743 = vadd.f32 %v2739, %v2742
        %vm2744 = vweird.f32 %v2511
        %vm2745 = vweird.f32 %v2739
        %vm2746 = vmor %vm2744, %vm2745
        %v2747 = vsel %vm2746, %v2739, %v2743
        %v2748 = vand.u32 2147483647, %v2511
        %vm2749 = vcmp.eq.f32.partialorder %v2748, 8.507059e+37
        %v2750 = vand.u32 %v2511, 2147483648
        %v2751 = vor.u32 1.1754944e-38, %v2750
        %v2752 = vsel %vm2749, %v2751, %v2747
        %v2753 = vmul.f32 1.0, %v2752
        %v2754 = vrcp.pop %v2512
        %v2755 = vmul.f32 %v2512, %v2754
        %v2756 = vsub.f32 1.0, %v2755
        %v2757 = vmul.f32 %v2754, %v2756
        %v2758 = vadd.f32 %v2754, %v2757
        %vm2759 = vweird.f32 %v2512
        %vm2760 = vweird.f32 %v2754
        %vm2761 = vmor %vm2759, %vm2760
        %v2762 = vsel %vm2761, %v2754, %v2758
        %v2763 = vand.u32 2147483647, %v2512
        %vm2764 = vcmp.eq.f32.partialorder %v2763, 8.507059e+37
        %v2765 = vand.u32 %v2512, 2147483648
        %v2766 = vor.u32 1.1754944e-38, %v2765
        %v2767 = vsel %vm2764, %v2766, %v2762
        %v2768 = vmul.f32 1.0, %v2767
        %v2769 = vrcp.pop %v2513
        %v2770 = vmul.f32 %v2513, %v2769
        %v2771 = vsub.f32 1.0, %v2770
        %v2772 = vmul.f32 %v2769, %v2771
        %v2773 = vadd.f32 %v2769, %v2772
        %vm2774 = vweird.f32 %v2513
        %vm2775 = vweird.f32 %v2769
        %vm2776 = vmor %vm2774, %vm2775
        %v2777 = vsel %vm2776, %v2769, %v2773
        %v2778 = vand.u32 2147483647, %v2513
        %vm2779 = vcmp.eq.f32.partialorder %v2778, 8.507059e+37
        %v2780 = vand.u32 %v2513, 2147483648
        %v2781 = vor.u32 1.1754944e-38, %v2780
        %v2782 = vsel %vm2779, %v2781, %v2777
        %v2783 = vmul.f32 1.0, %v2782
        %v2784 = vrcp.pop %v2514
        %v2785 = vmul.f32 %v2514, %v2784
        %v2786 = vsub.f32 1.0, %v2785
        %v2787 = vmul.f32 %v2784, %v2786
        %v2788 = vadd.f32 %v2784, %v2787
        %vm2789 = vweird.f32 %v2514
        %vm2790 = vweird.f32 %v2784
        %vm2791 = vmor %vm2789, %vm2790
        %v2792 = vsel %vm2791, %v2784, %v2788
        %v2793 = vand.u32 2147483647, %v2514
        %vm2794 = vcmp.eq.f32.partialorder %v2793, 8.507059e+37
        %v2795 = vand.u32 %v2514, 2147483648
        %v2796 = vor.u32 1.1754944e-38, %v2795
        %v2797 = vsel %vm2794, %v2796, %v2792
        %v2798 = vmul.f32 1.0, %v2797
        %v2799 = vrcp.pop %v2515
        %v2800 = vmul.f32 %v2515, %v2799
        %v2801 = vsub.f32 1.0, %v2800
        %v2802 = vmul.f32 %v2799, %v2801
        %v2803 = vadd.f32 %v2799, %v2802
        %vm2804 = vweird.f32 %v2515
        %vm2805 = vweird.f32 %v2799
        %vm2806 = vmor %vm2804, %vm2805
        %v2807 = vsel %vm2806, %v2799, %v2803
        %v2808 = vand.u32 2147483647, %v2515
        %vm2809 = vcmp.eq.f32.partialorder %v2808, 8.507059e+37
        %v2810 = vand.u32 %v2515, 2147483648
        %v2811 = vor.u32 1.1754944e-38, %v2810
        %v2812 = vsel %vm2809, %v2811, %v2807
        %v2813 = vmul.f32 1.0, %v2812
        %v2814 = vrcp.pop %v2516
        %v2815 = vmul.f32 %v2516, %v2814
        %v2816 = vsub.f32 1.0, %v2815
        %v2817 = vmul.f32 %v2814, %v2816
        %v2818 = vadd.f32 %v2814, %v2817
        %vm2819 = vweird.f32 %v2516
        %vm2820 = vweird.f32 %v2814
        %vm2821 = vmor %vm2819, %vm2820
        %v2822 = vsel %vm2821, %v2814, %v2818
        %v2823 = vand.u32 2147483647, %v2516
        %vm2824 = vcmp.eq.f32.partialorder %v2823, 8.507059e+37
        %v2825 = vand.u32 %v2516, 2147483648
        %v2826 = vor.u32 1.1754944e-38, %v2825
        %v2827 = vsel %vm2824, %v2826, %v2822
        %v2828 = vmul.f32 1.0, %v2827
        %v2829 = vrcp.pop %v2517
        %v2830 = vmul.f32 %v2517, %v2829
        %v2831 = vsub.f32 1.0, %v2830
        %v2832 = vmul.f32 %v2829, %v2831
        %v2833 = vadd.f32 %v2829, %v2832
        %vm2834 = vweird.f32 %v2517
        %vm2835 = vweird.f32 %v2829
        %vm2836 = vmor %vm2834, %vm2835
        %v2837 = vsel %vm2836, %v2829, %v2833
        %v2838 = vand.u32 2147483647, %v2517
        %vm2839 = vcmp.eq.f32.partialorder %v2838, 8.507059e+37
        %v2840 = vand.u32 %v2517, 2147483648
        %v2841 = vor.u32 1.1754944e-38, %v2840
        %v2842 = vsel %vm2839, %v2841, %v2837
        %v2843 = vmul.f32 1.0, %v2842
        %v2844 = vrcp.pop %v2518
        %v2845 = vmul.f32 %v2518, %v2844
        %v2846 = vsub.f32 1.0, %v2845
        %v2847 = vmul.f32 %v2844, %v2846
        %v2848 = vadd.f32 %v2844, %v2847
        %vm2849 = vweird.f32 %v2518
        %vm2850 = vweird.f32 %v2844
        %vm2851 = vmor %vm2849, %vm2850
        %v2852 = vsel %vm2851, %v2844, %v2848
        %v2853 = vand.u32 2147483647, %v2518
        %vm2854 = vcmp.eq.f32.partialorder %v2853, 8.507059e+37
        %v2855 = vand.u32 %v2518, 2147483648
        %v2856 = vor.u32 1.1754944e-38, %v2855
        %v2857 = vsel %vm2854, %v2856, %v2852
        %v2858 = vmul.f32 1.0, %v2857
        %v2859 = vrcp.pop %v2519
        %v2860 = vmul.f32 %v2519, %v2859
        %v2861 = vsub.f32 1.0, %v2860
        %v2862 = vmul.f32 %v2859, %v2861
        %v2863 = vadd.f32 %v2859, %v2862
        %vm2864 = vweird.f32 %v2519
        %vm2865 = vweird.f32 %v2859
        %vm2866 = vmor %vm2864, %vm2865
        %v2867 = vsel %vm2866, %v2859, %v2863
        %v2868 = vand.u32 2147483647, %v2519
        %vm2869 = vcmp.eq.f32.partialorder %v2868, 8.507059e+37
        %v2870 = vand.u32 %v2519, 2147483648
        %v2871 = vor.u32 1.1754944e-38, %v2870
        %v2872 = vsel %vm2869, %v2871, %v2867
        %v2873 = vmul.f32 1.0, %v2872
        %v2874 = vrcp.pop %v2520
        %v2875 = vmul.f32 %v2520, %v2874
        %v2876 = vsub.f32 1.0, %v2875
        %v2877 = vmul.f32 %v2874, %v2876
        %v2878 = vadd.f32 %v2874, %v2877
        %vm2879 = vweird.f32 %v2520
        %vm2880 = vweird.f32 %v2874
        %vm2881 = vmor %vm2879, %vm2880
        %v2882 = vsel %vm2881, %v2874, %v2878
        %v2883 = vand.u32 2147483647, %v2520
        %vm2884 = vcmp.eq.f32.partialorder %v2883, 8.507059e+37
        %v2885 = vand.u32 %v2520, 2147483648
        %v2886 = vor.u32 1.1754944e-38, %v2885
        %v2887 = vsel %vm2884, %v2886, %v2882
        %v2888 = vmul.f32 1.0, %v2887
        %v2889 = vrcp.pop %v2521
        %v2890 = vmul.f32 %v2521, %v2889
        %v2891 = vsub.f32 1.0, %v2890
        %v2892 = vmul.f32 %v2889, %v2891
        %v2893 = vadd.f32 %v2889, %v2892
        %vm2894 = vweird.f32 %v2521
        %vm2895 = vweird.f32 %v2889
        %vm2896 = vmor %vm2894, %vm2895
        %v2897 = vsel %vm2896, %v2889, %v2893
        %v2898 = vand.u32 2147483647, %v2521
        %vm2899 = vcmp.eq.f32.partialorder %v2898, 8.507059e+37
        %v2900 = vand.u32 %v2521, 2147483648
        %v2901 = vor.u32 1.1754944e-38, %v2900
        %v2902 = vsel %vm2899, %v2901, %v2897
        %v2903 = vmul.f32 1.0, %v2902
        %v2904 = vrcp.pop %v2522
        %v2905 = vmul.f32 %v2522, %v2904
        %v2906 = vsub.f32 1.0, %v2905
        %v2907 = vmul.f32 %v2904, %v2906
        %v2908 = vadd.f32 %v2904, %v2907
        %vm2909 = vweird.f32 %v2522
        %vm2910 = vweird.f32 %v2904
        %vm2911 = vmor %vm2909, %vm2910
        %v2912 = vsel %vm2911, %v2904, %v2908
        %v2913 = vand.u32 2147483647, %v2522
        %vm2914 = vcmp.eq.f32.partialorder %v2913, 8.507059e+37
        %v2915 = vand.u32 %v2522, 2147483648
        %v2916 = vor.u32 1.1754944e-38, %v2915
        %v2917 = vsel %vm2914, %v2916, %v2912
        %v2918 = vmul.f32 1.0, %v2917
        %v2919 = vrcp.pop %v2523
        %v2920 = vmul.f32 %v2523, %v2919
        %v2921 = vsub.f32 1.0, %v2920
        %v2922 = vmul.f32 %v2919, %v2921
        %v2923 = vadd.f32 %v2919, %v2922
        %vm2924 = vweird.f32 %v2523
        %vm2925 = vweird.f32 %v2919
        %vm2926 = vmor %vm2924, %vm2925
        %v2927 = vsel %vm2926, %v2919, %v2923
        %v2928 = vand.u32 2147483647, %v2523
        %vm2929 = vcmp.eq.f32.partialorder %v2928, 8.507059e+37
        %v2930 = vand.u32 %v2523, 2147483648
        %v2931 = vor.u32 1.1754944e-38, %v2930
        %v2932 = vsel %vm2929, %v2931, %v2927
        %v2933 = vmul.f32 1.0, %v2932
        %v2934 = vrcp.pop %v2524
        %v2935 = vmul.f32 %v2524, %v2934
        %v2936 = vsub.f32 1.0, %v2935
        %v2937 = vmul.f32 %v2934, %v2936
        %v2938 = vadd.f32 %v2934, %v2937
        %vm2939 = vweird.f32 %v2524
        %vm2940 = vweird.f32 %v2934
        %vm2941 = vmor %vm2939, %vm2940
        %v2942 = vsel %vm2941, %v2934, %v2938
        %v2943 = vand.u32 2147483647, %v2524
        %vm2944 = vcmp.eq.f32.partialorder %v2943, 8.507059e+37
        %v2945 = vand.u32 %v2524, 2147483648
        %v2946 = vor.u32 1.1754944e-38, %v2945
        %v2947 = vsel %vm2944, %v2946, %v2942
        %v2948 = vmul.f32 1.0, %v2947
        %v2949 = vrcp.pop %v2525
        %v2950 = vmul.f32 %v2525, %v2949
        %v2951 = vsub.f32 1.0, %v2950
        %v2952 = vmul.f32 %v2949, %v2951
        %v2953 = vadd.f32 %v2949, %v2952
        %vm2954 = vweird.f32 %v2525
        %vm2955 = vweird.f32 %v2949
        %vm2956 = vmor %vm2954, %vm2955
        %v2957 = vsel %vm2956, %v2949, %v2953
        %v2958 = vand.u32 2147483647, %v2525
        %vm2959 = vcmp.eq.f32.partialorder %v2958, 8.507059e+37
        %v2960 = vand.u32 %v2525, 2147483648
        %v2961 = vor.u32 1.1754944e-38, %v2960
        %v2962 = vsel %vm2959, %v2961, %v2957
        %v2963 = vmul.f32 1.0, %v2962
        %v2964 = vrcp.pop %v2526
        %v2965 = vmul.f32 %v2526, %v2964
        %v2966 = vsub.f32 1.0, %v2965
        %v2967 = vmul.f32 %v2964, %v2966
        %v2968 = vadd.f32 %v2964, %v2967
        %vm2969 = vweird.f32 %v2526
        %vm2970 = vweird.f32 %v2964
        %vm2971 = vmor %vm2969, %vm2970
        %v2972 = vsel %vm2971, %v2964, %v2968
        %v2973 = vand.u32 2147483647, %v2526
        %vm2974 = vcmp.eq.f32.partialorder %v2973, 8.507059e+37
        %v2975 = vand.u32 %v2526, 2147483648
        %v2976 = vor.u32 1.1754944e-38, %v2975
        %v2977 = vsel %vm2974, %v2976, %v2972
        %v2978 = vmul.f32 1.0, %v2977
        %v2979 = vrcp.pop %v2527
        %v2980 = vmul.f32 %v2527, %v2979
        %v2981 = vsub.f32 1.0, %v2980
        %v2982 = vmul.f32 %v2979, %v2981
        %v2983 = vadd.f32 %v2979, %v2982
        %vm2984 = vweird.f32 %v2527
        %vm2985 = vweird.f32 %v2979
        %vm2986 = vmor %vm2984, %vm2985
        %v2987 = vsel %vm2986, %v2979, %v2983
        %v2988 = vand.u32 2147483647, %v2527
        %vm2989 = vcmp.eq.f32.partialorder %v2988, 8.507059e+37
        %v2990 = vand.u32 %v2527, 2147483648
        %v2991 = vor.u32 1.1754944e-38, %v2990
        %v2992 = vsel %vm2989, %v2991, %v2987
        %v2993 = vmul.f32 1.0, %v2992
        %v2994 = vrcp.pop %v2528
        %v2995 = vmul.f32 %v2528, %v2994
        %v2996 = vsub.f32 1.0, %v2995
        %v2997 = vmul.f32 %v2994, %v2996
        %v2998 = vadd.f32 %v2994, %v2997
        %vm2999 = vweird.f32 %v2528
        %vm3000 = vweird.f32 %v2994
        %vm3001 = vmor %vm2999, %vm3000
        %v3002 = vsel %vm3001, %v2994, %v2998
        %v3003 = vand.u32 2147483647, %v2528
        %vm3004 = vcmp.eq.f32.partialorder %v3003, 8.507059e+37
        %v3005 = vand.u32 %v2528, 2147483648
        %v3006 = vor.u32 1.1754944e-38, %v3005
        %v3007 = vsel %vm3004, %v3006, %v3002
        %v3008 = vmul.f32 1.0, %v3007
        %v3009 = vpack.c.bf16 %v2558, %v2543
        %v3010 = vpack.c.bf16 %v2588, %v2573
        %v3011 = vpack.c.bf16 %v2618, %v2603
        %v3012 = vpack.c.bf16 %v2648, %v2633
        %v3013 = vpack.c.bf16 %v2678, %v2663
        %v3014 = vpack.c.bf16 %v2708, %v2693
        %v3015 = vpack.c.bf16 %v2738, %v2723
        %v3016 = vpack.c.bf16 %v2768, %v2753
        %v3017 = vpack.c.bf16 %v2798, %v2783
        %v3018 = vpack.c.bf16 %v2828, %v2813
        %v3019 = vpack.c.bf16 %v2858, %v2843
        %v3020 = vpack.c.bf16 %v2888, %v2873
        %v3021 = vpack.c.bf16 %v2918, %v2903
        %v3022 = vpack.c.bf16 %v2948, %v2933
        %v3023 = vpack.c.bf16 %v2978, %v2963
        %v3024 = vpack.c.bf16 %v3008, %v2993
        %v3025 = vld [vmem:[%s7] sm:$0xff]
        %v3026 = vld [vmem:[%s7 + $0x8] sm:$0xff]
        %v3027 = vld [vmem:[%s7 + $0x10] sm:$0xff]
        %v3028 = vld [vmem:[%s7 + $0x18] sm:$0xff]
        %v3029 = vld [vmem:[%s7 + $0x20] sm:$0xff]
        %v3030 = vld [vmem:[%s7 + $0x28] sm:$0xff]
        %v3031 = vld [vmem:[%s7 + $0x30] sm:$0xff]
        %v3032 = vld [vmem:[%s7 + $0x38] sm:$0xff]
        %v3033 = vld [vmem:[%s7 + $0x40] sm:$0xff]
        %v3034 = vld [vmem:[%s7 + $0x48] sm:$0xff]
        %v3035 = vld [vmem:[%s7 + $0x50] sm:$0xff]
        %v3036 = vld [vmem:[%s7 + $0x58] sm:$0xff]
        %v3037 = vld [vmem:[%s7 + $0x60] sm:$0xff]
        %v3038 = vld [vmem:[%s7 + $0x68] sm:$0xff]
        %v3039 = vld [vmem:[%s7 + $0x70] sm:$0xff]
        %v3040 = vld [vmem:[%s7 + $0x78] sm:$0xff]
        %v3041 = vld [vmem:[%s8] sm:$0x3]
        %v3043 = vperm.slane %v3041, 0
        %v3044 = vperm.slane %v3041, 1
        %v3063 = vunpack.c.l.b16 %v3025
        %v3064 = vunpack.c.h.b16 %v3025
        %v3065 = vunpack.c.l.b16 %v3026
        %v3066 = vunpack.c.h.b16 %v3026
        %v3067 = vunpack.c.l.b16 %v3027
        %v3068 = vunpack.c.h.b16 %v3027
        %v3069 = vunpack.c.l.b16 %v3028
        %v3070 = vunpack.c.h.b16 %v3028
        %v3071 = vunpack.c.l.b16 %v3029
        %v3072 = vunpack.c.h.b16 %v3029
        %v3073 = vunpack.c.l.b16 %v3030
        %v3074 = vunpack.c.h.b16 %v3030
        %v3075 = vunpack.c.l.b16 %v3031
        %v3076 = vunpack.c.h.b16 %v3031
        %v3077 = vunpack.c.l.b16 %v3032
        %v3078 = vunpack.c.h.b16 %v3032
        %v3079 = vunpack.c.l.b16 %v3033
        %v3080 = vunpack.c.h.b16 %v3033
        %v3081 = vunpack.c.l.b16 %v3034
        %v3082 = vunpack.c.h.b16 %v3034
        %v3083 = vunpack.c.l.b16 %v3035
        %v3084 = vunpack.c.h.b16 %v3035
        %v3085 = vunpack.c.l.b16 %v3036
        %v3086 = vunpack.c.h.b16 %v3036
        %v3087 = vunpack.c.l.b16 %v3037
        %v3088 = vunpack.c.h.b16 %v3037
        %v3089 = vunpack.c.l.b16 %v3038
        %v3090 = vunpack.c.h.b16 %v3038
        %v3091 = vunpack.c.l.b16 %v3039
        %v3092 = vunpack.c.h.b16 %v3039
        %v3093 = vunpack.c.l.b16 %v3040
        %v3094 = vunpack.c.h.b16 %v3040
        %v3095 = vpack.c.b16 %v3065, %v3063
        %v3096 = vpack.c.b16 %v3066, %v3064
        %v3097 = vpack.c.b16 %v3069, %v3067
        %v3098 = vpack.c.b16 %v3070, %v3068
        %v3099 = vpack.c.b16 %v3073, %v3071
        %v3100 = vpack.c.b16 %v3074, %v3072
        %v3101 = vpack.c.b16 %v3077, %v3075
        %v3102 = vpack.c.b16 %v3078, %v3076
        %v3103 = vpack.c.b16 %v3081, %v3079
        %v3104 = vpack.c.b16 %v3082, %v3080
        %v3105 = vpack.c.b16 %v3085, %v3083
        %v3106 = vpack.c.b16 %v3086, %v3084
        %v3107 = vpack.c.b16 %v3089, %v3087
        %v3108 = vpack.c.b16 %v3090, %v3088
        %v3109 = vpack.c.b16 %v3093, %v3091
        %v3110 = vpack.c.b16 %v3094, %v3092
        %3127 = vmatpush.bf16.msra.mxu0 %v3109
        %3128 = vmatpush.bf16.msra.mxu0 %v3107
        %3129 = vmatpush.bf16.msra.mxu0 %v3105
        %3130 = vmatpush.bf16.msra.mxu0 %v3103
        %3131 = vmatpush.bf16.msra.mxu0 %v3101
        %3132 = vmatpush.bf16.msra.mxu0 %v3099
        %3133 = vmatpush.bf16.msra.mxu0 %v3097
        %3134 = vmatpush.bf16.msra.mxu0 %v3095
        %3135 = vmatmul.bf16.gmra.mxu0 %v3009
        %v3136 = vpop.f32.mrf.mxu0
        %v3137 = vadd.f32 %v3043, %v3136
        %v3138 = vpop.f32.mrf.mxu0
        %v3139 = vadd.f32 %v3043, %v3138
        %3140 = vmatmul.bf16.gmra.mxu0 %v3010
        %v3141 = vpop.f32.mrf.mxu0
        %v3142 = vadd.f32 %v3043, %v3141
        %v3143 = vpop.f32.mrf.mxu0
        %v3144 = vadd.f32 %v3043, %v3143
        %3145 = vmatmul.bf16.gmra.mxu0 %v3011
        %v3146 = vpop.f32.mrf.mxu0
        %v3147 = vadd.f32 %v3043, %v3146
        %v3148 = vpop.f32.mrf.mxu0
        %v3149 = vadd.f32 %v3043, %v3148
        %3150 = vmatmul.bf16.gmra.mxu0 %v3012
        %v3151 = vpop.f32.mrf.mxu0
        %v3152 = vadd.f32 %v3043, %v3151
        %v3153 = vpop.f32.mrf.mxu0
        %v3154 = vadd.f32 %v3043, %v3153
        %3155 = vmatmul.bf16.gmra.mxu0 %v3013
        %v3156 = vpop.f32.mrf.mxu0
        %v3157 = vadd.f32 %v3043, %v3156
        %v3158 = vpop.f32.mrf.mxu0
        %v3159 = vadd.f32 %v3043, %v3158
        %3160 = vmatmul.bf16.gmra.mxu0 %v3014
        %v3161 = vpop.f32.mrf.mxu0
        %v3162 = vadd.f32 %v3043, %v3161
        %v3163 = vpop.f32.mrf.mxu0
        %v3164 = vadd.f32 %v3043, %v3163
        %3165 = vmatmul.bf16.gmra.mxu0 %v3015
        %v3166 = vpop.f32.mrf.mxu0
        %v3167 = vadd.f32 %v3043, %v3166
        %v3168 = vpop.f32.mrf.mxu0
        %v3169 = vadd.f32 %v3043, %v3168
        %3170 = vmatmul.bf16.gmra.mxu0 %v3016
        %v3171 = vpop.f32.mrf.mxu0
        %v3172 = vadd.f32 %v3043, %v3171
        %v3173 = vpop.f32.mrf.mxu0
        %v3174 = vadd.f32 %v3043, %v3173
        %3175 = vmatmul.bf16.gmra.mxu0 %v3017
        %v3176 = vpop.f32.mrf.mxu0
        %v3177 = vadd.f32 %v3043, %v3176
        %v3178 = vpop.f32.mrf.mxu0
        %v3179 = vadd.f32 %v3043, %v3178
        %3180 = vmatmul.bf16.gmra.mxu0 %v3018
        %v3181 = vpop.f32.mrf.mxu0
        %v3182 = vadd.f32 %v3043, %v3181
        %v3183 = vpop.f32.mrf.mxu0
        %v3184 = vadd.f32 %v3043, %v3183
        %3185 = vmatmul.bf16.gmra.mxu0 %v3019
        %v3186 = vpop.f32.mrf.mxu0
        %v3187 = vadd.f32 %v3043, %v3186
        %v3188 = vpop.f32.mrf.mxu0
        %v3189 = vadd.f32 %v3043, %v3188
        %3190 = vmatmul.bf16.gmra.mxu0 %v3020
        %v3191 = vpop.f32.mrf.mxu0
        %v3192 = vadd.f32 %v3043, %v3191
        %v3193 = vpop.f32.mrf.mxu0
        %v3194 = vadd.f32 %v3043, %v3193
        %3195 = vmatmul.bf16.gmra.mxu0 %v3021
        %v3196 = vpop.f32.mrf.mxu0
        %v3197 = vadd.f32 %v3043, %v3196
        %v3198 = vpop.f32.mrf.mxu0
        %v3199 = vadd.f32 %v3043, %v3198
        %3200 = vmatmul.bf16.gmra.mxu0 %v3022
        %v3201 = vpop.f32.mrf.mxu0
        %v3202 = vadd.f32 %v3043, %v3201
        %v3203 = vpop.f32.mrf.mxu0
        %v3204 = vadd.f32 %v3043, %v3203
        %3205 = vmatmul.bf16.gmra.mxu0 %v3023
        %v3206 = vpop.f32.mrf.mxu0
        %v3207 = vadd.f32 %v3043, %v3206
        %v3208 = vpop.f32.mrf.mxu0
        %v3209 = vadd.f32 %v3043, %v3208
        %3210 = vmatmul.bf16.gmra.mxu0 %v3024
        %v3211 = vpop.f32.mrf.mxu0
        %v3212 = vadd.f32 %v3043, %v3211
        %v3213 = vpop.f32.mrf.mxu0
        %v3214 = vadd.f32 %v3043, %v3213
        %3215 = vdwg.mxu0
        %3216 = vmatpush.bf16.msra.mxu0 %v3110
        %3217 = vmatpush.bf16.msra.mxu0 %v3108
        %3218 = vmatpush.bf16.msra.mxu0 %v3106
        %3219 = vmatpush.bf16.msra.mxu0 %v3104
        %3220 = vmatpush.bf16.msra.mxu0 %v3102
        %3221 = vmatpush.bf16.msra.mxu0 %v3100
        %3222 = vmatpush.bf16.msra.mxu0 %v3098
        %3223 = vmatpush.bf16.msra.mxu0 %v3096
        %3224 = vmatmul.bf16.gmra.mxu0 %v3009
        %v3225 = vpop.f32.mrf.mxu0
        %v3226 = vadd.f32 %v3044, %v3225
        %v3227 = vpop.f32.mrf.mxu0
        %v3228 = vadd.f32 %v3044, %v3227
        %3229 = vmatmul.bf16.gmra.mxu0 %v3010
        %v3230 = vpop.f32.mrf.mxu0
        %v3231 = vadd.f32 %v3044, %v3230
        %v3232 = vpop.f32.mrf.mxu0
        %v3233 = vadd.f32 %v3044, %v3232
        %3234 = vmatmul.bf16.gmra.mxu0 %v3011
        %v3235 = vpop.f32.mrf.mxu0
        %v3236 = vadd.f32 %v3044, %v3235
        %v3237 = vpop.f32.mrf.mxu0
        %v3238 = vadd.f32 %v3044, %v3237
        %3239 = vmatmul.bf16.gmra.mxu0 %v3012
        %v3240 = vpop.f32.mrf.mxu0
        %v3241 = vadd.f32 %v3044, %v3240
        %v3242 = vpop.f32.mrf.mxu0
        %v3243 = vadd.f32 %v3044, %v3242
        %3244 = vmatmul.bf16.gmra.mxu0 %v3013
        %v3245 = vpop.f32.mrf.mxu0
        %v3246 = vadd.f32 %v3044, %v3245
        %v3247 = vpop.f32.mrf.mxu0
        %v3248 = vadd.f32 %v3044, %v3247
        %3249 = vmatmul.bf16.gmra.mxu0 %v3014
        %v3250 = vpop.f32.mrf.mxu0
        %v3251 = vadd.f32 %v3044, %v3250
        %v3252 = vpop.f32.mrf.mxu0
        %v3253 = vadd.f32 %v3044, %v3252
        %3254 = vmatmul.bf16.gmra.mxu0 %v3015
        %v3255 = vpop.f32.mrf.mxu0
        %v3256 = vadd.f32 %v3044, %v3255
        %v3257 = vpop.f32.mrf.mxu0
        %v3258 = vadd.f32 %v3044, %v3257
        %3259 = vmatmul.bf16.gmra.mxu0 %v3016
        %v3260 = vpop.f32.mrf.mxu0
        %v3261 = vadd.f32 %v3044, %v3260
        %v3262 = vpop.f32.mrf.mxu0
        %v3263 = vadd.f32 %v3044, %v3262
        %3264 = vmatmul.bf16.gmra.mxu0 %v3017
        %v3265 = vpop.f32.mrf.mxu0
        %v3266 = vadd.f32 %v3044, %v3265
        %v3267 = vpop.f32.mrf.mxu0
        %v3268 = vadd.f32 %v3044, %v3267
        %3269 = vmatmul.bf16.gmra.mxu0 %v3018
        %v3270 = vpop.f32.mrf.mxu0
        %v3271 = vadd.f32 %v3044, %v3270
        %v3272 = vpop.f32.mrf.mxu0
        %v3273 = vadd.f32 %v3044, %v3272
        %3274 = vmatmul.bf16.gmra.mxu0 %v3019
        %v3275 = vpop.f32.mrf.mxu0
        %v3276 = vadd.f32 %v3044, %v3275
        %v3277 = vpop.f32.mrf.mxu0
        %v3278 = vadd.f32 %v3044, %v3277
        %3279 = vmatmul.bf16.gmra.mxu0 %v3020
        %v3280 = vpop.f32.mrf.mxu0
        %v3281 = vadd.f32 %v3044, %v3280
        %v3282 = vpop.f32.mrf.mxu0
        %v3283 = vadd.f32 %v3044, %v3282
        %3284 = vmatmul.bf16.gmra.mxu0 %v3021
        %v3285 = vpop.f32.mrf.mxu0
        %v3286 = vadd.f32 %v3044, %v3285
        %v3287 = vpop.f32.mrf.mxu0
        %v3288 = vadd.f32 %v3044, %v3287
        %3289 = vmatmul.bf16.gmra.mxu0 %v3022
        %v3290 = vpop.f32.mrf.mxu0
        %v3291 = vadd.f32 %v3044, %v3290
        %v3292 = vpop.f32.mrf.mxu0
        %v3293 = vadd.f32 %v3044, %v3292
        %3294 = vmatmul.bf16.gmra.mxu0 %v3023
        %v3295 = vpop.f32.mrf.mxu0
        %v3296 = vadd.f32 %v3044, %v3295
        %v3297 = vpop.f32.mrf.mxu0
        %v3298 = vadd.f32 %v3044, %v3297
        %3299 = vmatmul.bf16.gmra.mxu0 %v3024
        %v3300 = vpop.f32.mrf.mxu0
        %v3301 = vadd.f32 %v3044, %v3300
        %v3302 = vpop.f32.mrf.mxu0
        %v3303 = vadd.f32 %v3044, %v3302
        %3304 = vdwg.mxu0
        %3305 = vst [vmem:[%s328] sm:$0xff] %v3137
        %3306 = vst [vmem:[%s328 + $0x8] sm:$0xff] %v3226
        %3307 = vst [vmem:[%s328 + $0x10] sm:$0xff] %v3139
        %3308 = vst [vmem:[%s328 + $0x18] sm:$0xff] %v3228
        %3309 = vst [vmem:[%s328 + $0x20] sm:$0xff] %v3142
        %3310 = vst [vmem:[%s328 + $0x28] sm:$0xff] %v3231
        %3311 = vst [vmem:[%s328 + $0x30] sm:$0xff] %v3144
        %3312 = vst [vmem:[%s328 + $0x38] sm:$0xff] %v3233
        %3313 = vst [vmem:[%s328 + $0x40] sm:$0xff] %v3147
        %3314 = vst [vmem:[%s328 + $0x48] sm:$0xff] %v3236
        %3315 = vst [vmem:[%s328 + $0x50] sm:$0xff] %v3149
        %3316 = vst [vmem:[%s328 + $0x58] sm:$0xff] %v3238
        %3317 = vst [vmem:[%s328 + $0x60] sm:$0xff] %v3152
        %3318 = vst [vmem:[%s328 + $0x68] sm:$0xff] %v3241
        %3319 = vst [vmem:[%s328 + $0x70] sm:$0xff] %v3154
        %3320 = vst [vmem:[%s328 + $0x78] sm:$0xff] %v3243
        %3321 = vst [vmem:[%s328 + $0x80] sm:$0xff] %v3157
        %3322 = vst [vmem:[%s328 + $0x88] sm:$0xff] %v3246
        %3323 = vst [vmem:[%s328 + $0x90] sm:$0xff] %v3159
        %3324 = vst [vmem:[%s328 + $0x98] sm:$0xff] %v3248
        %3325 = vst [vmem:[%s328 + $0xa0] sm:$0xff] %v3162
        %3326 = vst [vmem:[%s328 + $0xa8] sm:$0xff] %v3251
        %3327 = vst [vmem:[%s328 + $0xb0] sm:$0xff] %v3164
        %3328 = vst [vmem:[%s328 + $0xb8] sm:$0xff] %v3253
        %3329 = vst [vmem:[%s328 + $0xc0] sm:$0xff] %v3167
        %3330 = vst [vmem:[%s328 + $0xc8] sm:$0xff] %v3256
        %3331 = vst [vmem:[%s328 + $0xd0] sm:$0xff] %v3169
        %3332 = vst [vmem:[%s328 + $0xd8] sm:$0xff] %v3258
        %3333 = vst [vmem:[%s328 + $0xe0] sm:$0xff] %v3172
        %3334 = vst [vmem:[%s328 + $0xe8] sm:$0xff] %v3261
        %3335 = vst [vmem:[%s328 + $0xf0] sm:$0xff] %v3174
        %3336 = vst [vmem:[%s328 + $0xf8] sm:$0xff] %v3263
        %3337 = vst [vmem:[%s328 + $0x100] sm:$0xff] %v3177
        %3338 = vst [vmem:[%s328 + $0x108] sm:$0xff] %v3266
        %3339 = vst [vmem:[%s328 + $0x110] sm:$0xff] %v3179
        %3340 = vst [vmem:[%s328 + $0x118] sm:$0xff] %v3268
        %3341 = vst [vmem:[%s328 + $0x120] sm:$0xff] %v3182
        %3342 = vst [vmem:[%s328 + $0x128] sm:$0xff] %v3271
        %3343 = vst [vmem:[%s328 + $0x130] sm:$0xff] %v3184
        %3344 = vst [vmem:[%s328 + $0x138] sm:$0xff] %v3273
        %3345 = vst [vmem:[%s328 + $0x140] sm:$0xff] %v3187
        %3346 = vst [vmem:[%s328 + $0x148] sm:$0xff] %v3276
        %3347 = vst [vmem:[%s328 + $0x150] sm:$0xff] %v3189
        %3348 = vst [vmem:[%s328 + $0x158] sm:$0xff] %v3278
        %3349 = vst [vmem:[%s328 + $0x160] sm:$0xff] %v3192
        %3350 = vst [vmem:[%s328 + $0x168] sm:$0xff] %v3281
        %3351 = vst [vmem:[%s328 + $0x170] sm:$0xff] %v3194
        %3352 = vst [vmem:[%s328 + $0x178] sm:$0xff] %v3283
        %3353 = vst [vmem:[%s328 + $0x180] sm:$0xff] %v3197
        %3354 = vst [vmem:[%s328 + $0x188] sm:$0xff] %v3286
        %3355 = vst [vmem:[%s328 + $0x190] sm:$0xff] %v3199
        %3356 = vst [vmem:[%s328 + $0x198] sm:$0xff] %v3288
        %3357 = vst [vmem:[%s328 + $0x1a0] sm:$0xff] %v3202
        %3358 = vst [vmem:[%s328 + $0x1a8] sm:$0xff] %v3291
        %3359 = vst [vmem:[%s328 + $0x1b0] sm:$0xff] %v3204
        %3360 = vst [vmem:[%s328 + $0x1b8] sm:$0xff] %v3293
        %3361 = vst [vmem:[%s328 + $0x1c0] sm:$0xff] %v3207
        %3362 = vst [vmem:[%s328 + $0x1c8] sm:$0xff] %v3296
        %3363 = vst [vmem:[%s328 + $0x1d0] sm:$0xff] %v3209
        %3364 = vst [vmem:[%s328 + $0x1d8] sm:$0xff] %v3298
        %3365 = vst [vmem:[%s328 + $0x1e0] sm:$0xff] %v3212
        %3366 = vst [vmem:[%s328 + $0x1e8] sm:$0xff] %v3301
        %3367 = vst [vmem:[%s328 + $0x1f0] sm:$0xff] %v3214
        %3368 = vst [vmem:[%s328 + $0x1f8] sm:$0xff] %v3303
        %s3369 = sand.u32 %s225, 1
        %s3370 = scalar_lea.sflag [#allocation3], %s3369
        %s3371 = sand.u32 %s225, 1
        %s3372 = smul.addr %s3371, 512
        %s3373 = scalar_lea.vmem [#allocation2], %s3372
        // Predicated region
        $region57: #{autoencoder_forward.1} parent=55 // pred_check
          %p3374 = pneg %p235
        $region58: #{autoencoder_forward.1} parent=55 // pred_check_branch
          %3376 = sbr.rel (%p3374) target = $region60
        $region59: #{autoencoder_forward.1} parent=55 // pred_region
          %s3377 = smul.u32 32, %s23
          %3379 = vsyncadd %s3370, 0
          %s3380 = smul.addr %s3377, 2
          %s3381 = smul.addr %s3380, 8
          %s3382 = scalar_lea.hbm %s9, %s3381
          %s3383 = sshll.u32 %s3373, 4
          %s3384 = int_to_ptr.vmem [resolvable:$true] %s3383
          %s3385 = sshll.u32 %s3382, 4
          %s3386 = int_to_ptr.hbm [resolvable:$true] %s3385
          %3391 = dma.vmem_to_hbm [thread:$0]  %s3384, 8192, %s3386, %s3370, 256, 256, 16
        $region60: #{autoencoder_forward.1} parent=55 // pred_fallthru
          _
      $region56: #{autoencoder_forward.1} parent=5 // pred_fallthru
        _
      %p3392 = scmp.le.s32.totalorder 2, %s18
      // Predicated region
      $region61: #{autoencoder_forward.1} parent=5 // pred_check
        %p3393 = pneg %p3392
      $region62: #{autoencoder_forward.1} parent=5 // pred_check_branch
        %3395 = sbr.rel (%p3393) target = $region64
      $region63: #{autoencoder_forward.1} parent=5 // pred_region
        %s3396 = ssub.s32 %s18, 2
        // Predicated region
        $region65: #{autoencoder_forward.1} parent=63 // pred_check
          %p3397 = pneg %p241
        $region66: #{autoencoder_forward.1} parent=63 // pred_check_branch
          %3399 = sbr.rel (%p3397) target = $region68
        $region67: #{autoencoder_forward.1} parent=63 // pred_region
          %s3400 = sand.u32 %s226, 1
          %s3401 = scalar_lea.sflag [#allocation3], %s3400
          %s3402 = sand.u32 %s226, 1
          %s3403 = smul.addr %s3402, 512
          %s3404 = scalar_lea.vmem [#allocation2], %s3403
          %3406 = dma.done %s3401, 8192
        $region68: #{autoencoder_forward.1} parent=63 // pred_fallthru
          _
      $region64: #{autoencoder_forward.1} parent=5 // pred_fallthru
        _
    $region6: #{autoencoder_forward.1} parent=1 // loop_footer
      %s22 = sadd.s32 1, %s18
    $region7: #{autoencoder_forward.1} parent=1 // loop_footer_branch
      %17 = sbr.rel target = $region3
    $region8: #{autoencoder_forward.1} parent=1 // loop_exit
      _
    %3407 = vsyncpa [#allocation3], 1
    %s3408 = scalar_lea.sflag [#allocation3], 1
    %3409 = vsyncpa %s3408, 1

</llo_original>
